<compile_context>
chip_gen: v6e
topology: v6e:2x2x1
jax: 0.10.0
libtpu: 0.0.40
codegen_flags: <defaults>
</compile_context>

<pallas_src>
import math
import functools

import jax
import jax.numpy as jnp
from jax.experimental import pallas as pl
from jax.experimental.pallas import tpu as pltpu

GATE_DICT = {"delete": 0, "update": 1, "dontcare": 2, "carryover": 3}

# ----------------------------- config (small) --------------------------------
VOCAB = 100
TYPE_VOCAB = 2
B = 2          # batch
S = 16         # sequence length
H = 64         # hidden size
NH = 4         # attention heads
DH = H // NH   # head dim
FF = 128       # intermediate size
L = 2          # transformer layers
J = 8          # number of slots
CLS_PAD = 128  # classifier lane padding (real logits = first 4 columns)
LN_EPS = 1e-12


# ----------------------------- fused Pallas kernel ---------------------------
def _fused_encoder_kernel(
    emb_ref, mask_ref, sel_ref,                       # per-batch data
    eg_ref, ebias_ref,                                # embedding LN
    wqkv_ref, bqkv_ref, wo_ref, bo_ref,               # attention weights (stacked over L)
    ln1g_ref, ln1b_ref,
    w1_ref, b1_ref, w2_ref, b2_ref,                   # FFN weights (stacked over L)
    ln2g_ref, ln2b_ref,
    poolw_ref, poolb_ref, clsw_ref, clsb_ref,         # pooler + classifier
    seq_ref, pooled_ref, slot_ref, scores_ref,        # outputs
):
    def ln(v, g, b):
        mu = jnp.mean(v, axis=-1, keepdims=True)
        d = v - mu
        var = jnp.mean(d * d, axis=-1, keepdims=True)
        return d * jax.lax.rsqrt(var + LN_EPS) * g + b

    def mm(a, w):
        return jnp.dot(a, w, preferred_element_type=jnp.float32)

    inv_sqrt2 = jnp.float32(1.0 / math.sqrt(2.0))
    scale = jnp.float32(1.0 / math.sqrt(DH))

    x = ln(emb_ref[0], eg_ref[...], ebias_ref[...])           # (S, H)
    mask = mask_ref[0]                                        # (1, S) additive

    for l in range(L):                                        # static unroll (L=2)
        # fused Q|K|V projection: one (S,H)@(H,3H) MXU op
        qkv = mm(x, wqkv_ref[l]) + bqkv_ref[l]                # (S, 3H)
        heads = []
        for h in range(NH):                                   # in-kernel head slices
            qh = qkv[:, h * DH:(h + 1) * DH]                  # (S, DH)
            kh = qkv[:, H + h * DH:H + (h + 1) * DH]
            vh = qkv[:, 2 * H + h * DH:2 * H + (h + 1) * DH]
            s = jax.lax.dot_general(
                qh, kh, (((1,), (1,)), ((), ())),
                preferred_element_type=jnp.float32) * scale   # (S, S)
            s = s + mask
            s = s - jnp.max(s, axis=-1, keepdims=True)
            p = jnp.exp(s)
            p = p * pl.reciprocal(jnp.sum(p, axis=-1, keepdims=True), approx=True)
            heads.append(mm(p, vh))                           # (S, DH)
        ctx = jnp.concatenate(heads, axis=-1)                 # (S, H)

        attn = mm(ctx, wo_ref[l]) + bo_ref[l]
        x = ln(x + attn, ln1g_ref[l], ln1b_ref[l])

        ff = mm(x, w1_ref[l]) + b1_ref[l]                     # (S, FF)
        ff = 0.5 * ff * (1.0 + jax.lax.erf(ff * inv_sqrt2))   # exact BERT gelu
        ff = mm(ff, w2_ref[l]) + b2_ref[l]
        x = ln(x + ff, ln2g_ref[l], ln2b_ref[l])

    seq_ref[0] = x                                            # (S, H)

    # pooler on [CLS]
    pooled_ref[0] = jnp.tanh(mm(x[0:1, :], poolw_ref[...]) + poolb_ref[...])

    # torch.gather over slot positions == one-hot selection matmul
    slot = mm(sel_ref[0], x)                                  # (J, H)
    slot_ref[0] = slot

    # action classifier (lane-padded to 128 for a dense store)
    scores_ref[0] = mm(slot, clsw_ref[...]) + clsb_ref[...]   # (J, CLS_PAD)


def fused_encoder(params, emb, add_mask, sel):
    """One pallas_call for the whole encoder. grid=(B,) is 'parallel' (v7x 2-TC)."""

    def full(shape):
        zeros = (0,) * len(shape)
        return pl.BlockSpec(shape, lambda b, z=zeros: z)

    in_specs = [
        pl.BlockSpec((1, S, H), lambda b: (b, 0, 0)),     # emb
        pl.BlockSpec((1, 1, S), lambda b: (b, 0, 0)),     # additive mask
        pl.BlockSpec((1, J, S), lambda b: (b, 0, 0)),     # slot one-hot selector
        full((1, H)), full((1, H)),                       # emb LN
        full((L, H, 3 * H)), full((L, 1, 3 * H)),         # wqkv, bqkv
        full((L, H, H)), full((L, 1, H)),                 # wo, bo
        full((L, 1, H)), full((L, 1, H)),                 # ln1 g/b
        full((L, H, FF)), full((L, 1, FF)),               # w1, b1
        full((L, FF, H)), full((L, 1, H)),                # w2, b2
        full((L, 1, H)), full((L, 1, H)),                 # ln2 g/b
        full((H, H)), full((1, H)),                       # pooler
        full((H, CLS_PAD)), full((1, CLS_PAD)),           # classifier (padded)
    ]
    out_specs = (
        pl.BlockSpec((1, S, H), lambda b: (b, 0, 0)),     # sequence_output
        pl.BlockSpec((1, 1, H), lambda b: (b, 0, 0)),     # pooled_output
        pl.BlockSpec((1, J, H), lambda b: (b, 0, 0)),     # slot_output
        pl.BlockSpec((1, J, CLS_PAD), lambda b: (b, 0, 0)),  # padded scores
    )
    out_shape = (
        jax.ShapeDtypeStruct((B, S, H), jnp.float32),
        jax.ShapeDtypeStruct((B, 1, H), jnp.float32),
        jax.ShapeDtypeStruct((B, J, H), jnp.float32),
        jax.ShapeDtypeStruct((B, J, CLS_PAD), jnp.float32),
    )

    return pl.pallas_call(
        _fused_encoder_kernel,
        out_shape=out_shape,
        grid=(B,),
        in_specs=in_specs,
        out_specs=out_specs,
        compiler_params=pltpu.CompilerParams(dimension_semantics=("parallel",)),
    )(
        emb, add_mask, sel,
        params["emb_ln_g"], params["emb_ln_b"],
        params["wqkv"], params["bqkv"], params["wo"], params["bo"],
        params["ln1_g"], params["ln1_b"],
        params["w1"], params["b1"], params["w2"], params["b2"],
        params["ln2_g"], params["ln2_b"],
        params["pool_w"], params["pool_b"],
        params["cls_w_pad"], params["cls_b_pad"],
    )


# ----------------------------- parameters ------------------------------------
def init_params(key):
    def nrm(k, shape):
        return 0.02 * jax.random.normal(k, shape, dtype=jnp.float32)

    keys = iter(jax.random.split(key, 32))
    cls_w = nrm(next(keys), (H, 4))
    cls_w_pad = jnp.zeros((H, CLS_PAD), jnp.float32).at[:, :4].set(cls_w)
    return {
        "word_emb": nrm(next(keys), (VOCAB, H)),
        "pos_emb": nrm(next(keys), (S, H)),
        "type_emb": nrm(next(keys), (TYPE_VOCAB, H)),
        "emb_ln_g": jnp.ones((1, H), jnp.float32),
        "emb_ln_b": jnp.zeros((1, H), jnp.float32),
        "wqkv": nrm(next(keys), (L, H, 3 * H)),
        "bqkv": jnp.zeros((L, 1, 3 * H), jnp.float32),
        "wo": nrm(next(keys), (L, H, H)),
        "bo": jnp.zeros((L, 1, H), jnp.float32),
        "ln1_g": jnp.ones((L, 1, H), jnp.float32),
        "ln1_b": jnp.zeros((L, 1, H), jnp.float32),
        "w1": nrm(next(keys), (L, H, FF)),
        "b1": jnp.zeros((L, 1, FF), jnp.float32),
        "w2": nrm(next(keys), (L, FF, H)),
        "b2": jnp.zeros((L, 1, H), jnp.float32),
        "ln2_g": jnp.ones((L, 1, H), jnp.float32),
        "ln2_b": jnp.zeros((L, 1, H), jnp.float32),
        "pool_w": nrm(next(keys), (H, H)),
        "pool_b": jnp.zeros((1, H), jnp.float32),
        "cls_w_pad": cls_w_pad,
        "cls_b_pad": jnp.zeros((1, CLS_PAD), jnp.float32),
    }


# ----------------------------- device-side forward ---------------------------
@functools.partial(jax.jit, static_argnames=("use_given_ops",))
def _device_forward(params, input_ids, token_type_ids, attention_mask,
                    slot_pos, op_ids, use_given_ops):
    # embedding lookups stay in XLA (tiny glue), everything else is the fused kernel
    emb = (jnp.take(params["word_emb"], input_ids, axis=0)
           + params["pos_emb"][None, :, :]
           + jnp.take(params["type_emb"], token_type_ids, axis=0))        # (B,S,H)
    add_mask = ((1.0 - attention_mask.astype(jnp.float32)) * -1e9)[:, None, :]  # (B,1,S)
    sel = jax.nn.one_hot(slot_pos, S, dtype=jnp.float32)                  # (B,J,S)

    seq, pooled3, slot_output, scores_pad = fused_encoder(params, emb, add_mask, sel)
    pooled = pooled3[:, 0, :]                                             # (B,H)
    state_scores = scores_pad[..., :4]                                    # (B,J,4)

    op_idx = op_ids if use_given_ops else jnp.argmax(state_scores, axis=2)
    upd = op_idx == GATE_DICT["update"]                                   # (B,J)
    counts = upd.astype(jnp.int32).sum(axis=1)                            # (B,)

    # device-side stable compaction of "update" slots to the front of a (B,J,H) buffer
    order = jnp.argsort(jnp.where(upd, 0, 1).astype(jnp.int32), axis=1, stable=True)
    packed = jnp.take_along_axis(slot_output, order[:, :, None], axis=1)  # (B,J,H)
    keep = (jnp.arange(J)[None, :] < counts[:, None])[:, :, None]
    packed = jnp.where(keep, packed, 0.0)

    return seq, pooled, state_scores, slot_output, packed, counts


def encoder_forward(params, data, max_update, is_update_ewc=False, training=False):
    input_ids, token_type_ids, attention_mask, slot_pos, op_ids = data
    use_given_ops = bool(training or is_update_ewc)

    (seq, pooled, state_scores, slot_output,
     packed, counts) = _device_forward(params, input_ids, token_type_ids,
                                       attention_mask, slot_pos, op_ids,
                                       use_given_ops=use_given_ops)

    if not use_given_ops:
        # TODO(synk): data-dependent output width (torch `.item()`); this is the
        # single unavoidable scalar device->host sync of the forward pass.
        max_update = int(jnp.max(counts))
    decoder_inputs = packed[:, :max_update]                               # (B,max_update,H)

    return seq, pooled, state_scores, decoder_inputs, slot_output


# ----------------------------- main -------------------------------------------
if __name__ == "__main__":
    key = jax.random.PRNGKey(0)
    k_par, k_ids, k_slot, k_op = jax.random.split(key, 4)

    params = init_params(k_par)

    input_ids = jax.random.randint(k_ids, (B, S), 0, VOCAB, dtype=jnp.int32)
    token_type_ids = jnp.concatenate(
        [jnp.zeros((B, S // 2), jnp.int32), jnp.ones((B, S // 2), jnp.int32)], axis=1)
    attention_mask = jnp.concatenate(
        [jnp.ones((B, S - 2), jnp.int32), jnp.zeros((B, 2), jnp.int32)], axis=1)
    slot_pos = jax.random.randint(k_slot, (B, J), 0, S, dtype=jnp.int32)
    op_ids = jax.random.randint(k_op, (B, J), 0, 4, dtype=jnp.int32)      # data[4]

    data = (input_ids, token_type_ids, attention_mask, slot_pos, op_ids)

    outs = encoder_forward(params, data, max_update=J,
                           is_update_ewc=False, training=False)
    outs = jax.block_until_ready(outs)

    seq_out, pooled, scores, dec_in, slot_out = outs
    assert seq_out.shape == (B, S, H)
    assert pooled.shape == (B, H)
    assert scores.shape == (B, J, 4)
    assert slot_out.shape == (B, J, H)
    assert dec_in.shape[0] == B and dec_in.shape[2] == H
    print("KERNEL_OK")
</pallas_src>

<mosaic_0001>
module attributes {stable_mosaic.version = 11 : i64} {
  func.func @_fused_encoder_kernel(%arg0: i32, %arg1: memref<1x16x64xf32, #tpu.memory_space<vmem>>, %arg2: memref<1x1x16xf32, #tpu.memory_space<vmem>>, %arg3: memref<1x8x16xf32, #tpu.memory_space<vmem>>, %arg4: memref<1x64xf32, #tpu.memory_space<vmem>>, %arg5: memref<1x64xf32, #tpu.memory_space<vmem>>, %arg6: memref<2x64x192xf32, #tpu.memory_space<vmem>>, %arg7: memref<2x1x192xf32, #tpu.memory_space<vmem>>, %arg8: memref<2x64x64xf32, #tpu.memory_space<vmem>>, %arg9: memref<2x1x64xf32, #tpu.memory_space<vmem>>, %arg10: memref<2x1x64xf32, #tpu.memory_space<vmem>>, %arg11: memref<2x1x64xf32, #tpu.memory_space<vmem>>, %arg12: memref<2x64x128xf32, #tpu.memory_space<vmem>>, %arg13: memref<2x1x128xf32, #tpu.memory_space<vmem>>, %arg14: memref<2x128x64xf32, #tpu.memory_space<vmem>>, %arg15: memref<2x1x64xf32, #tpu.memory_space<vmem>>, %arg16: memref<2x1x64xf32, #tpu.memory_space<vmem>>, %arg17: memref<2x1x64xf32, #tpu.memory_space<vmem>>, %arg18: memref<64x64xf32, #tpu.memory_space<vmem>>, %arg19: memref<1x64xf32, #tpu.memory_space<vmem>>, %arg20: memref<64x128xf32, #tpu.memory_space<vmem>>, %arg21: memref<1x128xf32, #tpu.memory_space<vmem>>, %arg22: memref<1x16x64xf32, #tpu.memory_space<vmem>>, %arg23: memref<1x1x64xf32, #tpu.memory_space<vmem>>, %arg24: memref<1x8x64xf32, #tpu.memory_space<vmem>>, %arg25: memref<1x8x128xf32, #tpu.memory_space<vmem>>) attributes {dimension_semantics = [#tpu.dimension_semantics<parallel>], iteration_bounds = array<i64: 2>, scalar_prefetch = 0 : i64, scratch_operands = 0 : i64, tpu.core_type = #tpu.core_type<tc>, window_params = [{transform_indices = @transform_0, window_bounds = array<i64: 1, 16, 64>}, {transform_indices = @transform_1, window_bounds = array<i64: 1, 1, 16>}, {transform_indices = @transform_2, window_bounds = array<i64: 1, 8, 16>}, {pipeline_mode = #tpu.pipeline_mode<synchronous>, transform_indices = @transform_3, window_bounds = array<i64: 1, 64>}, {pipeline_mode = #tpu.pipeline_mode<synchronous>, transform_indices = @transform_4, window_bounds = array<i64: 1, 64>}, {pipeline_mode = #tpu.pipeline_mode<synchronous>, transform_indices = @transform_5, window_bounds = array<i64: 2, 64, 192>}, {pipeline_mode = #tpu.pipeline_mode<synchronous>, transform_indices = @transform_6, window_bounds = array<i64: 2, 1, 192>}, {pipeline_mode = #tpu.pipeline_mode<synchronous>, transform_indices = @transform_7, window_bounds = array<i64: 2, 64, 64>}, {pipeline_mode = #tpu.pipeline_mode<synchronous>, transform_indices = @transform_8, window_bounds = array<i64: 2, 1, 64>}, {pipeline_mode = #tpu.pipeline_mode<synchronous>, transform_indices = @transform_9, window_bounds = array<i64: 2, 1, 64>}, {pipeline_mode = #tpu.pipeline_mode<synchronous>, transform_indices = @transform_10, window_bounds = array<i64: 2, 1, 64>}, {pipeline_mode = #tpu.pipeline_mode<synchronous>, transform_indices = @transform_11, window_bounds = array<i64: 2, 64, 128>}, {pipeline_mode = #tpu.pipeline_mode<synchronous>, transform_indices = @transform_12, window_bounds = array<i64: 2, 1, 128>}, {pipeline_mode = #tpu.pipeline_mode<synchronous>, transform_indices = @transform_13, window_bounds = array<i64: 2, 128, 64>}, {pipeline_mode = #tpu.pipeline_mode<synchronous>, transform_indices = @transform_14, window_bounds = array<i64: 2, 1, 64>}, {pipeline_mode = #tpu.pipeline_mode<synchronous>, transform_indices = @transform_15, window_bounds = array<i64: 2, 1, 64>}, {pipeline_mode = #tpu.pipeline_mode<synchronous>, transform_indices = @transform_16, window_bounds = array<i64: 2, 1, 64>}, {pipeline_mode = #tpu.pipeline_mode<synchronous>, transform_indices = @transform_17, window_bounds = array<i64: 64, 64>}, {pipeline_mode = #tpu.pipeline_mode<synchronous>, transform_indices = @transform_18, window_bounds = array<i64: 1, 64>}, {pipeline_mode = #tpu.pipeline_mode<synchronous>, transform_indices = @transform_19, window_bounds = array<i64: 64, 128>}, {pipeline_mode = #tpu.pipeline_mode<synchronous>, transform_indices = @transform_20, window_bounds = array<i64: 1, 128>}, {transform_indices = @transform_21, window_bounds = array<i64: 1, 16, 64>}, {transform_indices = @transform_22, window_bounds = array<i64: 1, 1, 64>}, {transform_indices = @transform_23, window_bounds = array<i64: 1, 8, 64>}, {transform_indices = @transform_24, window_bounds = array<i64: 1, 8, 128>}]} {
    %c0 = arith.constant 0 : index
    %c0_0 = arith.constant 0 : index
    %c0_1 = arith.constant 0 : index
    %0 = vector.load %arg1[%c0, %c0_0, %c0_1] : memref<1x16x64xf32, #tpu.memory_space<vmem>>, vector<1x16x64xf32>
    %1 = vector.shape_cast %0 : vector<1x16x64xf32> to vector<16x64xf32>
    %c0_2 = arith.constant 0 : index
    %c0_3 = arith.constant 0 : index
    %2 = vector.load %arg4[%c0_2, %c0_3] : memref<1x64xf32, #tpu.memory_space<vmem>>, vector<1x64xf32>
    %c0_4 = arith.constant 0 : index
    %c0_5 = arith.constant 0 : index
    %3 = vector.load %arg5[%c0_4, %c0_5] : memref<1x64xf32, #tpu.memory_space<vmem>>, vector<1x64xf32>
    %cst = arith.constant dense<0.000000e+00> : vector<16xf32>
    %4 = vector.multi_reduction <add>, %1, %cst [1] : vector<16x64xf32> to vector<16xf32>
    %5 = vector.shape_cast %4 : vector<16xf32> to vector<16x1xf32>
    %cst_6 = arith.constant 6.400000e+01 : f32
    %6 = vector.broadcast %cst_6 : f32 to vector<16x1xf32>
    %7 = arith.divf %5, %6 : vector<16x1xf32>
    %8 = vector.broadcast %7 : vector<16x1xf32> to vector<16x64xf32>
    %9 = arith.subf %1, %8 : vector<16x64xf32>
    %10 = arith.mulf %9, %9 : vector<16x64xf32>
    %cst_7 = arith.constant dense<0.000000e+00> : vector<16xf32>
    %11 = vector.multi_reduction <add>, %10, %cst_7 [1] : vector<16x64xf32> to vector<16xf32>
    %12 = vector.shape_cast %11 : vector<16xf32> to vector<16x1xf32>
    %cst_8 = arith.constant 6.400000e+01 : f32
    %13 = vector.broadcast %cst_8 : f32 to vector<16x1xf32>
    %14 = arith.divf %12, %13 : vector<16x1xf32>
    %cst_9 = arith.constant 9.99999996E-13 : f32
    %15 = vector.broadcast %cst_9 : f32 to vector<16x1xf32>
    %16 = arith.addf %14, %15 : vector<16x1xf32>
    %17 = math.rsqrt %16 : vector<16x1xf32>
    %18 = vector.broadcast %17 : vector<16x1xf32> to vector<16x64xf32>
    %19 = arith.mulf %9, %18 : vector<16x64xf32>
    %20 = vector.broadcast %2 : vector<1x64xf32> to vector<16x64xf32>
    %21 = arith.mulf %19, %20 : vector<16x64xf32>
    %22 = vector.broadcast %3 : vector<1x64xf32> to vector<16x64xf32>
    %23 = arith.addf %21, %22 : vector<16x64xf32>
    %c0_10 = arith.constant 0 : index
    %c0_11 = arith.constant 0 : index
    %c0_12 = arith.constant 0 : index
    %24 = vector.load %arg2[%c0_10, %c0_11, %c0_12] : memref<1x1x16xf32, #tpu.memory_space<vmem>>, vector<1x1x16xf32>
    %25 = vector.shape_cast %24 : vector<1x1x16xf32> to vector<1x16xf32>
    %c0_13 = arith.constant 0 : index
    %c0_14 = arith.constant 0 : index
    %c0_15 = arith.constant 0 : index
    %26 = vector.load %arg6[%c0_13, %c0_14, %c0_15] : memref<2x64x192xf32, #tpu.memory_space<vmem>>, vector<1x64x192xf32>
    %27 = vector.shape_cast %26 : vector<1x64x192xf32> to vector<64x192xf32>
    %cst_16 = arith.constant dense<0.000000e+00> : vector<16x192xf32>
    %28 = tpu.matmul %23, %27, %cst_16 {dimension_numbers = #tpu.dot_dimension_numbers<[1], [0], [0], [1], [0, 0, 1, 1], [], []>} : vector<16x64xf32>, vector<64x192xf32>, vector<16x192xf32> -> vector<16x192xf32>
    %c0_17 = arith.constant 0 : index
    %c0_18 = arith.constant 0 : index
    %c0_19 = arith.constant 0 : index
    %29 = vector.load %arg7[%c0_17, %c0_18, %c0_19] : memref<2x1x192xf32, #tpu.memory_space<vmem>>, vector<1x1x192xf32>
    %30 = vector.shape_cast %29 : vector<1x1x192xf32> to vector<1x192xf32>
    %31 = vector.broadcast %30 : vector<1x192xf32> to vector<16x192xf32>
    %32 = arith.addf %28, %31 : vector<16x192xf32>
    %33 = vector.extract_strided_slice %32 {offsets = [0, 0], sizes = [16, 16], strides = [1, 1]} : vector<16x192xf32> to vector<16x16xf32>
    %34 = vector.extract_strided_slice %32 {offsets = [0, 64], sizes = [16, 16], strides = [1, 1]} : vector<16x192xf32> to vector<16x16xf32>
    %35 = vector.extract_strided_slice %32 {offsets = [0, 128], sizes = [16, 16], strides = [1, 1]} : vector<16x192xf32> to vector<16x16xf32>
    %cst_20 = arith.constant dense<0.000000e+00> : vector<16x16xf32>
    %36 = tpu.matmul %33, %34, %cst_20 {dimension_numbers = #tpu.dot_dimension_numbers<[1], [1], [0], [0], [0, 0, 1, 0], [], []>} : vector<16x16xf32>, vector<16x16xf32>, vector<16x16xf32> -> vector<16x16xf32>
    %cst_21 = arith.constant 2.500000e-01 : f32
    %37 = vector.broadcast %cst_21 : f32 to vector<16x16xf32>
    %38 = arith.mulf %36, %37 : vector<16x16xf32>
    %39 = vector.broadcast %25 : vector<1x16xf32> to vector<16x16xf32>
    %40 = arith.addf %38, %39 : vector<16x16xf32>
    %cst_22 = arith.constant dense<0xFF800000> : vector<16xf32>
    %41 = vector.multi_reduction <maximumf>, %40, %cst_22 [1] : vector<16x16xf32> to vector<16xf32>
    %42 = vector.shape_cast %41 : vector<16xf32> to vector<16x1xf32>
    %43 = vector.broadcast %42 : vector<16x1xf32> to vector<16x16xf32>
    %44 = arith.subf %40, %43 : vector<16x16xf32>
    %45 = math.exp %44 : vector<16x16xf32>
    %cst_23 = arith.constant dense<0.000000e+00> : vector<16xf32>
    %46 = vector.multi_reduction <add>, %45, %cst_23 [1] : vector<16x16xf32> to vector<16xf32>
    %47 = vector.shape_cast %46 : vector<16xf32> to vector<16x1xf32>
    %48 = tpu.reciprocal %47 {approx = true} : vector<16x1xf32> -> vector<16x1xf32>
    %49 = vector.broadcast %48 : vector<16x1xf32> to vector<16x16xf32>
    %50 = arith.mulf %45, %49 : vector<16x16xf32>
    %cst_24 = arith.constant dense<0.000000e+00> : vector<16x16xf32>
    %51 = tpu.matmul %50, %35, %cst_24 {dimension_numbers = #tpu.dot_dimension_numbers<[1], [0], [0], [1], [0, 0, 1, 1], [], []>} : vector<16x16xf32>, vector<16x16xf32>, vector<16x16xf32> -> vector<16x16xf32>
    %52 = vector.extract_strided_slice %32 {offsets = [0, 16], sizes = [16, 16], strides = [1, 1]} : vector<16x192xf32> to vector<16x16xf32>
    %53 = vector.extract_strided_slice %32 {offsets = [0, 80], sizes = [16, 16], strides = [1, 1]} : vector<16x192xf32> to vector<16x16xf32>
    %54 = vector.extract_strided_slice %32 {offsets = [0, 144], sizes = [16, 16], strides = [1, 1]} : vector<16x192xf32> to vector<16x16xf32>
    %cst_25 = arith.constant dense<0.000000e+00> : vector<16x16xf32>
    %55 = tpu.matmul %52, %53, %cst_25 {dimension_numbers = #tpu.dot_dimension_numbers<[1], [1], [0], [0], [0, 0, 1, 0], [], []>} : vector<16x16xf32>, vector<16x16xf32>, vector<16x16xf32> -> vector<16x16xf32>
    %cst_26 = arith.constant 2.500000e-01 : f32
    %56 = vector.broadcast %cst_26 : f32 to vector<16x16xf32>
    %57 = arith.mulf %55, %56 : vector<16x16xf32>
    %58 = vector.broadcast %25 : vector<1x16xf32> to vector<16x16xf32>
    %59 = arith.addf %57, %58 : vector<16x16xf32>
    %cst_27 = arith.constant dense<0xFF800000> : vector<16xf32>
    %60 = vector.multi_reduction <maximumf>, %59, %cst_27 [1] : vector<16x16xf32> to vector<16xf32>
    %61 = vector.shape_cast %60 : vector<16xf32> to vector<16x1xf32>
    %62 = vector.broadcast %61 : vector<16x1xf32> to vector<16x16xf32>
    %63 = arith.subf %59, %62 : vector<16x16xf32>
    %64 = math.exp %63 : vector<16x16xf32>
    %cst_28 = arith.constant dense<0.000000e+00> : vector<16xf32>
    %65 = vector.multi_reduction <add>, %64, %cst_28 [1] : vector<16x16xf32> to vector<16xf32>
    %66 = vector.shape_cast %65 : vector<16xf32> to vector<16x1xf32>
    %67 = tpu.reciprocal %66 {approx = true} : vector<16x1xf32> -> vector<16x1xf32>
    %68 = vector.broadcast %67 : vector<16x1xf32> to vector<16x16xf32>
    %69 = arith.mulf %64, %68 : vector<16x16xf32>
    %cst_29 = arith.constant dense<0.000000e+00> : vector<16x16xf32>
    %70 = tpu.matmul %69, %54, %cst_29 {dimension_numbers = #tpu.dot_dimension_numbers<[1], [0], [0], [1], [0, 0, 1, 1], [], []>} : vector<16x16xf32>, vector<16x16xf32>, vector<16x16xf32> -> vector<16x16xf32>
    %71 = vector.extract_strided_slice %32 {offsets = [0, 32], sizes = [16, 16], strides = [1, 1]} : vector<16x192xf32> to vector<16x16xf32>
    %72 = vector.extract_strided_slice %32 {offsets = [0, 96], sizes = [16, 16], strides = [1, 1]} : vector<16x192xf32> to vector<16x16xf32>
    %73 = vector.extract_strided_slice %32 {offsets = [0, 160], sizes = [16, 16], strides = [1, 1]} : vector<16x192xf32> to vector<16x16xf32>
    %cst_30 = arith.constant dense<0.000000e+00> : vector<16x16xf32>
    %74 = tpu.matmul %71, %72, %cst_30 {dimension_numbers = #tpu.dot_dimension_numbers<[1], [1], [0], [0], [0, 0, 1, 0], [], []>} : vector<16x16xf32>, vector<16x16xf32>, vector<16x16xf32> -> vector<16x16xf32>
    %cst_31 = arith.constant 2.500000e-01 : f32
    %75 = vector.broadcast %cst_31 : f32 to vector<16x16xf32>
    %76 = arith.mulf %74, %75 : vector<16x16xf32>
    %77 = vector.broadcast %25 : vector<1x16xf32> to vector<16x16xf32>
    %78 = arith.addf %76, %77 : vector<16x16xf32>
    %cst_32 = arith.constant dense<0xFF800000> : vector<16xf32>
    %79 = vector.multi_reduction <maximumf>, %78, %cst_32 [1] : vector<16x16xf32> to vector<16xf32>
    %80 = vector.shape_cast %79 : vector<16xf32> to vector<16x1xf32>
    %81 = vector.broadcast %80 : vector<16x1xf32> to vector<16x16xf32>
    %82 = arith.subf %78, %81 : vector<16x16xf32>
    %83 = math.exp %82 : vector<16x16xf32>
    %cst_33 = arith.constant dense<0.000000e+00> : vector<16xf32>
    %84 = vector.multi_reduction <add>, %83, %cst_33 [1] : vector<16x16xf32> to vector<16xf32>
    %85 = vector.shape_cast %84 : vector<16xf32> to vector<16x1xf32>
    %86 = tpu.reciprocal %85 {approx = true} : vector<16x1xf32> -> vector<16x1xf32>
    %87 = vector.broadcast %86 : vector<16x1xf32> to vector<16x16xf32>
    %88 = arith.mulf %83, %87 : vector<16x16xf32>
    %cst_34 = arith.constant dense<0.000000e+00> : vector<16x16xf32>
    %89 = tpu.matmul %88, %73, %cst_34 {dimension_numbers = #tpu.dot_dimension_numbers<[1], [0], [0], [1], [0, 0, 1, 1], [], []>} : vector<16x16xf32>, vector<16x16xf32>, vector<16x16xf32> -> vector<16x16xf32>
    %90 = vector.extract_strided_slice %32 {offsets = [0, 48], sizes = [16, 16], strides = [1, 1]} : vector<16x192xf32> to vector<16x16xf32>
    %91 = vector.extract_strided_slice %32 {offsets = [0, 112], sizes = [16, 16], strides = [1, 1]} : vector<16x192xf32> to vector<16x16xf32>
    %92 = vector.extract_strided_slice %32 {offsets = [0, 176], sizes = [16, 16], strides = [1, 1]} : vector<16x192xf32> to vector<16x16xf32>
    %cst_35 = arith.constant dense<0.000000e+00> : vector<16x16xf32>
    %93 = tpu.matmul %90, %91, %cst_35 {dimension_numbers = #tpu.dot_dimension_numbers<[1], [1], [0], [0], [0, 0, 1, 0], [], []>} : vector<16x16xf32>, vector<16x16xf32>, vector<16x16xf32> -> vector<16x16xf32>
    %cst_36 = arith.constant 2.500000e-01 : f32
    %94 = vector.broadcast %cst_36 : f32 to vector<16x16xf32>
    %95 = arith.mulf %93, %94 : vector<16x16xf32>
    %96 = vector.broadcast %25 : vector<1x16xf32> to vector<16x16xf32>
    %97 = arith.addf %95, %96 : vector<16x16xf32>
    %cst_37 = arith.constant dense<0xFF800000> : vector<16xf32>
    %98 = vector.multi_reduction <maximumf>, %97, %cst_37 [1] : vector<16x16xf32> to vector<16xf32>
    %99 = vector.shape_cast %98 : vector<16xf32> to vector<16x1xf32>
    %100 = vector.broadcast %99 : vector<16x1xf32> to vector<16x16xf32>
    %101 = arith.subf %97, %100 : vector<16x16xf32>
    %102 = math.exp %101 : vector<16x16xf32>
    %cst_38 = arith.constant dense<0.000000e+00> : vector<16xf32>
    %103 = vector.multi_reduction <add>, %102, %cst_38 [1] : vector<16x16xf32> to vector<16xf32>
    %104 = vector.shape_cast %103 : vector<16xf32> to vector<16x1xf32>
    %105 = tpu.reciprocal %104 {approx = true} : vector<16x1xf32> -> vector<16x1xf32>
    %106 = vector.broadcast %105 : vector<16x1xf32> to vector<16x16xf32>
    %107 = arith.mulf %102, %106 : vector<16x16xf32>
    %cst_39 = arith.constant dense<0.000000e+00> : vector<16x16xf32>
    %108 = tpu.matmul %107, %92, %cst_39 {dimension_numbers = #tpu.dot_dimension_numbers<[1], [0], [0], [1], [0, 0, 1, 1], [], []>} : vector<16x16xf32>, vector<16x16xf32>, vector<16x16xf32> -> vector<16x16xf32>
    %109 = tpu.concatenate %51, %70, %89, %108 in 1 : vector<16x16xf32>, vector<16x16xf32>, vector<16x16xf32>, vector<16x16xf32> -> vector<16x64xf32>
    %c0_40 = arith.constant 0 : index
    %c0_41 = arith.constant 0 : index
    %c0_42 = arith.constant 0 : index
    %110 = vector.load %arg8[%c0_40, %c0_41, %c0_42] : memref<2x64x64xf32, #tpu.memory_space<vmem>>, vector<1x64x64xf32>
    %111 = vector.shape_cast %110 : vector<1x64x64xf32> to vector<64x64xf32>
    %cst_43 = arith.constant dense<0.000000e+00> : vector<16x64xf32>
    %112 = tpu.matmul %109, %111, %cst_43 {dimension_numbers = #tpu.dot_dimension_numbers<[1], [0], [0], [1], [0, 0, 1, 1], [], []>} : vector<16x64xf32>, vector<64x64xf32>, vector<16x64xf32> -> vector<16x64xf32>
    %c0_44 = arith.constant 0 : index
    %c0_45 = arith.constant 0 : index
    %c0_46 = arith.constant 0 : index
    %113 = vector.load %arg9[%c0_44, %c0_45, %c0_46] : memref<2x1x64xf32, #tpu.memory_space<vmem>>, vector<1x1x64xf32>
    %114 = vector.shape_cast %113 : vector<1x1x64xf32> to vector<1x64xf32>
    %115 = vector.broadcast %114 : vector<1x64xf32> to vector<16x64xf32>
    %116 = arith.addf %112, %115 : vector<16x64xf32>
    %117 = arith.addf %23, %116 : vector<16x64xf32>
    %c0_47 = arith.constant 0 : index
    %c0_48 = arith.constant 0 : index
    %c0_49 = arith.constant 0 : index
    %118 = vector.load %arg10[%c0_47, %c0_48, %c0_49] : memref<2x1x64xf32, #tpu.memory_space<vmem>>, vector<1x1x64xf32>
    %119 = vector.shape_cast %118 : vector<1x1x64xf32> to vector<1x64xf32>
    %c0_50 = arith.constant 0 : index
    %c0_51 = arith.constant 0 : index
    %c0_52 = arith.constant 0 : index
    %120 = vector.load %arg11[%c0_50, %c0_51, %c0_52] : memref<2x1x64xf32, #tpu.memory_space<vmem>>, vector<1x1x64xf32>
    %121 = vector.shape_cast %120 : vector<1x1x64xf32> to vector<1x64xf32>
    %cst_53 = arith.constant dense<0.000000e+00> : vector<16xf32>
    %122 = vector.multi_reduction <add>, %117, %cst_53 [1] : vector<16x64xf32> to vector<16xf32>
    %123 = vector.shape_cast %122 : vector<16xf32> to vector<16x1xf32>
    %cst_54 = arith.constant 6.400000e+01 : f32
    %124 = vector.broadcast %cst_54 : f32 to vector<16x1xf32>
    %125 = arith.divf %123, %124 : vector<16x1xf32>
    %126 = vector.broadcast %125 : vector<16x1xf32> to vector<16x64xf32>
    %127 = arith.subf %117, %126 : vector<16x64xf32>
    %128 = arith.mulf %127, %127 : vector<16x64xf32>
    %cst_55 = arith.constant dense<0.000000e+00> : vector<16xf32>
    %129 = vector.multi_reduction <add>, %128, %cst_55 [1] : vector<16x64xf32> to vector<16xf32>
    %130 = vector.shape_cast %129 : vector<16xf32> to vector<16x1xf32>
    %cst_56 = arith.constant 6.400000e+01 : f32
    %131 = vector.broadcast %cst_56 : f32 to vector<16x1xf32>
    %132 = arith.divf %130, %131 : vector<16x1xf32>
    %cst_57 = arith.constant 9.99999996E-13 : f32
    %133 = vector.broadcast %cst_57 : f32 to vector<16x1xf32>
    %134 = arith.addf %132, %133 : vector<16x1xf32>
    %135 = math.rsqrt %134 : vector<16x1xf32>
    %136 = vector.broadcast %135 : vector<16x1xf32> to vector<16x64xf32>
    %137 = arith.mulf %127, %136 : vector<16x64xf32>
    %138 = vector.broadcast %119 : vector<1x64xf32> to vector<16x64xf32>
    %139 = arith.mulf %137, %138 : vector<16x64xf32>
    %140 = vector.broadcast %121 : vector<1x64xf32> to vector<16x64xf32>
    %141 = arith.addf %139, %140 : vector<16x64xf32>
    %c0_58 = arith.constant 0 : index
    %c0_59 = arith.constant 0 : index
    %c0_60 = arith.constant 0 : index
    %142 = vector.load %arg12[%c0_58, %c0_59, %c0_60] : memref<2x64x128xf32, #tpu.memory_space<vmem>>, vector<1x64x128xf32>
    %143 = vector.shape_cast %142 : vector<1x64x128xf32> to vector<64x128xf32>
    %cst_61 = arith.constant dense<0.000000e+00> : vector<16x128xf32>
    %144 = tpu.matmul %141, %143, %cst_61 {dimension_numbers = #tpu.dot_dimension_numbers<[1], [0], [0], [1], [0, 0, 1, 1], [], []>} : vector<16x64xf32>, vector<64x128xf32>, vector<16x128xf32> -> vector<16x128xf32>
    %c0_62 = arith.constant 0 : index
    %c0_63 = arith.constant 0 : index
    %c0_64 = arith.constant 0 : index
    %145 = vector.load %arg13[%c0_62, %c0_63, %c0_64] : memref<2x1x128xf32, #tpu.memory_space<vmem>>, vector<1x1x128xf32>
    %146 = vector.shape_cast %145 : vector<1x1x128xf32> to vector<1x128xf32>
    %147 = vector.broadcast %146 : vector<1x128xf32> to vector<16x128xf32>
    %148 = arith.addf %144, %147 : vector<16x128xf32>
    %cst_65 = arith.constant 5.000000e-01 : f32
    %149 = vector.broadcast %cst_65 : f32 to vector<16x128xf32>
    %150 = arith.mulf %149, %148 : vector<16x128xf32>
    %cst_66 = arith.constant 0.707106769 : f32
    %151 = vector.broadcast %cst_66 : f32 to vector<16x128xf32>
    %152 = arith.mulf %148, %151 : vector<16x128xf32>
    %153 = math.erf %152 : vector<16x128xf32>
    %cst_67 = arith.constant 1.000000e+00 : f32
    %154 = vector.broadcast %cst_67 : f32 to vector<16x128xf32>
    %155 = arith.addf %154, %153 : vector<16x128xf32>
    %156 = arith.mulf %150, %155 : vector<16x128xf32>
    %c0_68 = arith.constant 0 : index
    %c0_69 = arith.constant 0 : index
    %c0_70 = arith.constant 0 : index
    %157 = vector.load %arg14[%c0_68, %c0_69, %c0_70] : memref<2x128x64xf32, #tpu.memory_space<vmem>>, vector<1x128x64xf32>
    %158 = vector.shape_cast %157 : vector<1x128x64xf32> to vector<128x64xf32>
    %cst_71 = arith.constant dense<0.000000e+00> : vector<16x64xf32>
    %159 = tpu.matmul %156, %158, %cst_71 {dimension_numbers = #tpu.dot_dimension_numbers<[1], [0], [0], [1], [0, 0, 1, 1], [], []>} : vector<16x128xf32>, vector<128x64xf32>, vector<16x64xf32> -> vector<16x64xf32>
    %c0_72 = arith.constant 0 : index
    %c0_73 = arith.constant 0 : index
    %c0_74 = arith.constant 0 : index
    %160 = vector.load %arg15[%c0_72, %c0_73, %c0_74] : memref<2x1x64xf32, #tpu.memory_space<vmem>>, vector<1x1x64xf32>
    %161 = vector.shape_cast %160 : vector<1x1x64xf32> to vector<1x64xf32>
    %162 = vector.broadcast %161 : vector<1x64xf32> to vector<16x64xf32>
    %163 = arith.addf %159, %162 : vector<16x64xf32>
    %164 = arith.addf %141, %163 : vector<16x64xf32>
    %c0_75 = arith.constant 0 : index
    %c0_76 = arith.constant 0 : index
    %c0_77 = arith.constant 0 : index
    %165 = vector.load %arg16[%c0_75, %c0_76, %c0_77] : memref<2x1x64xf32, #tpu.memory_space<vmem>>, vector<1x1x64xf32>
    %166 = vector.shape_cast %165 : vector<1x1x64xf32> to vector<1x64xf32>
    %c0_78 = arith.constant 0 : index
    %c0_79 = arith.constant 0 : index
    %c0_80 = arith.constant 0 : index
    %167 = vector.load %arg17[%c0_78, %c0_79, %c0_80] : memref<2x1x64xf32, #tpu.memory_space<vmem>>, vector<1x1x64xf32>
    %168 = vector.shape_cast %167 : vector<1x1x64xf32> to vector<1x64xf32>
    %cst_81 = arith.constant dense<0.000000e+00> : vector<16xf32>
    %169 = vector.multi_reduction <add>, %164, %cst_81 [1] : vector<16x64xf32> to vector<16xf32>
    %170 = vector.shape_cast %169 : vector<16xf32> to vector<16x1xf32>
    %cst_82 = arith.constant 6.400000e+01 : f32
    %171 = vector.broadcast %cst_82 : f32 to vector<16x1xf32>
    %172 = arith.divf %170, %171 : vector<16x1xf32>
    %173 = vector.broadcast %172 : vector<16x1xf32> to vector<16x64xf32>
    %174 = arith.subf %164, %173 : vector<16x64xf32>
    %175 = arith.mulf %174, %174 : vector<16x64xf32>
    %cst_83 = arith.constant dense<0.000000e+00> : vector<16xf32>
    %176 = vector.multi_reduction <add>, %175, %cst_83 [1] : vector<16x64xf32> to vector<16xf32>
    %177 = vector.shape_cast %176 : vector<16xf32> to vector<16x1xf32>
    %cst_84 = arith.constant 6.400000e+01 : f32
    %178 = vector.broadcast %cst_84 : f32 to vector<16x1xf32>
    %179 = arith.divf %177, %178 : vector<16x1xf32>
    %cst_85 = arith.constant 9.99999996E-13 : f32
    %180 = vector.broadcast %cst_85 : f32 to vector<16x1xf32>
    %181 = arith.addf %179, %180 : vector<16x1xf32>
    %182 = math.rsqrt %181 : vector<16x1xf32>
    %183 = vector.broadcast %182 : vector<16x1xf32> to vector<16x64xf32>
    %184 = arith.mulf %174, %183 : vector<16x64xf32>
    %185 = vector.broadcast %166 : vector<1x64xf32> to vector<16x64xf32>
    %186 = arith.mulf %184, %185 : vector<16x64xf32>
    %187 = vector.broadcast %168 : vector<1x64xf32> to vector<16x64xf32>
    %188 = arith.addf %186, %187 : vector<16x64xf32>
    %c1 = arith.constant 1 : index
    %c0_86 = arith.constant 0 : index
    %c0_87 = arith.constant 0 : index
    %189 = vector.load %arg6[%c1, %c0_86, %c0_87] : memref<2x64x192xf32, #tpu.memory_space<vmem>>, vector<1x64x192xf32>
    %190 = vector.shape_cast %189 : vector<1x64x192xf32> to vector<64x192xf32>
    %cst_88 = arith.constant dense<0.000000e+00> : vector<16x192xf32>
    %191 = tpu.matmul %188, %190, %cst_88 {dimension_numbers = #tpu.dot_dimension_numbers<[1], [0], [0], [1], [0, 0, 1, 1], [], []>} : vector<16x64xf32>, vector<64x192xf32>, vector<16x192xf32> -> vector<16x192xf32>
    %c1_89 = arith.constant 1 : index
    %c0_90 = arith.constant 0 : index
    %c0_91 = arith.constant 0 : index
    %192 = vector.load %arg7[%c1_89, %c0_90, %c0_91] : memref<2x1x192xf32, #tpu.memory_space<vmem>>, vector<1x1x192xf32>
    %193 = vector.shape_cast %192 : vector<1x1x192xf32> to vector<1x192xf32>
    %194 = vector.broadcast %193 : vector<1x192xf32> to vector<16x192xf32>
    %195 = arith.addf %191, %194 : vector<16x192xf32>
    %196 = vector.extract_strided_slice %195 {offsets = [0, 0], sizes = [16, 16], strides = [1, 1]} : vector<16x192xf32> to vector<16x16xf32>
    %197 = vector.extract_strided_slice %195 {offsets = [0, 64], sizes = [16, 16], strides = [1, 1]} : vector<16x192xf32> to vector<16x16xf32>
    %198 = vector.extract_strided_slice %195 {offsets = [0, 128], sizes = [16, 16], strides = [1, 1]} : vector<16x192xf32> to vector<16x16xf32>
    %cst_92 = arith.constant dense<0.000000e+00> : vector<16x16xf32>
    %199 = tpu.matmul %196, %197, %cst_92 {dimension_numbers = #tpu.dot_dimension_numbers<[1], [1], [0], [0], [0, 0, 1, 0], [], []>} : vector<16x16xf32>, vector<16x16xf32>, vector<16x16xf32> -> vector<16x16xf32>
    %cst_93 = arith.constant 2.500000e-01 : f32
    %200 = vector.broadcast %cst_93 : f32 to vector<16x16xf32>
    %201 = arith.mulf %199, %200 : vector<16x16xf32>
    %202 = vector.broadcast %25 : vector<1x16xf32> to vector<16x16xf32>
    %203 = arith.addf %201, %202 : vector<16x16xf32>
    %cst_94 = arith.constant dense<0xFF800000> : vector<16xf32>
    %204 = vector.multi_reduction <maximumf>, %203, %cst_94 [1] : vector<16x16xf32> to vector<16xf32>
    %205 = vector.shape_cast %204 : vector<16xf32> to vector<16x1xf32>
    %206 = vector.broadcast %205 : vector<16x1xf32> to vector<16x16xf32>
    %207 = arith.subf %203, %206 : vector<16x16xf32>
    %208 = math.exp %207 : vector<16x16xf32>
    %cst_95 = arith.constant dense<0.000000e+00> : vector<16xf32>
    %209 = vector.multi_reduction <add>, %208, %cst_95 [1] : vector<16x16xf32> to vector<16xf32>
    %210 = vector.shape_cast %209 : vector<16xf32> to vector<16x1xf32>
    %211 = tpu.reciprocal %210 {approx = true} : vector<16x1xf32> -> vector<16x1xf32>
    %212 = vector.broadcast %211 : vector<16x1xf32> to vector<16x16xf32>
    %213 = arith.mulf %208, %212 : vector<16x16xf32>
    %cst_96 = arith.constant dense<0.000000e+00> : vector<16x16xf32>
    %214 = tpu.matmul %213, %198, %cst_96 {dimension_numbers = #tpu.dot_dimension_numbers<[1], [0], [0], [1], [0, 0, 1, 1], [], []>} : vector<16x16xf32>, vector<16x16xf32>, vector<16x16xf32> -> vector<16x16xf32>
    %215 = vector.extract_strided_slice %195 {offsets = [0, 16], sizes = [16, 16], strides = [1, 1]} : vector<16x192xf32> to vector<16x16xf32>
    %216 = vector.extract_strided_slice %195 {offsets = [0, 80], sizes = [16, 16], strides = [1, 1]} : vector<16x192xf32> to vector<16x16xf32>
    %217 = vector.extract_strided_slice %195 {offsets = [0, 144], sizes = [16, 16], strides = [1, 1]} : vector<16x192xf32> to vector<16x16xf32>
    %cst_97 = arith.constant dense<0.000000e+00> : vector<16x16xf32>
    %218 = tpu.matmul %215, %216, %cst_97 {dimension_numbers = #tpu.dot_dimension_numbers<[1], [1], [0], [0], [0, 0, 1, 0], [], []>} : vector<16x16xf32>, vector<16x16xf32>, vector<16x16xf32> -> vector<16x16xf32>
    %cst_98 = arith.constant 2.500000e-01 : f32
    %219 = vector.broadcast %cst_98 : f32 to vector<16x16xf32>
    %220 = arith.mulf %218, %219 : vector<16x16xf32>
    %221 = vector.broadcast %25 : vector<1x16xf32> to vector<16x16xf32>
    %222 = arith.addf %220, %221 : vector<16x16xf32>
    %cst_99 = arith.constant dense<0xFF800000> : vector<16xf32>
    %223 = vector.multi_reduction <maximumf>, %222, %cst_99 [1] : vector<16x16xf32> to vector<16xf32>
    %224 = vector.shape_cast %223 : vector<16xf32> to vector<16x1xf32>
    %225 = vector.broadcast %224 : vector<16x1xf32> to vector<16x16xf32>
    %226 = arith.subf %222, %225 : vector<16x16xf32>
    %227 = math.exp %226 : vector<16x16xf32>
    %cst_100 = arith.constant dense<0.000000e+00> : vector<16xf32>
    %228 = vector.multi_reduction <add>, %227, %cst_100 [1] : vector<16x16xf32> to vector<16xf32>
    %229 = vector.shape_cast %228 : vector<16xf32> to vector<16x1xf32>
    %230 = tpu.reciprocal %229 {approx = true} : vector<16x1xf32> -> vector<16x1xf32>
    %231 = vector.broadcast %230 : vector<16x1xf32> to vector<16x16xf32>
    %232 = arith.mulf %227, %231 : vector<16x16xf32>
    %cst_101 = arith.constant dense<0.000000e+00> : vector<16x16xf32>
    %233 = tpu.matmul %232, %217, %cst_101 {dimension_numbers = #tpu.dot_dimension_numbers<[1], [0], [0], [1], [0, 0, 1, 1], [], []>} : vector<16x16xf32>, vector<16x16xf32>, vector<16x16xf32> -> vector<16x16xf32>
    %234 = vector.extract_strided_slice %195 {offsets = [0, 32], sizes = [16, 16], strides = [1, 1]} : vector<16x192xf32> to vector<16x16xf32>
    %235 = vector.extract_strided_slice %195 {offsets = [0, 96], sizes = [16, 16], strides = [1, 1]} : vector<16x192xf32> to vector<16x16xf32>
    %236 = vector.extract_strided_slice %195 {offsets = [0, 160], sizes = [16, 16], strides = [1, 1]} : vector<16x192xf32> to vector<16x16xf32>
    %cst_102 = arith.constant dense<0.000000e+00> : vector<16x16xf32>
    %237 = tpu.matmul %234, %235, %cst_102 {dimension_numbers = #tpu.dot_dimension_numbers<[1], [1], [0], [0], [0, 0, 1, 0], [], []>} : vector<16x16xf32>, vector<16x16xf32>, vector<16x16xf32> -> vector<16x16xf32>
    %cst_103 = arith.constant 2.500000e-01 : f32
    %238 = vector.broadcast %cst_103 : f32 to vector<16x16xf32>
    %239 = arith.mulf %237, %238 : vector<16x16xf32>
    %240 = vector.broadcast %25 : vector<1x16xf32> to vector<16x16xf32>
    %241 = arith.addf %239, %240 : vector<16x16xf32>
    %cst_104 = arith.constant dense<0xFF800000> : vector<16xf32>
    %242 = vector.multi_reduction <maximumf>, %241, %cst_104 [1] : vector<16x16xf32> to vector<16xf32>
    %243 = vector.shape_cast %242 : vector<16xf32> to vector<16x1xf32>
    %244 = vector.broadcast %243 : vector<16x1xf32> to vector<16x16xf32>
    %245 = arith.subf %241, %244 : vector<16x16xf32>
    %246 = math.exp %245 : vector<16x16xf32>
    %cst_105 = arith.constant dense<0.000000e+00> : vector<16xf32>
    %247 = vector.multi_reduction <add>, %246, %cst_105 [1] : vector<16x16xf32> to vector<16xf32>
    %248 = vector.shape_cast %247 : vector<16xf32> to vector<16x1xf32>
    %249 = tpu.reciprocal %248 {approx = true} : vector<16x1xf32> -> vector<16x1xf32>
    %250 = vector.broadcast %249 : vector<16x1xf32> to vector<16x16xf32>
    %251 = arith.mulf %246, %250 : vector<16x16xf32>
    %cst_106 = arith.constant dense<0.000000e+00> : vector<16x16xf32>
    %252 = tpu.matmul %251, %236, %cst_106 {dimension_numbers = #tpu.dot_dimension_numbers<[1], [0], [0], [1], [0, 0, 1, 1], [], []>} : vector<16x16xf32>, vector<16x16xf32>, vector<16x16xf32> -> vector<16x16xf32>
    %253 = vector.extract_strided_slice %195 {offsets = [0, 48], sizes = [16, 16], strides = [1, 1]} : vector<16x192xf32> to vector<16x16xf32>
    %254 = vector.extract_strided_slice %195 {offsets = [0, 112], sizes = [16, 16], strides = [1, 1]} : vector<16x192xf32> to vector<16x16xf32>
    %255 = vector.extract_strided_slice %195 {offsets = [0, 176], sizes = [16, 16], strides = [1, 1]} : vector<16x192xf32> to vector<16x16xf32>
    %cst_107 = arith.constant dense<0.000000e+00> : vector<16x16xf32>
    %256 = tpu.matmul %253, %254, %cst_107 {dimension_numbers = #tpu.dot_dimension_numbers<[1], [1], [0], [0], [0, 0, 1, 0], [], []>} : vector<16x16xf32>, vector<16x16xf32>, vector<16x16xf32> -> vector<16x16xf32>
    %cst_108 = arith.constant 2.500000e-01 : f32
    %257 = vector.broadcast %cst_108 : f32 to vector<16x16xf32>
    %258 = arith.mulf %256, %257 : vector<16x16xf32>
    %259 = vector.broadcast %25 : vector<1x16xf32> to vector<16x16xf32>
    %260 = arith.addf %258, %259 : vector<16x16xf32>
    %cst_109 = arith.constant dense<0xFF800000> : vector<16xf32>
    %261 = vector.multi_reduction <maximumf>, %260, %cst_109 [1] : vector<16x16xf32> to vector<16xf32>
    %262 = vector.shape_cast %261 : vector<16xf32> to vector<16x1xf32>
    %263 = vector.broadcast %262 : vector<16x1xf32> to vector<16x16xf32>
    %264 = arith.subf %260, %263 : vector<16x16xf32>
    %265 = math.exp %264 : vector<16x16xf32>
    %cst_110 = arith.constant dense<0.000000e+00> : vector<16xf32>
    %266 = vector.multi_reduction <add>, %265, %cst_110 [1] : vector<16x16xf32> to vector<16xf32>
    %267 = vector.shape_cast %266 : vector<16xf32> to vector<16x1xf32>
    %268 = tpu.reciprocal %267 {approx = true} : vector<16x1xf32> -> vector<16x1xf32>
    %269 = vector.broadcast %268 : vector<16x1xf32> to vector<16x16xf32>
    %270 = arith.mulf %265, %269 : vector<16x16xf32>
    %cst_111 = arith.constant dense<0.000000e+00> : vector<16x16xf32>
    %271 = tpu.matmul %270, %255, %cst_111 {dimension_numbers = #tpu.dot_dimension_numbers<[1], [0], [0], [1], [0, 0, 1, 1], [], []>} : vector<16x16xf32>, vector<16x16xf32>, vector<16x16xf32> -> vector<16x16xf32>
    %272 = tpu.concatenate %214, %233, %252, %271 in 1 : vector<16x16xf32>, vector<16x16xf32>, vector<16x16xf32>, vector<16x16xf32> -> vector<16x64xf32>
    %c1_112 = arith.constant 1 : index
    %c0_113 = arith.constant 0 : index
    %c0_114 = arith.constant 0 : index
    %273 = vector.load %arg8[%c1_112, %c0_113, %c0_114] : memref<2x64x64xf32, #tpu.memory_space<vmem>>, vector<1x64x64xf32>
    %274 = vector.shape_cast %273 : vector<1x64x64xf32> to vector<64x64xf32>
    %cst_115 = arith.constant dense<0.000000e+00> : vector<16x64xf32>
    %275 = tpu.matmul %272, %274, %cst_115 {dimension_numbers = #tpu.dot_dimension_numbers<[1], [0], [0], [1], [0, 0, 1, 1], [], []>} : vector<16x64xf32>, vector<64x64xf32>, vector<16x64xf32> -> vector<16x64xf32>
    %c1_116 = arith.constant 1 : index
    %c0_117 = arith.constant 0 : index
    %c0_118 = arith.constant 0 : index
    %276 = vector.load %arg9[%c1_116, %c0_117, %c0_118] : memref<2x1x64xf32, #tpu.memory_space<vmem>>, vector<1x1x64xf32>
    %277 = vector.shape_cast %276 : vector<1x1x64xf32> to vector<1x64xf32>
    %278 = vector.broadcast %277 : vector<1x64xf32> to vector<16x64xf32>
    %279 = arith.addf %275, %278 : vector<16x64xf32>
    %280 = arith.addf %188, %279 : vector<16x64xf32>
    %c1_119 = arith.constant 1 : index
    %c0_120 = arith.constant 0 : index
    %c0_121 = arith.constant 0 : index
    %281 = vector.load %arg10[%c1_119, %c0_120, %c0_121] : memref<2x1x64xf32, #tpu.memory_space<vmem>>, vector<1x1x64xf32>
    %282 = vector.shape_cast %281 : vector<1x1x64xf32> to vector<1x64xf32>
    %c1_122 = arith.constant 1 : index
    %c0_123 = arith.constant 0 : index
    %c0_124 = arith.constant 0 : index
    %283 = vector.load %arg11[%c1_122, %c0_123, %c0_124] : memref<2x1x64xf32, #tpu.memory_space<vmem>>, vector<1x1x64xf32>
    %284 = vector.shape_cast %283 : vector<1x1x64xf32> to vector<1x64xf32>
    %cst_125 = arith.constant dense<0.000000e+00> : vector<16xf32>
    %285 = vector.multi_reduction <add>, %280, %cst_125 [1] : vector<16x64xf32> to vector<16xf32>
    %286 = vector.shape_cast %285 : vector<16xf32> to vector<16x1xf32>
    %cst_126 = arith.constant 6.400000e+01 : f32
    %287 = vector.broadcast %cst_126 : f32 to vector<16x1xf32>
    %288 = arith.divf %286, %287 : vector<16x1xf32>
    %289 = vector.broadcast %288 : vector<16x1xf32> to vector<16x64xf32>
    %290 = arith.subf %280, %289 : vector<16x64xf32>
    %291 = arith.mulf %290, %290 : vector<16x64xf32>
    %cst_127 = arith.constant dense<0.000000e+00> : vector<16xf32>
    %292 = vector.multi_reduction <add>, %291, %cst_127 [1] : vector<16x64xf32> to vector<16xf32>
    %293 = vector.shape_cast %292 : vector<16xf32> to vector<16x1xf32>
    %cst_128 = arith.constant 6.400000e+01 : f32
    %294 = vector.broadcast %cst_128 : f32 to vector<16x1xf32>
    %295 = arith.divf %293, %294 : vector<16x1xf32>
    %cst_129 = arith.constant 9.99999996E-13 : f32
    %296 = vector.broadcast %cst_129 : f32 to vector<16x1xf32>
    %297 = arith.addf %295, %296 : vector<16x1xf32>
    %298 = math.rsqrt %297 : vector<16x1xf32>
    %299 = vector.broadcast %298 : vector<16x1xf32> to vector<16x64xf32>
    %300 = arith.mulf %290, %299 : vector<16x64xf32>
    %301 = vector.broadcast %282 : vector<1x64xf32> to vector<16x64xf32>
    %302 = arith.mulf %300, %301 : vector<16x64xf32>
    %303 = vector.broadcast %284 : vector<1x64xf32> to vector<16x64xf32>
    %304 = arith.addf %302, %303 : vector<16x64xf32>
    %c1_130 = arith.constant 1 : index
    %c0_131 = arith.constant 0 : index
    %c0_132 = arith.constant 0 : index
    %305 = vector.load %arg12[%c1_130, %c0_131, %c0_132] : memref<2x64x128xf32, #tpu.memory_space<vmem>>, vector<1x64x128xf32>
    %306 = vector.shape_cast %305 : vector<1x64x128xf32> to vector<64x128xf32>
    %cst_133 = arith.constant dense<0.000000e+00> : vector<16x128xf32>
    %307 = tpu.matmul %304, %306, %cst_133 {dimension_numbers = #tpu.dot_dimension_numbers<[1], [0], [0], [1], [0, 0, 1, 1], [], []>} : vector<16x64xf32>, vector<64x128xf32>, vector<16x128xf32> -> vector<16x128xf32>
    %c1_134 = arith.constant 1 : index
    %c0_135 = arith.constant 0 : index
    %c0_136 = arith.constant 0 : index
    %308 = vector.load %arg13[%c1_134, %c0_135, %c0_136] : memref<2x1x128xf32, #tpu.memory_space<vmem>>, vector<1x1x128xf32>
    %309 = vector.shape_cast %308 : vector<1x1x128xf32> to vector<1x128xf32>
    %310 = vector.broadcast %309 : vector<1x128xf32> to vector<16x128xf32>
    %311 = arith.addf %307, %310 : vector<16x128xf32>
    %cst_137 = arith.constant 5.000000e-01 : f32
    %312 = vector.broadcast %cst_137 : f32 to vector<16x128xf32>
    %313 = arith.mulf %312, %311 : vector<16x128xf32>
    %cst_138 = arith.constant 0.707106769 : f32
    %314 = vector.broadcast %cst_138 : f32 to vector<16x128xf32>
    %315 = arith.mulf %311, %314 : vector<16x128xf32>
    %316 = math.erf %315 : vector<16x128xf32>
    %cst_139 = arith.constant 1.000000e+00 : f32
    %317 = vector.broadcast %cst_139 : f32 to vector<16x128xf32>
    %318 = arith.addf %317, %316 : vector<16x128xf32>
    %319 = arith.mulf %313, %318 : vector<16x128xf32>
    %c1_140 = arith.constant 1 : index
    %c0_141 = arith.constant 0 : index
    %c0_142 = arith.constant 0 : index
    %320 = vector.load %arg14[%c1_140, %c0_141, %c0_142] : memref<2x128x64xf32, #tpu.memory_space<vmem>>, vector<1x128x64xf32>
    %321 = vector.shape_cast %320 : vector<1x128x64xf32> to vector<128x64xf32>
    %cst_143 = arith.constant dense<0.000000e+00> : vector<16x64xf32>
    %322 = tpu.matmul %319, %321, %cst_143 {dimension_numbers = #tpu.dot_dimension_numbers<[1], [0], [0], [1], [0, 0, 1, 1], [], []>} : vector<16x128xf32>, vector<128x64xf32>, vector<16x64xf32> -> vector<16x64xf32>
    %c1_144 = arith.constant 1 : index
    %c0_145 = arith.constant 0 : index
    %c0_146 = arith.constant 0 : index
    %323 = vector.load %arg15[%c1_144, %c0_145, %c0_146] : memref<2x1x64xf32, #tpu.memory_space<vmem>>, vector<1x1x64xf32>
    %324 = vector.shape_cast %323 : vector<1x1x64xf32> to vector<1x64xf32>
    %325 = vector.broadcast %324 : vector<1x64xf32> to vector<16x64xf32>
    %326 = arith.addf %322, %325 : vector<16x64xf32>
    %327 = arith.addf %304, %326 : vector<16x64xf32>
    %c1_147 = arith.constant 1 : index
    %c0_148 = arith.constant 0 : index
    %c0_149 = arith.constant 0 : index
    %328 = vector.load %arg16[%c1_147, %c0_148, %c0_149] : memref<2x1x64xf32, #tpu.memory_space<vmem>>, vector<1x1x64xf32>
    %329 = vector.shape_cast %328 : vector<1x1x64xf32> to vector<1x64xf32>
    %c1_150 = arith.constant 1 : index
    %c0_151 = arith.constant 0 : index
    %c0_152 = arith.constant 0 : index
    %330 = vector.load %arg17[%c1_150, %c0_151, %c0_152] : memref<2x1x64xf32, #tpu.memory_space<vmem>>, vector<1x1x64xf32>
    %331 = vector.shape_cast %330 : vector<1x1x64xf32> to vector<1x64xf32>
    %cst_153 = arith.constant dense<0.000000e+00> : vector<16xf32>
    %332 = vector.multi_reduction <add>, %327, %cst_153 [1] : vector<16x64xf32> to vector<16xf32>
    %333 = vector.shape_cast %332 : vector<16xf32> to vector<16x1xf32>
    %cst_154 = arith.constant 6.400000e+01 : f32
    %334 = vector.broadcast %cst_154 : f32 to vector<16x1xf32>
    %335 = arith.divf %333, %334 : vector<16x1xf32>
    %336 = vector.broadcast %335 : vector<16x1xf32> to vector<16x64xf32>
    %337 = arith.subf %327, %336 : vector<16x64xf32>
    %338 = arith.mulf %337, %337 : vector<16x64xf32>
    %cst_155 = arith.constant dense<0.000000e+00> : vector<16xf32>
    %339 = vector.multi_reduction <add>, %338, %cst_155 [1] : vector<16x64xf32> to vector<16xf32>
    %340 = vector.shape_cast %339 : vector<16xf32> to vector<16x1xf32>
    %cst_156 = arith.constant 6.400000e+01 : f32
    %341 = vector.broadcast %cst_156 : f32 to vector<16x1xf32>
    %342 = arith.divf %340, %341 : vector<16x1xf32>
    %cst_157 = arith.constant 9.99999996E-13 : f32
    %343 = vector.broadcast %cst_157 : f32 to vector<16x1xf32>
    %344 = arith.addf %342, %343 : vector<16x1xf32>
    %345 = math.rsqrt %344 : vector<16x1xf32>
    %346 = vector.broadcast %345 : vector<16x1xf32> to vector<16x64xf32>
    %347 = arith.mulf %337, %346 : vector<16x64xf32>
    %348 = vector.broadcast %329 : vector<1x64xf32> to vector<16x64xf32>
    %349 = arith.mulf %347, %348 : vector<16x64xf32>
    %350 = vector.broadcast %331 : vector<1x64xf32> to vector<16x64xf32>
    %351 = arith.addf %349, %350 : vector<16x64xf32>
    %c0_158 = arith.constant 0 : index
    %c0_159 = arith.constant 0 : index
    %c0_160 = arith.constant 0 : index
    %352 = vector.load %arg22[%c0_158, %c0_159, %c0_160] : memref<1x16x64xf32, #tpu.memory_space<vmem>>, vector<1x16x64xf32>
    %353 = vector.shape_cast %352 : vector<1x16x64xf32> to vector<16x64xf32>
    %354 = vector.shape_cast %351 : vector<16x64xf32> to vector<1x16x64xf32>
    tpu.vector_store %arg22[%c0_158, %c0_159, %c0_160], %354 {strides = array<i32>} : memref<1x16x64xf32, #tpu.memory_space<vmem>>, vector<1x16x64xf32>,
    %355 = vector.extract_strided_slice %351 {offsets = [0, 0], sizes = [1, 64], strides = [1, 1]} : vector<16x64xf32> to vector<1x64xf32>
    %c0_161 = arith.constant 0 : index
    %c0_162 = arith.constant 0 : index
    %356 = vector.load %arg18[%c0_161, %c0_162] : memref<64x64xf32, #tpu.memory_space<vmem>>, vector<64x64xf32>
    %cst_163 = arith.constant dense<0.000000e+00> : vector<1x64xf32>
    %357 = tpu.matmul %355, %356, %cst_163 {dimension_numbers = #tpu.dot_dimension_numbers<[1], [0], [0], [1], [0, 0, 1, 1], [], []>} : vector<1x64xf32>, vector<64x64xf32>, vector<1x64xf32> -> vector<1x64xf32>
    %c0_164 = arith.constant 0 : index
    %c0_165 = arith.constant 0 : index
    %358 = vector.load %arg19[%c0_164, %c0_165] : memref<1x64xf32, #tpu.memory_space<vmem>>, vector<1x64xf32>
    %359 = arith.addf %357, %358 : vector<1x64xf32>
    %360 = math.tanh %359 : vector<1x64xf32>
    %c0_166 = arith.constant 0 : index
    %c0_167 = arith.constant 0 : index
    %c0_168 = arith.constant 0 : index
    %361 = vector.load %arg23[%c0_166, %c0_167, %c0_168] : memref<1x1x64xf32, #tpu.memory_space<vmem>>, vector<1x1x64xf32>
    %362 = vector.shape_cast %361 : vector<1x1x64xf32> to vector<1x64xf32>
    %363 = vector.shape_cast %360 : vector<1x64xf32> to vector<1x1x64xf32>
    tpu.vector_store %arg23[%c0_166, %c0_167, %c0_168], %363 {strides = array<i32>} : memref<1x1x64xf32, #tpu.memory_space<vmem>>, vector<1x1x64xf32>,
    %c0_169 = arith.constant 0 : index
    %c0_170 = arith.constant 0 : index
    %c0_171 = arith.constant 0 : index
    %364 = vector.load %arg3[%c0_169, %c0_170, %c0_171] : memref<1x8x16xf32, #tpu.memory_space<vmem>>, vector<1x8x16xf32>
    %365 = vector.shape_cast %364 : vector<1x8x16xf32> to vector<8x16xf32>
    %cst_172 = arith.constant dense<0.000000e+00> : vector<8x64xf32>
    %366 = tpu.matmul %365, %351, %cst_172 {dimension_numbers = #tpu.dot_dimension_numbers<[1], [0], [0], [1], [0, 0, 1, 1], [], []>} : vector<8x16xf32>, vector<16x64xf32>, vector<8x64xf32> -> vector<8x64xf32>
    %c0_173 = arith.constant 0 : index
    %c0_174 = arith.constant 0 : index
    %c0_175 = arith.constant 0 : index
    %367 = vector.load %arg24[%c0_173, %c0_174, %c0_175] : memref<1x8x64xf32, #tpu.memory_space<vmem>>, vector<1x8x64xf32>
    %368 = vector.shape_cast %367 : vector<1x8x64xf32> to vector<8x64xf32>
    %369 = vector.shape_cast %366 : vector<8x64xf32> to vector<1x8x64xf32>
    tpu.vector_store %arg24[%c0_173, %c0_174, %c0_175], %369 {strides = array<i32>} : memref<1x8x64xf32, #tpu.memory_space<vmem>>, vector<1x8x64xf32>,
    %c0_176 = arith.constant 0 : index
    %c0_177 = arith.constant 0 : index
    %370 = vector.load %arg20[%c0_176, %c0_177] : memref<64x128xf32, #tpu.memory_space<vmem>>, vector<64x128xf32>
    %cst_178 = arith.constant dense<0.000000e+00> : vector<8x128xf32>
    %371 = tpu.matmul %366, %370, %cst_178 {dimension_numbers = #tpu.dot_dimension_numbers<[1], [0], [0], [1], [0, 0, 1, 1], [], []>} : vector<8x64xf32>, vector<64x128xf32>, vector<8x128xf32> -> vector<8x128xf32>
    %c0_179 = arith.constant 0 : index
    %c0_180 = arith.constant 0 : index
    %372 = vector.load %arg21[%c0_179, %c0_180] : memref<1x128xf32, #tpu.memory_space<vmem>>, vector<1x128xf32>
    %373 = vector.broadcast %372 : vector<1x128xf32> to vector<8x128xf32>
    %374 = arith.addf %371, %373 : vector<8x128xf32>
    %c0_181 = arith.constant 0 : index
    %c0_182 = arith.constant 0 : index
    %c0_183 = arith.constant 0 : index
    %375 = vector.load %arg25[%c0_181, %c0_182, %c0_183] : memref<1x8x128xf32, #tpu.memory_space<vmem>>, vector<1x8x128xf32>
    %376 = vector.shape_cast %375 : vector<1x8x128xf32> to vector<8x128xf32>
    %377 = vector.shape_cast %374 : vector<8x128xf32> to vector<1x8x128xf32>
    tpu.vector_store %arg25[%c0_181, %c0_182, %c0_183], %377 {strides = array<i32>} : memref<1x8x128xf32, #tpu.memory_space<vmem>>, vector<1x8x128xf32>,
    return
  }
  func.func @transform_0(%arg0: i32) -> (i32, i32, i32) {
    %c0_i32 = arith.constant 0 : i32
    %c0_i32_0 = arith.constant 0 : i32
    %c0_i32_1 = arith.constant 0 : i32
    return %arg0, %c0_i32, %c0_i32_0 : i32, i32, i32
  }
  func.func @transform_1(%arg0: i32) -> (i32, i32, i32) {
    %c0_i32 = arith.constant 0 : i32
    %c0_i32_0 = arith.constant 0 : i32
    %c0_i32_1 = arith.constant 0 : i32
    return %arg0, %c0_i32, %c0_i32_0 : i32, i32, i32
  }
  func.func @transform_2(%arg0: i32) -> (i32, i32, i32) {
    %c0_i32 = arith.constant 0 : i32
    %c0_i32_0 = arith.constant 0 : i32
    %c0_i32_1 = arith.constant 0 : i32
    return %arg0, %c0_i32, %c0_i32_0 : i32, i32, i32
  }
  func.func @transform_3(%arg0: i32) -> (i32, i32) {
    %c0_i32 = arith.constant 0 : i32
    %c0_i32_0 = arith.constant 0 : i32
    %c0_i32_1 = arith.constant 0 : i32
    return %c0_i32, %c0_i32_0 : i32, i32
  }
  func.func @transform_4(%arg0: i32) -> (i32, i32) {
    %c0_i32 = arith.constant 0 : i32
    %c0_i32_0 = arith.constant 0 : i32
    %c0_i32_1 = arith.constant 0 : i32
    return %c0_i32, %c0_i32_0 : i32, i32
  }
  func.func @transform_5(%arg0: i32) -> (i32, i32, i32) {
    %c0_i32 = arith.constant 0 : i32
    %c0_i32_0 = arith.constant 0 : i32
    %c0_i32_1 = arith.constant 0 : i32
    %c0_i32_2 = arith.constant 0 : i32
    return %c0_i32, %c0_i32_0, %c0_i32_1 : i32, i32, i32
  }
  func.func @transform_6(%arg0: i32) -> (i32, i32, i32) {
    %c0_i32 = arith.constant 0 : i32
    %c0_i32_0 = arith.constant 0 : i32
    %c0_i32_1 = arith.constant 0 : i32
    %c0_i32_2 = arith.constant 0 : i32
    return %c0_i32, %c0_i32_0, %c0_i32_1 : i32, i32, i32
  }
  func.func @transform_7(%arg0: i32) -> (i32, i32, i32) {
    %c0_i32 = arith.constant 0 : i32
    %c0_i32_0 = arith.constant 0 : i32
    %c0_i32_1 = arith.constant 0 : i32
    %c0_i32_2 = arith.constant 0 : i32
    return %c0_i32, %c0_i32_0, %c0_i32_1 : i32, i32, i32
  }
  func.func @transform_8(%arg0: i32) -> (i32, i32, i32) {
    %c0_i32 = arith.constant 0 : i32
    %c0_i32_0 = arith.constant 0 : i32
    %c0_i32_1 = arith.constant 0 : i32
    %c0_i32_2 = arith.constant 0 : i32
    return %c0_i32, %c0_i32_0, %c0_i32_1 : i32, i32, i32
  }
  func.func @transform_9(%arg0: i32) -> (i32, i32, i32) {
    %c0_i32 = arith.constant 0 : i32
    %c0_i32_0 = arith.constant 0 : i32
    %c0_i32_1 = arith.constant 0 : i32
    %c0_i32_2 = arith.constant 0 : i32
    return %c0_i32, %c0_i32_0, %c0_i32_1 : i32, i32, i32
  }
  func.func @transform_10(%arg0: i32) -> (i32, i32, i32) {
    %c0_i32 = arith.constant 0 : i32
    %c0_i32_0 = arith.constant 0 : i32
    %c0_i32_1 = arith.constant 0 : i32
    %c0_i32_2 = arith.constant 0 : i32
    return %c0_i32, %c0_i32_0, %c0_i32_1 : i32, i32, i32
  }
  func.func @transform_11(%arg0: i32) -> (i32, i32, i32) {
    %c0_i32 = arith.constant 0 : i32
    %c0_i32_0 = arith.constant 0 : i32
    %c0_i32_1 = arith.constant 0 : i32
    %c0_i32_2 = arith.constant 0 : i32
    return %c0_i32, %c0_i32_0, %c0_i32_1 : i32, i32, i32
  }
  func.func @transform_12(%arg0: i32) -> (i32, i32, i32) {
    %c0_i32 = arith.constant 0 : i32
    %c0_i32_0 = arith.constant 0 : i32
    %c0_i32_1 = arith.constant 0 : i32
    %c0_i32_2 = arith.constant 0 : i32
    return %c0_i32, %c0_i32_0, %c0_i32_1 : i32, i32, i32
  }
  func.func @transform_13(%arg0: i32) -> (i32, i32, i32) {
    %c0_i32 = arith.constant 0 : i32
    %c0_i32_0 = arith.constant 0 : i32
    %c0_i32_1 = arith.constant 0 : i32
    %c0_i32_2 = arith.constant 0 : i32
    return %c0_i32, %c0_i32_0, %c0_i32_1 : i32, i32, i32
  }
  func.func @transform_14(%arg0: i32) -> (i32, i32, i32) {
    %c0_i32 = arith.constant 0 : i32
    %c0_i32_0 = arith.constant 0 : i32
    %c0_i32_1 = arith.constant 0 : i32
    %c0_i32_2 = arith.constant 0 : i32
    return %c0_i32, %c0_i32_0, %c0_i32_1 : i32, i32, i32
  }
  func.func @transform_15(%arg0: i32) -> (i32, i32, i32) {
    %c0_i32 = arith.constant 0 : i32
    %c0_i32_0 = arith.constant 0 : i32
    %c0_i32_1 = arith.constant 0 : i32
    %c0_i32_2 = arith.constant 0 : i32
    return %c0_i32, %c0_i32_0, %c0_i32_1 : i32, i32, i32
  }
  func.func @transform_16(%arg0: i32) -> (i32, i32, i32) {
    %c0_i32 = arith.constant 0 : i32
    %c0_i32_0 = arith.constant 0 : i32
    %c0_i32_1 = arith.constant 0 : i32
    %c0_i32_2 = arith.constant 0 : i32
    return %c0_i32, %c0_i32_0, %c0_i32_1 : i32, i32, i32
  }
  func.func @transform_17(%arg0: i32) -> (i32, i32) {
    %c0_i32 = arith.constant 0 : i32
    %c0_i32_0 = arith.constant 0 : i32
    %c0_i32_1 = arith.constant 0 : i32
    return %c0_i32, %c0_i32_0 : i32, i32
  }
  func.func @transform_18(%arg0: i32) -> (i32, i32) {
    %c0_i32 = arith.constant 0 : i32
    %c0_i32_0 = arith.constant 0 : i32
    %c0_i32_1 = arith.constant 0 : i32
    return %c0_i32, %c0_i32_0 : i32, i32
  }
  func.func @transform_19(%arg0: i32) -> (i32, i32) {
    %c0_i32 = arith.constant 0 : i32
    %c0_i32_0 = arith.constant 0 : i32
    %c0_i32_1 = arith.constant 0 : i32
    return %c0_i32, %c0_i32_0 : i32, i32
  }
  func.func @transform_20(%arg0: i32) -> (i32, i32) {
    %c0_i32 = arith.constant 0 : i32
    %c0_i32_0 = arith.constant 0 : i32
    %c0_i32_1 = arith.constant 0 : i32
    return %c0_i32, %c0_i32_0 : i32, i32
  }
  func.func @transform_21(%arg0: i32) -> (i32, i32, i32) {
    %c0_i32 = arith.constant 0 : i32
    %c0_i32_0 = arith.constant 0 : i32
    %c0_i32_1 = arith.constant 0 : i32
    return %arg0, %c0_i32, %c0_i32_0 : i32, i32, i32
  }
  func.func @transform_22(%arg0: i32) -> (i32, i32, i32) {
    %c0_i32 = arith.constant 0 : i32
    %c0_i32_0 = arith.constant 0 : i32
    %c0_i32_1 = arith.constant 0 : i32
    return %arg0, %c0_i32, %c0_i32_0 : i32, i32, i32
  }
  func.func @transform_23(%arg0: i32) -> (i32, i32, i32) {
    %c0_i32 = arith.constant 0 : i32
    %c0_i32_0 = arith.constant 0 : i32
    %c0_i32_1 = arith.constant 0 : i32
    return %arg0, %c0_i32, %c0_i32_0 : i32, i32, i32
  }
  func.func @transform_24(%arg0: i32) -> (i32, i32, i32) {
    %c0_i32 = arith.constant 0 : i32
    %c0_i32_0 = arith.constant 0 : i32
    %c0_i32_1 = arith.constant 0 : i32
    return %arg0, %c0_i32, %c0_i32_0 : i32, i32, i32
  }
}

</mosaic_0001>

<llo_original>
// kernel: _device_forward.1
$region0: #{_device_forward.1}
  #allocation0 [shape = 'u32[]', space=smem, size = 0x4, offset = 0x4, fixed_abs, tag = 'smem constant byte address 0x4 - core index']
  #allocation1 [shape = 'u32[144,128]{1,0:T(1,128)}', space=vmem, size = 0x12000, scoped, tag = 'internal scratch']
  %s0 = inlined_call_operand.vmem [shape: f32[2,16,64], index: 0, kind: input, shape index: {}]
  %s1 = inlined_call_operand.vmem [shape: f32[2,1,16], index: 1, kind: input, shape index: {}]
  %s2 = inlined_call_operand.vmem [shape: f32[2,8,16], index: 2, kind: input, shape index: {}]
  %s3 = inlined_call_operand.vmem [shape: f32[1,64], index: 3, kind: input, shape index: {}]
  %s4 = inlined_call_operand.vmem [shape: f32[1,64], index: 4, kind: input, shape index: {}]
  %s5 = inlined_call_operand.vmem [shape: f32[2,64,192], index: 5, kind: input, shape index: {}]
  %s6 = inlined_call_operand.vmem [shape: f32[2,1,192], index: 6, kind: input, shape index: {}]
  %s7 = inlined_call_operand.vmem [shape: f32[2,64,64], index: 7, kind: input, shape index: {}]
  %s8 = inlined_call_operand.vmem [shape: f32[2,1,64], index: 8, kind: input, shape index: {}]
  %s9 = inlined_call_operand.vmem [shape: f32[2,1,64], index: 9, kind: input, shape index: {}]
  %s10 = inlined_call_operand.vmem [shape: f32[2,1,64], index: 10, kind: input, shape index: {}]
  %s11 = inlined_call_operand.vmem [shape: f32[2,64,128], index: 11, kind: input, shape index: {}]
  %s12 = inlined_call_operand.vmem [shape: f32[2,1,128], index: 12, kind: input, shape index: {}]
  %s13 = inlined_call_operand.vmem [shape: f32[2,128,64], index: 13, kind: input, shape index: {}]
  %s14 = inlined_call_operand.vmem [shape: f32[2,1,64], index: 14, kind: input, shape index: {}]
  %s15 = inlined_call_operand.vmem [shape: f32[2,1,64], index: 15, kind: input, shape index: {}]
  %s16 = inlined_call_operand.vmem [shape: f32[2,1,64], index: 16, kind: input, shape index: {}]
  %s17 = inlined_call_operand.vmem [shape: f32[64,64], index: 17, kind: input, shape index: {}]
  %s18 = inlined_call_operand.vmem [shape: f32[1,64], index: 18, kind: input, shape index: {}]
  %s19 = inlined_call_operand.vmem [shape: f32[64,128], index: 19, kind: input, shape index: {}]
  %s20 = inlined_call_operand.vmem [shape: f32[1,128], index: 20, kind: input, shape index: {}]
  %s21 = inlined_call_operand.hbm [shape: f32[2,16,64], index: 21, kind: output, shape index: {0}]
  %s22 = inlined_call_operand.hbm [shape: f32[2,1,64], index: 22, kind: output, shape index: {1}]
  %s23 = inlined_call_operand.vmem [shape: f32[2,8,64], index: 23, kind: output, shape index: {2}]
  %s24 = inlined_call_operand.vmem [shape: f32[2,8,128], index: 24, kind: output, shape index: {3}]
  %25 = xla_tuple %s21, %s22, %s23, %s24
  %s26 = sld [smem:[#allocation0]]
  $region141: #{_device_forward.1} parent=0
    _
  %s28 = ssub.s32 1, %s26
  %s29 = scalar_select 0, %s28, %s26
  $region1: #{_device_forward.1} parent=0
    #allocation2 [shape = 'u8[16384]{0}', space=vmem, size = 0x4000, scoped, tag = 'output window, operand 0']
    #allocation3 [shape = 's32[2]{0}', space=sflag, size = 0x8, scoped, tag = 'scoped memory for _device_forward.1']
    #allocation4 [shape = 'u8[1024]{0}', space=vmem, size = 0x400, scoped, tag = 'output window, operand 1']
    #allocation5 [shape = 's32[2]{0}', space=sflag, size = 0x8, scoped, tag = 'scoped memory for _device_forward.1']
    %30 = vsyncpa [#allocation3], 0
    %s31 = scalar_lea.sflag [#allocation3], 1
    %32 = vsyncpa %s31, 0
    %33 = vsyncpa [#allocation5], 0
    %s34 = scalar_lea.sflag [#allocation5], 1
    %35 = vsyncpa %s34, 0
    loop: start=0, step=1, limit=4
    $region2: #{_device_forward.1} parent=1 // loop_pre_header
      _
    $region3: #{_device_forward.1} parent=1 // loop_header
      %s37 = sphi 0, %s41
      %p38 = scmp.ge.s32.totalorder %s37, 4
      %s47 = sphi 0, %s49
      %s50 = sphi 0, %s47
      %s51 = sphi 0, %s50
      %s67 = sphi 0, %s51
      %s73 = sphi 0, %s75
      %s76 = sphi 0, %s73
      %s77 = sphi 0, %s76
      %s93 = sphi 0, %s77
      %s99 = sphi 0, %s101
      %s102 = sphi 0, %s99
      %s103 = sphi 0, %s102
      %s119 = sphi 0, %s103
      %s123 = sphi 0, %s123
      %s125 = sphi 0, %s123
      %s126 = sphi 0, %s125
      %s140 = sphi 0, %s126
      %s144 = sphi 0, %s144
      %s146 = sphi 0, %s144
      %s147 = sphi 0, %s146
      %s161 = sphi 0, %s147
      %s165 = sphi 0, %s165
      %s167 = sphi 0, %s165
      %s168 = sphi 0, %s167
      %s182 = sphi 0, %s168
      %s186 = sphi 0, %s186
      %s188 = sphi 0, %s186
      %s189 = sphi 0, %s188
      %s203 = sphi 0, %s189
      %s207 = sphi 0, %s207
      %s209 = sphi 0, %s207
      %s210 = sphi 0, %s209
      %s224 = sphi 0, %s210
      %s228 = sphi 0, %s228
      %s230 = sphi 0, %s228
      %s231 = sphi 0, %s230
      %s245 = sphi 0, %s231
      %s249 = sphi 0, %s249
      %s251 = sphi 0, %s249
      %s252 = sphi 0, %s251
      %s266 = sphi 0, %s252
      %s270 = sphi 0, %s270
      %s272 = sphi 0, %s270
      %s273 = sphi 0, %s272
      %s287 = sphi 0, %s273
      %s291 = sphi 0, %s291
      %s293 = sphi 0, %s291
      %s294 = sphi 0, %s293
      %s308 = sphi 0, %s294
      %s312 = sphi 0, %s312
      %s314 = sphi 0, %s312
      %s315 = sphi 0, %s314
      %s329 = sphi 0, %s315
      %s333 = sphi 0, %s333
      %s335 = sphi 0, %s333
      %s336 = sphi 0, %s335
      %s350 = sphi 0, %s336
      %s354 = sphi 0, %s354
      %s356 = sphi 0, %s354
      %s357 = sphi 0, %s356
      %s371 = sphi 0, %s357
      %s375 = sphi 0, %s375
      %s377 = sphi 0, %s375
      %s378 = sphi 0, %s377
      %s392 = sphi 0, %s378
      %s396 = sphi 0, %s396
      %s398 = sphi 0, %s396
      %s399 = sphi 0, %s398
      %s413 = sphi 0, %s399
      %s417 = sphi 0, %s417
      %s419 = sphi 0, %s417
      %s420 = sphi 0, %s419
      %s434 = sphi 0, %s420
      %s438 = sphi 0, %s438
      %s440 = sphi 0, %s438
      %s441 = sphi 0, %s440
      %s455 = sphi 0, %s441
      %s459 = sphi 0, %s459
      %s461 = sphi 0, %s459
      %s462 = sphi 0, %s461
      %s476 = sphi 0, %s462
      %s480 = sphi 0, %s480
      %s482 = sphi 0, %s480
      %s483 = sphi 0, %s482
      %s497 = sphi 0, %s483
      %s503 = sphi 0, %s505
      %s506 = sphi 0, %s503
      %s507 = sphi 0, %s506
      %s523 = sphi 0, %s507
      %s529 = sphi 0, %s531
      %s532 = sphi 0, %s529
      %s533 = sphi 0, %s532
      %s549 = sphi 0, %s533
      %s555 = sphi 0, %s557
      %s558 = sphi 0, %s555
      %s559 = sphi 0, %s558
      %s575 = sphi 0, %s559
      %s581 = sphi 0, %s583
      %s584 = sphi 0, %s581
      %s585 = sphi 0, %s584
      %s601 = sphi 0, %s585
    $region4: #{_device_forward.1} parent=1 // loop_header_branch
      %40 = sbr.rel (%p38) target = $region8
    $region5: #{_device_forward.1} parent=1 // loop_body
      %s42 = ssub.s32 %s37, 1
      %s43 = ssub.s32 %s37, 2
      %s44 = sadd.s32 %s37, 1
      %s45 = ssub.s32 %s37, %s44
      %p46 = scmp.eq.s32.totalorder %s45, 0
      %s48 = sadd.s32 %s47, 1
      %s49 = scalar_select %p46, %s47, %s48
      %p52 = pneg %p46
      %p53 = scmp.eq.s32.totalorder %s37, 1
      %p54 = por %p52, %p53
      %p55 = scmp.ne.s32.totalorder %s47, %s50
      %p56 = scmp.eq.s32.totalorder %s37, 0
      %p57 = por %p55, %p56
      %p58 = scmp.ne.s32.totalorder %s47, %s50
      %p59 = scmp.eq.s32.totalorder %s42, 1
      %p60 = por %p58, %p59
      %p61 = scmp.ne.s32.totalorder %s50, %s51
      %p62 = scmp.eq.s32.totalorder %s42, 0
      %p63 = por %p61, %p62
      %p64 = scmp.ne.s32.totalorder %s50, %s51
      %p65 = scmp.eq.s32.totalorder %s43, 1
      %p66 = por %p64, %p65
      %p68 = scmp.ne.s32.totalorder %s51, %s67
      %p69 = scmp.eq.s32.totalorder %s43, 0
      %p70 = por %p68, %p69
      %s71 = ssub.s32 %s37, %s44
      %p72 = scmp.eq.s32.totalorder %s71, 0
      %s74 = sadd.s32 %s73, 1
      %s75 = scalar_select %p72, %s73, %s74
      %p78 = pneg %p72
      %p79 = scmp.eq.s32.totalorder %s37, 1
      %p80 = por %p78, %p79
      %p81 = scmp.ne.s32.totalorder %s73, %s76
      %p82 = scmp.eq.s32.totalorder %s37, 0
      %p83 = por %p81, %p82
      %p84 = scmp.ne.s32.totalorder %s73, %s76
      %p85 = scmp.eq.s32.totalorder %s42, 1
      %p86 = por %p84, %p85
      %p87 = scmp.ne.s32.totalorder %s76, %s77
      %p88 = scmp.eq.s32.totalorder %s42, 0
      %p89 = por %p87, %p88
      %p90 = scmp.ne.s32.totalorder %s76, %s77
      %p91 = scmp.eq.s32.totalorder %s43, 1
      %p92 = por %p90, %p91
      %p94 = scmp.ne.s32.totalorder %s77, %s93
      %p95 = scmp.eq.s32.totalorder %s43, 0
      %p96 = por %p94, %p95
      %s97 = ssub.s32 %s37, %s44
      %p98 = scmp.eq.s32.totalorder %s97, 0
      %s100 = sadd.s32 %s99, 1
      %s101 = scalar_select %p98, %s99, %s100
      %p104 = pneg %p98
      %p105 = scmp.eq.s32.totalorder %s37, 1
      %p106 = por %p104, %p105
      %p107 = scmp.ne.s32.totalorder %s99, %s102
      %p108 = scmp.eq.s32.totalorder %s37, 0
      %p109 = por %p107, %p108
      %p110 = scmp.ne.s32.totalorder %s99, %s102
      %p111 = scmp.eq.s32.totalorder %s42, 1
      %p112 = por %p110, %p111
      %p113 = scmp.ne.s32.totalorder %s102, %s103
      %p114 = scmp.eq.s32.totalorder %s42, 0
      %p115 = por %p113, %p114
      %p116 = scmp.ne.s32.totalorder %s102, %s103
      %p117 = scmp.eq.s32.totalorder %s43, 1
      %p118 = por %p116, %p117
      %p120 = scmp.ne.s32.totalorder %s103, %s119
      %p121 = scmp.eq.s32.totalorder %s43, 0
      %p122 = por %p120, %p121
      %s124 = sadd.s32 %s123, 1
      %p127 = scmp.eq.s32.totalorder %s37, 1
      %p128 = scmp.ne.s32.totalorder %s123, %s125
      %p129 = scmp.eq.s32.totalorder %s37, 0
      %p130 = por %p128, %p129
      %p131 = scmp.ne.s32.totalorder %s123, %s125
      %p132 = scmp.eq.s32.totalorder %s42, 1
      %p133 = por %p131, %p132
      %p134 = scmp.ne.s32.totalorder %s125, %s126
      %p135 = scmp.eq.s32.totalorder %s42, 0
      %p136 = por %p134, %p135
      %p137 = scmp.ne.s32.totalorder %s125, %s126
      %p138 = scmp.eq.s32.totalorder %s43, 1
      %p139 = por %p137, %p138
      %p141 = scmp.ne.s32.totalorder %s126, %s140
      %p142 = scmp.eq.s32.totalorder %s43, 0
      %p143 = por %p141, %p142
      %s145 = sadd.s32 %s144, 1
      %p148 = scmp.eq.s32.totalorder %s37, 1
      %p149 = scmp.ne.s32.totalorder %s144, %s146
      %p150 = scmp.eq.s32.totalorder %s37, 0
      %p151 = por %p149, %p150
      %p152 = scmp.ne.s32.totalorder %s144, %s146
      %p153 = scmp.eq.s32.totalorder %s42, 1
      %p154 = por %p152, %p153
      %p155 = scmp.ne.s32.totalorder %s146, %s147
      %p156 = scmp.eq.s32.totalorder %s42, 0
      %p157 = por %p155, %p156
      %p158 = scmp.ne.s32.totalorder %s146, %s147
      %p159 = scmp.eq.s32.totalorder %s43, 1
      %p160 = por %p158, %p159
      %p162 = scmp.ne.s32.totalorder %s147, %s161
      %p163 = scmp.eq.s32.totalorder %s43, 0
      %p164 = por %p162, %p163
      %s166 = sadd.s32 %s165, 1
      %p169 = scmp.eq.s32.totalorder %s37, 1
      %p170 = scmp.ne.s32.totalorder %s165, %s167
      %p171 = scmp.eq.s32.totalorder %s37, 0
      %p172 = por %p170, %p171
      %p173 = scmp.ne.s32.totalorder %s165, %s167
      %p174 = scmp.eq.s32.totalorder %s42, 1
      %p175 = por %p173, %p174
      %p176 = scmp.ne.s32.totalorder %s167, %s168
      %p177 = scmp.eq.s32.totalorder %s42, 0
      %p178 = por %p176, %p177
      %p179 = scmp.ne.s32.totalorder %s167, %s168
      %p180 = scmp.eq.s32.totalorder %s43, 1
      %p181 = por %p179, %p180
      %p183 = scmp.ne.s32.totalorder %s168, %s182
      %p184 = scmp.eq.s32.totalorder %s43, 0
      %p185 = por %p183, %p184
      %s187 = sadd.s32 %s186, 1
      %p190 = scmp.eq.s32.totalorder %s37, 1
      %p191 = scmp.ne.s32.totalorder %s186, %s188
      %p192 = scmp.eq.s32.totalorder %s37, 0
      %p193 = por %p191, %p192
      %p194 = scmp.ne.s32.totalorder %s186, %s188
      %p195 = scmp.eq.s32.totalorder %s42, 1
      %p196 = por %p194, %p195
      %p197 = scmp.ne.s32.totalorder %s188, %s189
      %p198 = scmp.eq.s32.totalorder %s42, 0
      %p199 = por %p197, %p198
      %p200 = scmp.ne.s32.totalorder %s188, %s189
      %p201 = scmp.eq.s32.totalorder %s43, 1
      %p202 = por %p200, %p201
      %p204 = scmp.ne.s32.totalorder %s189, %s203
      %p205 = scmp.eq.s32.totalorder %s43, 0
      %p206 = por %p204, %p205
      %s208 = sadd.s32 %s207, 1
      %p211 = scmp.eq.s32.totalorder %s37, 1
      %p212 = scmp.ne.s32.totalorder %s207, %s209
      %p213 = scmp.eq.s32.totalorder %s37, 0
      %p214 = por %p212, %p213
      %p215 = scmp.ne.s32.totalorder %s207, %s209
      %p216 = scmp.eq.s32.totalorder %s42, 1
      %p217 = por %p215, %p216
      %p218 = scmp.ne.s32.totalorder %s209, %s210
      %p219 = scmp.eq.s32.totalorder %s42, 0
      %p220 = por %p218, %p219
      %p221 = scmp.ne.s32.totalorder %s209, %s210
      %p222 = scmp.eq.s32.totalorder %s43, 1
      %p223 = por %p221, %p222
      %p225 = scmp.ne.s32.totalorder %s210, %s224
      %p226 = scmp.eq.s32.totalorder %s43, 0
      %p227 = por %p225, %p226
      %s229 = sadd.s32 %s228, 1
      %p232 = scmp.eq.s32.totalorder %s37, 1
      %p233 = scmp.ne.s32.totalorder %s228, %s230
      %p234 = scmp.eq.s32.totalorder %s37, 0
      %p235 = por %p233, %p234
      %p236 = scmp.ne.s32.totalorder %s228, %s230
      %p237 = scmp.eq.s32.totalorder %s42, 1
      %p238 = por %p236, %p237
      %p239 = scmp.ne.s32.totalorder %s230, %s231
      %p240 = scmp.eq.s32.totalorder %s42, 0
      %p241 = por %p239, %p240
      %p242 = scmp.ne.s32.totalorder %s230, %s231
      %p243 = scmp.eq.s32.totalorder %s43, 1
      %p244 = por %p242, %p243
      %p246 = scmp.ne.s32.totalorder %s231, %s245
      %p247 = scmp.eq.s32.totalorder %s43, 0
      %p248 = por %p246, %p247
      %s250 = sadd.s32 %s249, 1
      %p253 = scmp.eq.s32.totalorder %s37, 1
      %p254 = scmp.ne.s32.totalorder %s249, %s251
      %p255 = scmp.eq.s32.totalorder %s37, 0
      %p256 = por %p254, %p255
      %p257 = scmp.ne.s32.totalorder %s249, %s251
      %p258 = scmp.eq.s32.totalorder %s42, 1
      %p259 = por %p257, %p258
      %p260 = scmp.ne.s32.totalorder %s251, %s252
      %p261 = scmp.eq.s32.totalorder %s42, 0
      %p262 = por %p260, %p261
      %p263 = scmp.ne.s32.totalorder %s251, %s252
      %p264 = scmp.eq.s32.totalorder %s43, 1
      %p265 = por %p263, %p264
      %p267 = scmp.ne.s32.totalorder %s252, %s266
      %p268 = scmp.eq.s32.totalorder %s43, 0
      %p269 = por %p267, %p268
      %s271 = sadd.s32 %s270, 1
      %p274 = scmp.eq.s32.totalorder %s37, 1
      %p275 = scmp.ne.s32.totalorder %s270, %s272
      %p276 = scmp.eq.s32.totalorder %s37, 0
      %p277 = por %p275, %p276
      %p278 = scmp.ne.s32.totalorder %s270, %s272
      %p279 = scmp.eq.s32.totalorder %s42, 1
      %p280 = por %p278, %p279
      %p281 = scmp.ne.s32.totalorder %s272, %s273
      %p282 = scmp.eq.s32.totalorder %s42, 0
      %p283 = por %p281, %p282
      %p284 = scmp.ne.s32.totalorder %s272, %s273
      %p285 = scmp.eq.s32.totalorder %s43, 1
      %p286 = por %p284, %p285
      %p288 = scmp.ne.s32.totalorder %s273, %s287
      %p289 = scmp.eq.s32.totalorder %s43, 0
      %p290 = por %p288, %p289
      %s292 = sadd.s32 %s291, 1
      %p295 = scmp.eq.s32.totalorder %s37, 1
      %p296 = scmp.ne.s32.totalorder %s291, %s293
      %p297 = scmp.eq.s32.totalorder %s37, 0
      %p298 = por %p296, %p297
      %p299 = scmp.ne.s32.totalorder %s291, %s293
      %p300 = scmp.eq.s32.totalorder %s42, 1
      %p301 = por %p299, %p300
      %p302 = scmp.ne.s32.totalorder %s293, %s294
      %p303 = scmp.eq.s32.totalorder %s42, 0
      %p304 = por %p302, %p303
      %p305 = scmp.ne.s32.totalorder %s293, %s294
      %p306 = scmp.eq.s32.totalorder %s43, 1
      %p307 = por %p305, %p306
      %p309 = scmp.ne.s32.totalorder %s294, %s308
      %p310 = scmp.eq.s32.totalorder %s43, 0
      %p311 = por %p309, %p310
      %s313 = sadd.s32 %s312, 1
      %p316 = scmp.eq.s32.totalorder %s37, 1
      %p317 = scmp.ne.s32.totalorder %s312, %s314
      %p318 = scmp.eq.s32.totalorder %s37, 0
      %p319 = por %p317, %p318
      %p320 = scmp.ne.s32.totalorder %s312, %s314
      %p321 = scmp.eq.s32.totalorder %s42, 1
      %p322 = por %p320, %p321
      %p323 = scmp.ne.s32.totalorder %s314, %s315
      %p324 = scmp.eq.s32.totalorder %s42, 0
      %p325 = por %p323, %p324
      %p326 = scmp.ne.s32.totalorder %s314, %s315
      %p327 = scmp.eq.s32.totalorder %s43, 1
      %p328 = por %p326, %p327
      %p330 = scmp.ne.s32.totalorder %s315, %s329
      %p331 = scmp.eq.s32.totalorder %s43, 0
      %p332 = por %p330, %p331
      %s334 = sadd.s32 %s333, 1
      %p337 = scmp.eq.s32.totalorder %s37, 1
      %p338 = scmp.ne.s32.totalorder %s333, %s335
      %p339 = scmp.eq.s32.totalorder %s37, 0
      %p340 = por %p338, %p339
      %p341 = scmp.ne.s32.totalorder %s333, %s335
      %p342 = scmp.eq.s32.totalorder %s42, 1
      %p343 = por %p341, %p342
      %p344 = scmp.ne.s32.totalorder %s335, %s336
      %p345 = scmp.eq.s32.totalorder %s42, 0
      %p346 = por %p344, %p345
      %p347 = scmp.ne.s32.totalorder %s335, %s336
      %p348 = scmp.eq.s32.totalorder %s43, 1
      %p349 = por %p347, %p348
      %p351 = scmp.ne.s32.totalorder %s336, %s350
      %p352 = scmp.eq.s32.totalorder %s43, 0
      %p353 = por %p351, %p352
      %s355 = sadd.s32 %s354, 1
      %p358 = scmp.eq.s32.totalorder %s37, 1
      %p359 = scmp.ne.s32.totalorder %s354, %s356
      %p360 = scmp.eq.s32.totalorder %s37, 0
      %p361 = por %p359, %p360
      %p362 = scmp.ne.s32.totalorder %s354, %s356
      %p363 = scmp.eq.s32.totalorder %s42, 1
      %p364 = por %p362, %p363
      %p365 = scmp.ne.s32.totalorder %s356, %s357
      %p366 = scmp.eq.s32.totalorder %s42, 0
      %p367 = por %p365, %p366
      %p368 = scmp.ne.s32.totalorder %s356, %s357
      %p369 = scmp.eq.s32.totalorder %s43, 1
      %p370 = por %p368, %p369
      %p372 = scmp.ne.s32.totalorder %s357, %s371
      %p373 = scmp.eq.s32.totalorder %s43, 0
      %p374 = por %p372, %p373
      %s376 = sadd.s32 %s375, 1
      %p379 = scmp.eq.s32.totalorder %s37, 1
      %p380 = scmp.ne.s32.totalorder %s375, %s377
      %p381 = scmp.eq.s32.totalorder %s37, 0
      %p382 = por %p380, %p381
      %p383 = scmp.ne.s32.totalorder %s375, %s377
      %p384 = scmp.eq.s32.totalorder %s42, 1
      %p385 = por %p383, %p384
      %p386 = scmp.ne.s32.totalorder %s377, %s378
      %p387 = scmp.eq.s32.totalorder %s42, 0
      %p388 = por %p386, %p387
      %p389 = scmp.ne.s32.totalorder %s377, %s378
      %p390 = scmp.eq.s32.totalorder %s43, 1
      %p391 = por %p389, %p390
      %p393 = scmp.ne.s32.totalorder %s378, %s392
      %p394 = scmp.eq.s32.totalorder %s43, 0
      %p395 = por %p393, %p394
      %s397 = sadd.s32 %s396, 1
      %p400 = scmp.eq.s32.totalorder %s37, 1
      %p401 = scmp.ne.s32.totalorder %s396, %s398
      %p402 = scmp.eq.s32.totalorder %s37, 0
      %p403 = por %p401, %p402
      %p404 = scmp.ne.s32.totalorder %s396, %s398
      %p405 = scmp.eq.s32.totalorder %s42, 1
      %p406 = por %p404, %p405
      %p407 = scmp.ne.s32.totalorder %s398, %s399
      %p408 = scmp.eq.s32.totalorder %s42, 0
      %p409 = por %p407, %p408
      %p410 = scmp.ne.s32.totalorder %s398, %s399
      %p411 = scmp.eq.s32.totalorder %s43, 1
      %p412 = por %p410, %p411
      %p414 = scmp.ne.s32.totalorder %s399, %s413
      %p415 = scmp.eq.s32.totalorder %s43, 0
      %p416 = por %p414, %p415
      %s418 = sadd.s32 %s417, 1
      %p421 = scmp.eq.s32.totalorder %s37, 1
      %p422 = scmp.ne.s32.totalorder %s417, %s419
      %p423 = scmp.eq.s32.totalorder %s37, 0
      %p424 = por %p422, %p423
      %p425 = scmp.ne.s32.totalorder %s417, %s419
      %p426 = scmp.eq.s32.totalorder %s42, 1
      %p427 = por %p425, %p426
      %p428 = scmp.ne.s32.totalorder %s419, %s420
      %p429 = scmp.eq.s32.totalorder %s42, 0
      %p430 = por %p428, %p429
      %p431 = scmp.ne.s32.totalorder %s419, %s420
      %p432 = scmp.eq.s32.totalorder %s43, 1
      %p433 = por %p431, %p432
      %p435 = scmp.ne.s32.totalorder %s420, %s434
      %p436 = scmp.eq.s32.totalorder %s43, 0
      %p437 = por %p435, %p436
      %s439 = sadd.s32 %s438, 1
      %p442 = scmp.eq.s32.totalorder %s37, 1
      %p443 = scmp.ne.s32.totalorder %s438, %s440
      %p444 = scmp.eq.s32.totalorder %s37, 0
      %p445 = por %p443, %p444
      %p446 = scmp.ne.s32.totalorder %s438, %s440
      %p447 = scmp.eq.s32.totalorder %s42, 1
      %p448 = por %p446, %p447
      %p449 = scmp.ne.s32.totalorder %s440, %s441
      %p450 = scmp.eq.s32.totalorder %s42, 0
      %p451 = por %p449, %p450
      %p452 = scmp.ne.s32.totalorder %s440, %s441
      %p453 = scmp.eq.s32.totalorder %s43, 1
      %p454 = por %p452, %p453
      %p456 = scmp.ne.s32.totalorder %s441, %s455
      %p457 = scmp.eq.s32.totalorder %s43, 0
      %p458 = por %p456, %p457
      %s460 = sadd.s32 %s459, 1
      %p463 = scmp.eq.s32.totalorder %s37, 1
      %p464 = scmp.ne.s32.totalorder %s459, %s461
      %p465 = scmp.eq.s32.totalorder %s37, 0
      %p466 = por %p464, %p465
      %p467 = scmp.ne.s32.totalorder %s459, %s461
      %p468 = scmp.eq.s32.totalorder %s42, 1
      %p469 = por %p467, %p468
      %p470 = scmp.ne.s32.totalorder %s461, %s462
      %p471 = scmp.eq.s32.totalorder %s42, 0
      %p472 = por %p470, %p471
      %p473 = scmp.ne.s32.totalorder %s461, %s462
      %p474 = scmp.eq.s32.totalorder %s43, 1
      %p475 = por %p473, %p474
      %p477 = scmp.ne.s32.totalorder %s462, %s476
      %p478 = scmp.eq.s32.totalorder %s43, 0
      %p479 = por %p477, %p478
      %s481 = sadd.s32 %s480, 1
      %p484 = scmp.eq.s32.totalorder %s37, 1
      %p485 = scmp.ne.s32.totalorder %s480, %s482
      %p486 = scmp.eq.s32.totalorder %s37, 0
      %p487 = por %p485, %p486
      %p488 = scmp.ne.s32.totalorder %s480, %s482
      %p489 = scmp.eq.s32.totalorder %s42, 1
      %p490 = por %p488, %p489
      %p491 = scmp.ne.s32.totalorder %s482, %s483
      %p492 = scmp.eq.s32.totalorder %s42, 0
      %p493 = por %p491, %p492
      %p494 = scmp.ne.s32.totalorder %s482, %s483
      %p495 = scmp.eq.s32.totalorder %s43, 1
      %p496 = por %p494, %p495
      %p498 = scmp.ne.s32.totalorder %s483, %s497
      %p499 = scmp.eq.s32.totalorder %s43, 0
      %p500 = por %p498, %p499
      %s501 = ssub.s32 %s37, %s44
      %p502 = scmp.eq.s32.totalorder %s501, 0
      %s504 = sadd.s32 %s503, 1
      %s505 = scalar_select %p502, %s503, %s504
      %p508 = pneg %p502
      %p509 = scmp.eq.s32.totalorder %s37, 1
      %p510 = por %p508, %p509
      %p511 = scmp.ne.s32.totalorder %s503, %s506
      %p512 = scmp.eq.s32.totalorder %s37, 0
      %p513 = por %p511, %p512
      %p514 = scmp.ne.s32.totalorder %s503, %s506
      %p515 = scmp.eq.s32.totalorder %s42, 1
      %p516 = por %p514, %p515
      %p517 = scmp.ne.s32.totalorder %s506, %s507
      %p518 = scmp.eq.s32.totalorder %s42, 0
      %p519 = por %p517, %p518
      %p520 = scmp.ne.s32.totalorder %s506, %s507
      %p521 = scmp.eq.s32.totalorder %s43, 1
      %p522 = por %p520, %p521
      %p524 = scmp.ne.s32.totalorder %s507, %s523
      %p525 = scmp.eq.s32.totalorder %s43, 0
      %p526 = por %p524, %p525
      %s527 = ssub.s32 %s37, %s44
      %p528 = scmp.eq.s32.totalorder %s527, 0
      %s530 = sadd.s32 %s529, 1
      %s531 = scalar_select %p528, %s529, %s530
      %p534 = pneg %p528
      %p535 = scmp.eq.s32.totalorder %s37, 1
      %p536 = por %p534, %p535
      %p537 = scmp.ne.s32.totalorder %s529, %s532
      %p538 = scmp.eq.s32.totalorder %s37, 0
      %p539 = por %p537, %p538
      %p540 = scmp.ne.s32.totalorder %s529, %s532
      %p541 = scmp.eq.s32.totalorder %s42, 1
      %p542 = por %p540, %p541
      %p543 = scmp.ne.s32.totalorder %s532, %s533
      %p544 = scmp.eq.s32.totalorder %s42, 0
      %p545 = por %p543, %p544
      %p546 = scmp.ne.s32.totalorder %s532, %s533
      %p547 = scmp.eq.s32.totalorder %s43, 1
      %p548 = por %p546, %p547
      %p550 = scmp.ne.s32.totalorder %s533, %s549
      %p551 = scmp.eq.s32.totalorder %s43, 0
      %p552 = por %p550, %p551
      %s553 = ssub.s32 %s37, %s44
      %p554 = scmp.eq.s32.totalorder %s553, 0
      %s556 = sadd.s32 %s555, 1
      %s557 = scalar_select %p554, %s555, %s556
      %p560 = pneg %p554
      %p561 = scmp.eq.s32.totalorder %s37, 1
      %p562 = por %p560, %p561
      %p563 = scmp.ne.s32.totalorder %s555, %s558
      %p564 = scmp.eq.s32.totalorder %s37, 0
      %p565 = por %p563, %p564
      %p566 = scmp.ne.s32.totalorder %s555, %s558
      %p567 = scmp.eq.s32.totalorder %s42, 1
      %p568 = por %p566, %p567
      %p569 = scmp.ne.s32.totalorder %s558, %s559
      %p570 = scmp.eq.s32.totalorder %s42, 0
      %p571 = por %p569, %p570
      %p572 = scmp.ne.s32.totalorder %s558, %s559
      %p573 = scmp.eq.s32.totalorder %s43, 1
      %p574 = por %p572, %p573
      %p576 = scmp.ne.s32.totalorder %s559, %s575
      %p577 = scmp.eq.s32.totalorder %s43, 0
      %p578 = por %p576, %p577
      %s579 = ssub.s32 %s37, %s44
      %p580 = scmp.eq.s32.totalorder %s579, 0
      %s582 = sadd.s32 %s581, 1
      %s583 = scalar_select %p580, %s581, %s582
      %p586 = pneg %p580
      %p587 = scmp.eq.s32.totalorder %s37, 1
      %p588 = por %p586, %p587
      %p589 = scmp.ne.s32.totalorder %s581, %s584
      %p590 = scmp.eq.s32.totalorder %s37, 0
      %p591 = por %p589, %p590
      %p592 = scmp.ne.s32.totalorder %s581, %s584
      %p593 = scmp.eq.s32.totalorder %s42, 1
      %p594 = por %p592, %p593
      %p595 = scmp.ne.s32.totalorder %s584, %s585
      %p596 = scmp.eq.s32.totalorder %s42, 0
      %p597 = por %p595, %p596
      %p598 = scmp.ne.s32.totalorder %s584, %s585
      %p599 = scmp.eq.s32.totalorder %s43, 1
      %p600 = por %p598, %p599
      %p602 = scmp.ne.s32.totalorder %s585, %s601
      %p603 = scmp.eq.s32.totalorder %s43, 0
      %p604 = por %p602, %p603
      %p605 = scmp.le.s32.totalorder 1, %s37
      %p606 = scmp.lt.s32.totalorder %s37, 3
      %p607 = pnand %p605, %p606
      %p608 = pneg %p607
      // Predicated region
      $region9: #{_device_forward.1} parent=5 // pred_check
        _
      $region10: #{_device_forward.1} parent=5 // pred_check_branch
        %610 = sbr.rel (%p607) target = $region12
      $region11: #{_device_forward.1} parent=5 // pred_region
        %s611 = ssub.s32 %s37, 1
        // Predicated region
        $region13: #{_device_forward.1} parent=11 // pred_check
          %p612 = pneg %p136
        $region14: #{_device_forward.1} parent=11 // pred_check_branch
          %614 = sbr.rel (%p612) target = $region16
        $region15: #{_device_forward.1} parent=11 // pred_region
          _
        $region16: #{_device_forward.1} parent=11 // pred_fallthru
          _
        // Predicated region
        $region17: #{_device_forward.1} parent=11 // pred_check
          %p615 = pneg %p157
        $region18: #{_device_forward.1} parent=11 // pred_check_branch
          %617 = sbr.rel (%p615) target = $region20
        $region19: #{_device_forward.1} parent=11 // pred_region
          _
        $region20: #{_device_forward.1} parent=11 // pred_fallthru
          _
        // Predicated region
        $region21: #{_device_forward.1} parent=11 // pred_check
          %p618 = pneg %p178
        $region22: #{_device_forward.1} parent=11 // pred_check_branch
          %620 = sbr.rel (%p618) target = $region24
        $region23: #{_device_forward.1} parent=11 // pred_region
          _
        $region24: #{_device_forward.1} parent=11 // pred_fallthru
          _
        // Predicated region
        $region25: #{_device_forward.1} parent=11 // pred_check
          %p621 = pneg %p199
        $region26: #{_device_forward.1} parent=11 // pred_check_branch
          %623 = sbr.rel (%p621) target = $region28
        $region27: #{_device_forward.1} parent=11 // pred_region
          _
        $region28: #{_device_forward.1} parent=11 // pred_fallthru
          _
        // Predicated region
        $region29: #{_device_forward.1} parent=11 // pred_check
          %p624 = pneg %p220
        $region30: #{_device_forward.1} parent=11 // pred_check_branch
          %626 = sbr.rel (%p624) target = $region32
        $region31: #{_device_forward.1} parent=11 // pred_region
          _
        $region32: #{_device_forward.1} parent=11 // pred_fallthru
          _
        // Predicated region
        $region33: #{_device_forward.1} parent=11 // pred_check
          %p627 = pneg %p241
        $region34: #{_device_forward.1} parent=11 // pred_check_branch
          %629 = sbr.rel (%p627) target = $region36
        $region35: #{_device_forward.1} parent=11 // pred_region
          _
        $region36: #{_device_forward.1} parent=11 // pred_fallthru
          _
        // Predicated region
        $region37: #{_device_forward.1} parent=11 // pred_check
          %p630 = pneg %p262
        $region38: #{_device_forward.1} parent=11 // pred_check_branch
          %632 = sbr.rel (%p630) target = $region40
        $region39: #{_device_forward.1} parent=11 // pred_region
          _
        $region40: #{_device_forward.1} parent=11 // pred_fallthru
          _
        // Predicated region
        $region41: #{_device_forward.1} parent=11 // pred_check
          %p633 = pneg %p283
        $region42: #{_device_forward.1} parent=11 // pred_check_branch
          %635 = sbr.rel (%p633) target = $region44
        $region43: #{_device_forward.1} parent=11 // pred_region
          _
        $region44: #{_device_forward.1} parent=11 // pred_fallthru
          _
        // Predicated region
        $region45: #{_device_forward.1} parent=11 // pred_check
          %p636 = pneg %p304
        $region46: #{_device_forward.1} parent=11 // pred_check_branch
          %638 = sbr.rel (%p636) target = $region48
        $region47: #{_device_forward.1} parent=11 // pred_region
          _
        $region48: #{_device_forward.1} parent=11 // pred_fallthru
          _
        // Predicated region
        $region49: #{_device_forward.1} parent=11 // pred_check
          %p639 = pneg %p325
        $region50: #{_device_forward.1} parent=11 // pred_check_branch
          %641 = sbr.rel (%p639) target = $region52
        $region51: #{_device_forward.1} parent=11 // pred_region
          _
        $region52: #{_device_forward.1} parent=11 // pred_fallthru
          _
        // Predicated region
        $region53: #{_device_forward.1} parent=11 // pred_check
          %p642 = pneg %p346
        $region54: #{_device_forward.1} parent=11 // pred_check_branch
          %644 = sbr.rel (%p642) target = $region56
        $region55: #{_device_forward.1} parent=11 // pred_region
          _
        $region56: #{_device_forward.1} parent=11 // pred_fallthru
          _
        // Predicated region
        $region57: #{_device_forward.1} parent=11 // pred_check
          %p645 = pneg %p367
        $region58: #{_device_forward.1} parent=11 // pred_check_branch
          %647 = sbr.rel (%p645) target = $region60
        $region59: #{_device_forward.1} parent=11 // pred_region
          _
        $region60: #{_device_forward.1} parent=11 // pred_fallthru
          _
        // Predicated region
        $region61: #{_device_forward.1} parent=11 // pred_check
          %p648 = pneg %p388
        $region62: #{_device_forward.1} parent=11 // pred_check_branch
          %650 = sbr.rel (%p648) target = $region64
        $region63: #{_device_forward.1} parent=11 // pred_region
          _
        $region64: #{_device_forward.1} parent=11 // pred_fallthru
          _
        // Predicated region
        $region65: #{_device_forward.1} parent=11 // pred_check
          %p651 = pneg %p409
        $region66: #{_device_forward.1} parent=11 // pred_check_branch
          %653 = sbr.rel (%p651) target = $region68
        $region67: #{_device_forward.1} parent=11 // pred_region
          _
        $region68: #{_device_forward.1} parent=11 // pred_fallthru
          _
        // Predicated region
        $region69: #{_device_forward.1} parent=11 // pred_check
          %p654 = pneg %p430
        $region70: #{_device_forward.1} parent=11 // pred_check_branch
          %656 = sbr.rel (%p654) target = $region72
        $region71: #{_device_forward.1} parent=11 // pred_region
          _
        $region72: #{_device_forward.1} parent=11 // pred_fallthru
          _
        // Predicated region
        $region73: #{_device_forward.1} parent=11 // pred_check
          %p657 = pneg %p451
        $region74: #{_device_forward.1} parent=11 // pred_check_branch
          %659 = sbr.rel (%p657) target = $region76
        $region75: #{_device_forward.1} parent=11 // pred_region
          _
        $region76: #{_device_forward.1} parent=11 // pred_fallthru
          _
        // Predicated region
        $region77: #{_device_forward.1} parent=11 // pred_check
          %p660 = pneg %p472
        $region78: #{_device_forward.1} parent=11 // pred_check_branch
          %662 = sbr.rel (%p660) target = $region80
        $region79: #{_device_forward.1} parent=11 // pred_region
          _
        $region80: #{_device_forward.1} parent=11 // pred_fallthru
          _
        // Predicated region
        $region81: #{_device_forward.1} parent=11 // pred_check
          %p663 = pneg %p493
        $region82: #{_device_forward.1} parent=11 // pred_check_branch
          %665 = sbr.rel (%p663) target = $region84
        $region83: #{_device_forward.1} parent=11 // pred_region
          _
        $region84: #{_device_forward.1} parent=11 // pred_fallthru
          _
      $region12: #{_device_forward.1} parent=5 // pred_fallthru
        _
      %p666 = scmp.lt.s32.totalorder %s37, 2
      // Predicated region
      $region85: #{_device_forward.1} parent=5 // pred_check
        %p667 = pneg %p666
      $region86: #{_device_forward.1} parent=5 // pred_check_branch
        %669 = sbr.rel (%p667) target = $region88
      $region87: #{_device_forward.1} parent=5 // pred_region
        // Predicated region
        $region89: #{_device_forward.1} parent=87 // pred_check
          %p670 = pneg %p57
        $region90: #{_device_forward.1} parent=87 // pred_check_branch
          %672 = sbr.rel (%p670) target = $region92
        $region91: #{_device_forward.1} parent=87 // pred_region
          %p673 = scmp.lt.s32.totalorder %s37, 1
          %s674 = scalar_select %p673, %s37, 1
          %s675 = smul.addr %s674, 2
          %s676 = smul.addr %s675, 8
          %s677 = scalar_lea.vmem %s0, %s676
        $region92: #{_device_forward.1} parent=87 // pred_fallthru
          _
        // Predicated region
        $region93: #{_device_forward.1} parent=87 // pred_check
          %p678 = pneg %p83
        $region94: #{_device_forward.1} parent=87 // pred_check_branch
          %680 = sbr.rel (%p678) target = $region96
        $region95: #{_device_forward.1} parent=87 // pred_region
          %p681 = scmp.lt.s32.totalorder %s37, 1
          %s682 = scalar_select %p681, %s37, 1
          %s683 = scalar_lea.vmem %s1, %s682
        $region96: #{_device_forward.1} parent=87 // pred_fallthru
          _
        // Predicated region
        $region97: #{_device_forward.1} parent=87 // pred_check
          %p684 = pneg %p109
        $region98: #{_device_forward.1} parent=87 // pred_check_branch
          %686 = sbr.rel (%p684) target = $region100
        $region99: #{_device_forward.1} parent=87 // pred_region
          %p687 = scmp.lt.s32.totalorder %s37, 1
          %s688 = scalar_select %p687, %s37, 1
          %s689 = smul.addr %s688, 8
          %s690 = scalar_lea.vmem %s2, %s689
        $region100: #{_device_forward.1} parent=87 // pred_fallthru
          _
      $region88: #{_device_forward.1} parent=5 // pred_fallthru
        _
      %p691 = scmp.le.s32.totalorder 1, %s37
      %p692 = scmp.lt.s32.totalorder %s37, 3
      %p693 = pnand %p691, %p692
      %p694 = pneg %p693
      // Predicated region
      $region101: #{_device_forward.1} parent=5 // pred_check
        _
      $region102: #{_device_forward.1} parent=5 // pred_check_branch
        %696 = sbr.rel (%p693) target = $region104
      $region103: #{_device_forward.1} parent=5 // pred_region
        %s697 = ssub.s32 %s37, 1
        %p698 = scmp.lt.s32.totalorder %s42, 1
        %s699 = scalar_select %p698, %s42, 1
        %s700 = smul.addr %s699, 2
        %s701 = smul.addr %s700, 8
        %s702 = scalar_lea.vmem %s0, %s701
        %p703 = pneg %p63
        %p704 = pneg %p60
        %p705 = scmp.lt.s32.totalorder %s42, 1
        %s706 = scalar_select %p705, %s42, 1
        %s707 = scalar_lea.vmem %s1, %s706
        %p708 = pneg %p89
        %p709 = pneg %p86
        %p710 = scmp.lt.s32.totalorder %s42, 1
        %s711 = scalar_select %p710, %s42, 1
        %s712 = smul.addr %s711, 8
        %s713 = scalar_lea.vmem %s2, %s712
        %p714 = pneg %p115
        %p715 = pneg %p112
        %p716 = pneg %p136
        %p717 = pneg %p133
        %p718 = pneg %p157
        %p719 = pneg %p154
        %p720 = pneg %p178
        %p721 = pneg %p175
        %p722 = pneg %p199
        %p723 = pneg %p196
        %p724 = pneg %p220
        %p725 = pneg %p217
        %p726 = pneg %p241
        %p727 = pneg %p238
        %p728 = pneg %p262
        %p729 = pneg %p259
        %p730 = pneg %p283
        %p731 = pneg %p280
        %p732 = pneg %p304
        %p733 = pneg %p301
        %p734 = pneg %p325
        %p735 = pneg %p322
        %p736 = pneg %p346
        %p737 = pneg %p343
        %p738 = pneg %p367
        %p739 = pneg %p364
        %p740 = pneg %p388
        %p741 = pneg %p385
        %p742 = pneg %p409
        %p743 = pneg %p406
        %p744 = pneg %p430
        %p745 = pneg %p427
        %p746 = pneg %p451
        %p747 = pneg %p448
        %p748 = pneg %p472
        %p749 = pneg %p469
        %p750 = pneg %p493
        %p751 = pneg %p490
        %p752 = pneg %p519
        %p753 = pneg %p516
        %s754 = sand.u32 %s506, 1
        %s755 = scalar_lea.sflag [#allocation3], %s754
        %s756 = sand.u32 %s506, 1
        %s757 = smul.addr %s756, 16
        %s758 = scalar_lea.vmem [#allocation2], %s757
        %p759 = pneg %p545
        %p760 = pneg %p542
        %s761 = sand.u32 %s532, 1
        %s762 = scalar_lea.sflag [#allocation5], %s761
        %s763 = sand.u32 %s532, 1
        %s764 = scalar_lea.vmem [#allocation4], %s763
        %p765 = pneg %p571
        %p766 = pneg %p568
        %p767 = scmp.lt.s32.totalorder %s42, 1
        %s768 = scalar_select %p767, %s42, 1
        %s769 = smul.addr %s768, 8
        %s770 = scalar_lea.vmem %s23, %s769
        %p771 = pneg %p597
        %p772 = pneg %p594
        %p773 = scmp.lt.s32.totalorder %s42, 1
        %s774 = scalar_select %p773, %s42, 1
        %s775 = smul.addr %s774, 8
        %s776 = scalar_lea.vmem %s24, %s775
        %p777 = scmp.lt.s32.totalorder %s42, 1
        %s778 = scalar_select %p777, %s42, 1
        %s779 = smul.addr %s778, 2
        %s780 = smul.addr %s779, 8
        %s781 = scalar_lea.vmem %s0, %s780
        %p782 = scmp.lt.s32.totalorder %s42, 1
        %s783 = scalar_select %p782, %s42, 1
        %s784 = scalar_lea.vmem %s1, %s783
        %p785 = scmp.lt.s32.totalorder %s42, 1
        %s786 = scalar_select %p785, %s42, 1
        %s787 = smul.addr %s786, 8
        %s788 = scalar_lea.vmem %s2, %s787
        %p789 = scmp.lt.s32.totalorder %s42, 1
        %s790 = scalar_select %p789, %s42, 1
        %s791 = smul.addr %s790, 8
        %s792 = scalar_lea.vmem %s23, %s791
        %p793 = scmp.lt.s32.totalorder %s42, 1
        %s794 = scalar_select %p793, %s42, 1
        %s795 = smul.addr %s794, 8
        %s796 = scalar_lea.vmem %s24, %s795
        %v797 = vld [vmem:[%s781] sm:$0xff]
        %v798 = vld [vmem:[%s781 + $0x8] sm:$0xff]
        %v799 = vld [vmem:[%s3] sm:$0x1]
        %v800 = vld [vmem:[%s4] sm:$0x1]
        %vm801 = vcmask 523264
        %v802 = vsel %vm801, %v797, 0.0
        %803 = vadd.xlane.f32.xlu0 %v802
        %v804 = vpop.xlane.xlu0 %803
        %v805 = vsel %vm801, %v798, 0.0
        %806 = vadd.xlane.f32.xlu0 %v805
        %v807 = vpop.xlane.xlu0 %806
        %v808 = vrcp.pop 64.0
        %v809 = vmul.f32 %v804, %v808
        %v810 = vmul.f32 %v807, %v808
        %v811 = vsub.f32 %v797, %v809
        %v812 = vsub.f32 %v798, %v810
        %v813 = vmul.f32 %v811, %v811
        %v814 = vmul.f32 %v812, %v812
        %v815 = vsel %vm801, %v813, 0.0
        %816 = vadd.xlane.f32.xlu0 %v815
        %v817 = vpop.xlane.xlu0 %816
        %v818 = vsel %vm801, %v814, 0.0
        %819 = vadd.xlane.f32.xlu0 %v818
        %v820 = vpop.xlane.xlu0 %819
        %v821 = vmul.f32 %v817, %v808
        %v822 = vmul.f32 %v820, %v808
        %v823 = vadd.f32 %v821, 1e-12
        %v824 = vadd.f32 %v822, 1e-12
        %v825 = vrsqrt.pop %v823
        %v826 = vrsqrt.pop %v824
        %v827 = vmul.f32 %v811, %v825
        %v828 = vmul.f32 %v812, %v826
        %v830 = vlaneseq
        %v831 = vshrl.u32 %v830, 7
        %v832 = vsub.s32 0, %v831
        %v833 = vrot.slane %v799, %v832
        %v835 = vmul.f32 %v827, %v833
        %v836 = vmul.f32 %v828, %v833
        %v838 = vlaneseq
        %v839 = vshrl.u32 %v838, 7
        %v840 = vsub.s32 0, %v839
        %v841 = vrot.slane %v800, %v840
        %v843 = vadd.f32 %v835, %v841
        %v844 = vadd.f32 %v836, %v841
        %v845 = vld [vmem:[%s784] sm:$0x1]
        %v846 = vld [vmem:[%s5] sm:$0xff]
        %v847 = vld [vmem:[%s5 + $0x8] sm:$0xff]
        %v848 = vld [vmem:[%s5 + $0x10] sm:$0xff]
        %v849 = vld [vmem:[%s5 + $0x18] sm:$0xff]
        %v850 = vld [vmem:[%s5 + $0x20] sm:$0xff]
        %v851 = vld [vmem:[%s5 + $0x28] sm:$0xff]
        %v852 = vld [vmem:[%s5 + $0x30] sm:$0xff]
        %v853 = vld [vmem:[%s5 + $0x38] sm:$0xff]
        %v854 = vld [vmem:[%s5 + $0x40] sm:$0xff]
        %v855 = vld [vmem:[%s5 + $0x48] sm:$0xff]
        %v856 = vld [vmem:[%s5 + $0x50] sm:$0xff]
        %v857 = vld [vmem:[%s5 + $0x58] sm:$0xff]
        %v858 = vld [vmem:[%s5 + $0x60] sm:$0xff]
        %v859 = vld [vmem:[%s5 + $0x68] sm:$0xff]
        %v860 = vld [vmem:[%s5 + $0x70] sm:$0xff]
        %v861 = vld [vmem:[%s5 + $0x78] sm:$0xff]
        %v862 = vld [vmem:[%s6] sm:$0x3]
        %v864 = vlaneseq
        %v865 = vshrl.u32 %v864, 7
        %v866 = vsub.s32 0, %v865
        %v867 = vrot.slane %v862, %v866
        %v868 = vlaneseq
        %v869 = vshrl.u32 %v868, 7
        %v870 = vsub.s32 1, %v869
        %v871 = vrot.slane %v862, %v870
        %v875 = vsel %vm801, %v843, 0
        %v878 = vsel %vm801, %v844, 0
        %880 = vmatprep.subr.mxu0 0.0
        %881 = vmatpush1.msra.mxu0 0.0
        %882 = vmatprep.subr.mxu0 0.0
        %883 = vmatpush1.msra.mxu0 0.0
        %884 = vmatprep.subr.mxu0 0.0
        %885 = vmatpush1.msra.mxu0 0.0
        %886 = vmatprep.subr.mxu0 0.0
        %887 = vmatpush1.msra.mxu0 0.0
        %888 = vmatprep.subr.mxu0 0.0
        %889 = vmatpush1.msra.mxu0 0.0
        %890 = vmatprep.subr.mxu0 0.0
        %891 = vmatpush1.msra.mxu0 0.0
        %892 = vmatprep.subr.mxu0 0.0
        %893 = vmatpush1.msra.mxu0 0.0
        %894 = vmatprep.subr.mxu0 0.0
        %895 = vmatpush1.msra.mxu0 0.0
        %896 = vmatprep.subr.mxu0 %v861
        %897 = vmatpush1.msra.mxu0 %v860
        %898 = vmatprep.subr.mxu0 %v859
        %899 = vmatpush1.msra.mxu0 %v858
        %900 = vmatprep.subr.mxu0 %v857
        %901 = vmatpush1.msra.mxu0 %v856
        %902 = vmatprep.subr.mxu0 %v855
        %903 = vmatpush1.msra.mxu0 %v854
        %904 = vmatprep.subr.mxu0 %v853
        %905 = vmatpush1.msra.mxu0 %v852
        %906 = vmatprep.subr.mxu0 %v851
        %907 = vmatpush1.msra.mxu0 %v850
        %908 = vmatprep.subr.mxu0 %v849
        %909 = vmatpush1.msra.mxu0 %v848
        %910 = vmatprep.subr.mxu0 %v847
        %911 = vmatpush1.msra.mxu0 %v846
        %912 = vmatprep.subr.mxu0 0.0
        %913 = vmatpush2.msra.mxu0 0.0
        %914 = vmatprep.subr.mxu0 0.0
        %915 = vmatpush2.msra.mxu0 0.0
        %916 = vmatprep.subr.mxu0 0.0
        %917 = vmatpush2.msra.mxu0 0.0
        %918 = vmatprep.subr.mxu0 0.0
        %919 = vmatpush2.msra.mxu0 0.0
        %920 = vmatprep.subr.mxu0 0.0
        %921 = vmatpush2.msra.mxu0 0.0
        %922 = vmatprep.subr.mxu0 0.0
        %923 = vmatpush2.msra.mxu0 0.0
        %924 = vmatprep.subr.mxu0 0.0
        %925 = vmatpush2.msra.mxu0 0.0
        %926 = vmatprep.subr.mxu0 0.0
        %927 = vmatpush2.msra.mxu0 0.0
        %928 = vmatprep.subr.mxu0 0.0
        %929 = vmatpush2.msra.mxu0 0.0
        %930 = vmatprep.subr.mxu0 0.0
        %931 = vmatpush2.msra.mxu0 0.0
        %932 = vmatprep.subr.mxu0 0.0
        %933 = vmatpush2.msra.mxu0 0.0
        %934 = vmatprep.subr.mxu0 0.0
        %935 = vmatpush2.msra.mxu0 0.0
        %936 = vmatprep.subr.mxu0 0.0
        %937 = vmatpush2.msra.mxu0 0.0
        %938 = vmatprep.subr.mxu0 0.0
        %939 = vmatpush2.msra.mxu0 0.0
        %940 = vmatprep.subr.mxu0 0.0
        %941 = vmatpush2.msra.mxu0 0.0
        %942 = vmatprep.subr.mxu0 0.0
        %943 = vmatpush2.msra.mxu0 0.0
        %944 = vmatprep.mubr.f32.mxu0 0.0
        %945 = vmatmul.mubr.f32.gmra.mxu0 %v875
        %v946 = vpop.f32.mrf.mxu0
        %v947 = vadd.f32 %v867, %v946
        %v948 = vpop.f32.mrf.mxu0
        %v949 = vadd.f32 %v871, %v948
        %950 = vmatprep.mubr.f32.mxu0 0.0
        %951 = vmatmul.mubr.f32.gmra.mxu0 %v878
        %v952 = vpop.f32.mrf.mxu0
        %v953 = vadd.f32 %v867, %v952
        %v954 = vpop.f32.mrf.mxu0
        %v955 = vadd.f32 %v871, %v954
        %956 = vdwg.mxu0
        %959 = vrot.lane.b32.xlu0 %v947, 64
        %v960 = vpop.permute.xlu0 %959
        %961 = vrot.lane.b32.xlu0 %v953, 64
        %v962 = vpop.permute.xlu0 %961
        %vm963 = vcmask 130048
        %v964 = vsel %vm963, %v947, 0
        %v966 = vsel %vm963, %v953, 0
        %v968 = vsel %vm963, %v960, 0
        %v970 = vsel %vm963, %v962, 0
        %972 = vmatprep.subr.mxu0 0.0
        %973 = vmatpush1.xpose.msra.mxu0 0.0
        %974 = vmatprep.subr.mxu0 0.0
        %975 = vmatpush1.xpose.msra.mxu0 0.0
        %976 = vmatprep.subr.mxu0 0.0
        %977 = vmatpush1.xpose.msra.mxu0 0.0
        %978 = vmatprep.subr.mxu0 0.0
        %979 = vmatpush1.xpose.msra.mxu0 0.0
        %980 = vmatprep.subr.mxu0 0.0
        %981 = vmatpush1.xpose.msra.mxu0 0.0
        %982 = vmatprep.subr.mxu0 0.0
        %983 = vmatpush1.xpose.msra.mxu0 0.0
        %984 = vmatprep.subr.mxu0 0.0
        %985 = vmatpush1.xpose.msra.mxu0 0.0
        %986 = vmatprep.subr.mxu0 0.0
        %987 = vmatpush1.xpose.msra.mxu0 0.0
        %988 = vmatprep.subr.mxu0 0.0
        %989 = vmatpush1.xpose.msra.mxu0 0.0
        %990 = vmatprep.subr.mxu0 0.0
        %991 = vmatpush1.xpose.msra.mxu0 0.0
        %992 = vmatprep.subr.mxu0 0.0
        %993 = vmatpush1.xpose.msra.mxu0 0.0
        %994 = vmatprep.subr.mxu0 0.0
        %995 = vmatpush1.xpose.msra.mxu0 0.0
        %996 = vmatprep.subr.mxu0 0.0
        %997 = vmatpush1.xpose.msra.mxu0 0.0
        %998 = vmatprep.subr.mxu0 0.0
        %999 = vmatpush1.xpose.msra.mxu0 0.0
        %1000 = vmatprep.subr.mxu0 0.0
        %1001 = vmatpush1.xpose.msra.mxu0 %v970
        %1002 = vmatprep.subr.mxu0 0.0
        %1003 = vmatpush1.xpose.msra.mxu0 %v968
        %1004 = vmatprep.subr.mxu0 0.0
        %1005 = vmatpush2.xpose.msra.mxu0 0.0
        %1006 = vmatprep.subr.mxu0 0.0
        %1007 = vmatpush2.xpose.msra.mxu0 0.0
        %1008 = vmatprep.subr.mxu0 0.0
        %1009 = vmatpush2.xpose.msra.mxu0 0.0
        %1010 = vmatprep.subr.mxu0 0.0
        %1011 = vmatpush2.xpose.msra.mxu0 0.0
        %1012 = vmatprep.subr.mxu0 0.0
        %1013 = vmatpush2.xpose.msra.mxu0 0.0
        %1014 = vmatprep.subr.mxu0 0.0
        %1015 = vmatpush2.xpose.msra.mxu0 0.0
        %1016 = vmatprep.subr.mxu0 0.0
        %1017 = vmatpush2.xpose.msra.mxu0 0.0
        %1018 = vmatprep.subr.mxu0 0.0
        %1019 = vmatpush2.xpose.msra.mxu0 0.0
        %1020 = vmatprep.subr.mxu0 0.0
        %1021 = vmatpush2.xpose.msra.mxu0 0.0
        %1022 = vmatprep.subr.mxu0 0.0
        %1023 = vmatpush2.xpose.msra.mxu0 0.0
        %1024 = vmatprep.subr.mxu0 0.0
        %1025 = vmatpush2.xpose.msra.mxu0 0.0
        %1026 = vmatprep.subr.mxu0 0.0
        %1027 = vmatpush2.xpose.msra.mxu0 0.0
        %1028 = vmatprep.subr.mxu0 0.0
        %1029 = vmatpush2.xpose.msra.mxu0 0.0
        %1030 = vmatprep.subr.mxu0 0.0
        %1031 = vmatpush2.xpose.msra.mxu0 0.0
        %1032 = vmatprep.subr.mxu0 0.0
        %1033 = vmatpush2.xpose.msra.mxu0 0.0
        %1034 = vmatprep.subr.mxu0 0.0
        %1035 = vmatpush2.xpose.msra.mxu0 0.0
        %1036 = vmatprep.mubr.f32.mxu0 0.0
        %1037 = vmatmul.mubr.f32.gmra.mxu0 %v964
        %v1038 = vpop.f32.mrf.mxu0
        %v1039 = vadd.f32 0.0, %v1038
        %v1040 = vpop.f32.mrf.mxu0
        %1041 = vmatprep.mubr.f32.mxu0 0.0
        %1042 = vmatmul.mubr.f32.gmra.mxu0 %v966
        %v1043 = vpop.f32.mrf.mxu0
        %v1044 = vadd.f32 0.0, %v1043
        %v1045 = vpop.f32.mrf.mxu0
        %1046 = vdwg.mxu0
        %v1047 = vmul.f32 %v1039, 0.25
        %v1048 = vmul.f32 %v1044, 0.25
        %v1050 = vlaneseq
        %v1051 = vshrl.u32 %v1050, 7
        %v1052 = vsub.s32 0, %v1051
        %v1053 = vrot.slane %v845, %v1052
        %v1055 = vadd.f32 %v1047, %v1053
        %v1056 = vadd.f32 %v1048, %v1053
        %v1057 = vsel %vm963, %v1055, -inf
        %1058 = vmax.xlane.f32.xlu0 %v1057
        %v1059 = vpop.xlane.xlu0 %1058
        %v1060 = vsel %vm963, %v1056, -inf
        %1061 = vmax.xlane.f32.xlu0 %v1060
        %v1062 = vpop.xlane.xlu0 %1061
        %v1063 = vsub.f32 %v1055, %v1059
        %v1064 = vsub.f32 %v1056, %v1062
        %v1065 = vmul.f32 %v1063, 1.442695
        %v1066 = vpow.pop %v1065
        %v1067 = vmul.f32 %v1064, 1.442695
        %v1068 = vpow.pop %v1067
        %v1069 = vsel %vm963, %v1066, 0.0
        %1070 = vadd.xlane.f32.xlu0 %v1069
        %v1071 = vpop.xlane.xlu0 %1070
        %v1072 = vsel %vm963, %v1068, 0.0
        %1073 = vadd.xlane.f32.xlu0 %v1072
        %v1074 = vpop.xlane.xlu0 %1073
        %v1075 = vrcp.pop %v1071
        %v1076 = vrcp.pop %v1074
        %v1077 = vmul.f32 %v1066, %v1075
        %v1078 = vmul.f32 %v1068, %v1076
        %v1080 = vsel %vm963, %v1077, 0
        %v1083 = vsel %vm963, %v1078, 0
        %1085 = vmatprep.subr.mxu0 0.0
        %1086 = vmatpush1.msra.mxu0 0.0
        %1087 = vmatprep.subr.mxu0 0.0
        %1088 = vmatpush1.msra.mxu0 0.0
        %1089 = vmatprep.subr.mxu0 0.0
        %1090 = vmatpush1.msra.mxu0 0.0
        %1091 = vmatprep.subr.mxu0 0.0
        %1092 = vmatpush1.msra.mxu0 0.0
        %1093 = vmatprep.subr.mxu0 0.0
        %1094 = vmatpush1.msra.mxu0 0.0
        %1095 = vmatprep.subr.mxu0 0.0
        %1096 = vmatpush1.msra.mxu0 0.0
        %1097 = vmatprep.subr.mxu0 0.0
        %1098 = vmatpush1.msra.mxu0 0.0
        %1099 = vmatprep.subr.mxu0 0.0
        %1100 = vmatpush1.msra.mxu0 0.0
        %1101 = vmatprep.subr.mxu0 0.0
        %1102 = vmatpush1.msra.mxu0 0.0
        %1103 = vmatprep.subr.mxu0 0.0
        %1104 = vmatpush1.msra.mxu0 0.0
        %1105 = vmatprep.subr.mxu0 0.0
        %1106 = vmatpush1.msra.mxu0 0.0
        %1107 = vmatprep.subr.mxu0 0.0
        %1108 = vmatpush1.msra.mxu0 0.0
        %1109 = vmatprep.subr.mxu0 0.0
        %1110 = vmatpush1.msra.mxu0 0.0
        %1111 = vmatprep.subr.mxu0 0.0
        %1112 = vmatpush1.msra.mxu0 0.0
        %1113 = vmatprep.subr.mxu0 0.0
        %1114 = vmatpush1.msra.mxu0 %v955
        %1115 = vmatprep.subr.mxu0 0.0
        %1116 = vmatpush1.msra.mxu0 %v949
        %1117 = vmatprep.subr.mxu0 0.0
        %1118 = vmatpush2.msra.mxu0 0.0
        %1119 = vmatprep.subr.mxu0 0.0
        %1120 = vmatpush2.msra.mxu0 0.0
        %1121 = vmatprep.subr.mxu0 0.0
        %1122 = vmatpush2.msra.mxu0 0.0
        %1123 = vmatprep.subr.mxu0 0.0
        %1124 = vmatpush2.msra.mxu0 0.0
        %1125 = vmatprep.subr.mxu0 0.0
        %1126 = vmatpush2.msra.mxu0 0.0
        %1127 = vmatprep.subr.mxu0 0.0
        %1128 = vmatpush2.msra.mxu0 0.0
        %1129 = vmatprep.subr.mxu0 0.0
        %1130 = vmatpush2.msra.mxu0 0.0
        %1131 = vmatprep.subr.mxu0 0.0
        %1132 = vmatpush2.msra.mxu0 0.0
        %1133 = vmatprep.subr.mxu0 0.0
        %1134 = vmatpush2.msra.mxu0 0.0
        %1135 = vmatprep.subr.mxu0 0.0
        %1136 = vmatpush2.msra.mxu0 0.0
        %1137 = vmatprep.subr.mxu0 0.0
        %1138 = vmatpush2.msra.mxu0 0.0
        %1139 = vmatprep.subr.mxu0 0.0
        %1140 = vmatpush2.msra.mxu0 0.0
        %1141 = vmatprep.subr.mxu0 0.0
        %1142 = vmatpush2.msra.mxu0 0.0
        %1143 = vmatprep.subr.mxu0 0.0
        %1144 = vmatpush2.msra.mxu0 0.0
        %1145 = vmatprep.subr.mxu0 0.0
        %1146 = vmatpush2.msra.mxu0 0.0
        %1147 = vmatprep.subr.mxu0 0.0
        %1148 = vmatpush2.msra.mxu0 0.0
        %1149 = vmatprep.mubr.f32.mxu0 0.0
        %1150 = vmatmul.mubr.f32.gmra.mxu0 %v1080
        %v1151 = vpop.f32.mrf.mxu0
        %v1152 = vadd.f32 0.0, %v1151
        %v1153 = vpop.f32.mrf.mxu0
        %1154 = vmatprep.mubr.f32.mxu0 0.0
        %1155 = vmatmul.mubr.f32.gmra.mxu0 %v1083
        %v1156 = vpop.f32.mrf.mxu0
        %v1157 = vadd.f32 0.0, %v1156
        %v1158 = vpop.f32.mrf.mxu0
        %1159 = vdwg.mxu0
        %1160 = vrot.lane.b32.xlu0 %v947, 112
        %v1161 = vpop.permute.xlu0 %1160
        %1162 = vrot.lane.b32.xlu0 %v953, 112
        %v1163 = vpop.permute.xlu0 %1162
        %1164 = vrot.lane.b32.xlu0 %v947, 48
        %v1165 = vpop.permute.xlu0 %1164
        %1166 = vrot.lane.b32.xlu0 %v953, 48
        %v1167 = vpop.permute.xlu0 %1166
        %v1168 = vsel %vm963, %v1161, 0
        %v1170 = vsel %vm963, %v1163, 0
        %v1172 = vsel %vm963, %v1165, 0
        %v1174 = vsel %vm963, %v1167, 0
        %1176 = vmatprep.subr.mxu0 0.0
        %1177 = vmatpush1.xpose.msra.mxu0 0.0
        %1178 = vmatprep.subr.mxu0 0.0
        %1179 = vmatpush1.xpose.msra.mxu0 0.0
        %1180 = vmatprep.subr.mxu0 0.0
        %1181 = vmatpush1.xpose.msra.mxu0 0.0
        %1182 = vmatprep.subr.mxu0 0.0
        %1183 = vmatpush1.xpose.msra.mxu0 0.0
        %1184 = vmatprep.subr.mxu0 0.0
        %1185 = vmatpush1.xpose.msra.mxu0 0.0
        %1186 = vmatprep.subr.mxu0 0.0
        %1187 = vmatpush1.xpose.msra.mxu0 0.0
        %1188 = vmatprep.subr.mxu0 0.0
        %1189 = vmatpush1.xpose.msra.mxu0 0.0
        %1190 = vmatprep.subr.mxu0 0.0
        %1191 = vmatpush1.xpose.msra.mxu0 0.0
        %1192 = vmatprep.subr.mxu0 0.0
        %1193 = vmatpush1.xpose.msra.mxu0 0.0
        %1194 = vmatprep.subr.mxu0 0.0
        %1195 = vmatpush1.xpose.msra.mxu0 0.0
        %1196 = vmatprep.subr.mxu0 0.0
        %1197 = vmatpush1.xpose.msra.mxu0 0.0
        %1198 = vmatprep.subr.mxu0 0.0
        %1199 = vmatpush1.xpose.msra.mxu0 0.0
        %1200 = vmatprep.subr.mxu0 0.0
        %1201 = vmatpush1.xpose.msra.mxu0 0.0
        %1202 = vmatprep.subr.mxu0 0.0
        %1203 = vmatpush1.xpose.msra.mxu0 0.0
        %1204 = vmatprep.subr.mxu0 0.0
        %1205 = vmatpush1.xpose.msra.mxu0 %v1174
        %1206 = vmatprep.subr.mxu0 0.0
        %1207 = vmatpush1.xpose.msra.mxu0 %v1172
        %1208 = vmatprep.subr.mxu0 0.0
        %1209 = vmatpush2.xpose.msra.mxu0 0.0
        %1210 = vmatprep.subr.mxu0 0.0
        %1211 = vmatpush2.xpose.msra.mxu0 0.0
        %1212 = vmatprep.subr.mxu0 0.0
        %1213 = vmatpush2.xpose.msra.mxu0 0.0
        %1214 = vmatprep.subr.mxu0 0.0
        %1215 = vmatpush2.xpose.msra.mxu0 0.0
        %1216 = vmatprep.subr.mxu0 0.0
        %1217 = vmatpush2.xpose.msra.mxu0 0.0
        %1218 = vmatprep.subr.mxu0 0.0
        %1219 = vmatpush2.xpose.msra.mxu0 0.0
        %1220 = vmatprep.subr.mxu0 0.0
        %1221 = vmatpush2.xpose.msra.mxu0 0.0
        %1222 = vmatprep.subr.mxu0 0.0
        %1223 = vmatpush2.xpose.msra.mxu0 0.0
        %1224 = vmatprep.subr.mxu0 0.0
        %1225 = vmatpush2.xpose.msra.mxu0 0.0
        %1226 = vmatprep.subr.mxu0 0.0
        %1227 = vmatpush2.xpose.msra.mxu0 0.0
        %1228 = vmatprep.subr.mxu0 0.0
        %1229 = vmatpush2.xpose.msra.mxu0 0.0
        %1230 = vmatprep.subr.mxu0 0.0
        %1231 = vmatpush2.xpose.msra.mxu0 0.0
        %1232 = vmatprep.subr.mxu0 0.0
        %1233 = vmatpush2.xpose.msra.mxu0 0.0
        %1234 = vmatprep.subr.mxu0 0.0
        %1235 = vmatpush2.xpose.msra.mxu0 0.0
        %1236 = vmatprep.subr.mxu0 0.0
        %1237 = vmatpush2.xpose.msra.mxu0 0.0
        %1238 = vmatprep.subr.mxu0 0.0
        %1239 = vmatpush2.xpose.msra.mxu0 0.0
        %1240 = vmatprep.mubr.f32.mxu0 0.0
        %1241 = vmatmul.mubr.f32.gmra.mxu0 %v1168
        %v1242 = vpop.f32.mrf.mxu0
        %v1243 = vadd.f32 0.0, %v1242
        %v1244 = vpop.f32.mrf.mxu0
        %1245 = vmatprep.mubr.f32.mxu0 0.0
        %1246 = vmatmul.mubr.f32.gmra.mxu0 %v1170
        %v1247 = vpop.f32.mrf.mxu0
        %v1248 = vadd.f32 0.0, %v1247
        %v1249 = vpop.f32.mrf.mxu0
        %1250 = vdwg.mxu0
        %v1251 = vmul.f32 %v1243, 0.25
        %v1252 = vmul.f32 %v1248, 0.25
        %v1253 = vadd.f32 %v1251, %v1053
        %v1254 = vadd.f32 %v1252, %v1053
        %v1255 = vsel %vm963, %v1253, -inf
        %1256 = vmax.xlane.f32.xlu0 %v1255
        %v1257 = vpop.xlane.xlu0 %1256
        %v1258 = vsel %vm963, %v1254, -inf
        %1259 = vmax.xlane.f32.xlu0 %v1258
        %v1260 = vpop.xlane.xlu0 %1259
        %v1261 = vsub.f32 %v1253, %v1257
        %v1262 = vsub.f32 %v1254, %v1260
        %v1263 = vmul.f32 %v1261, 1.442695
        %v1264 = vpow.pop %v1263
        %v1265 = vmul.f32 %v1262, 1.442695
        %v1266 = vpow.pop %v1265
        %v1267 = vsel %vm963, %v1264, 0.0
        %1268 = vadd.xlane.f32.xlu0 %v1267
        %v1269 = vpop.xlane.xlu0 %1268
        %v1270 = vsel %vm963, %v1266, 0.0
        %1271 = vadd.xlane.f32.xlu0 %v1270
        %v1272 = vpop.xlane.xlu0 %1271
        %v1273 = vrcp.pop %v1269
        %v1274 = vrcp.pop %v1272
        %v1275 = vmul.f32 %v1264, %v1273
        %v1276 = vmul.f32 %v1266, %v1274
        %1279 = vrot.lane.b32.xlu0 %v949, 112
        %v1280 = vpop.permute.xlu0 %1279
        %1281 = vrot.lane.b32.xlu0 %v955, 112
        %v1282 = vpop.permute.xlu0 %1281
        %v1286 = vsel %vm963, %v1275, 0
        %v1289 = vsel %vm963, %v1276, 0
        %1291 = vmatprep.subr.mxu0 0.0
        %1292 = vmatpush1.msra.mxu0 0.0
        %1293 = vmatprep.subr.mxu0 0.0
        %1294 = vmatpush1.msra.mxu0 0.0
        %1295 = vmatprep.subr.mxu0 0.0
        %1296 = vmatpush1.msra.mxu0 0.0
        %1297 = vmatprep.subr.mxu0 0.0
        %1298 = vmatpush1.msra.mxu0 0.0
        %1299 = vmatprep.subr.mxu0 0.0
        %1300 = vmatpush1.msra.mxu0 0.0
        %1301 = vmatprep.subr.mxu0 0.0
        %1302 = vmatpush1.msra.mxu0 0.0
        %1303 = vmatprep.subr.mxu0 0.0
        %1304 = vmatpush1.msra.mxu0 0.0
        %1305 = vmatprep.subr.mxu0 0.0
        %1306 = vmatpush1.msra.mxu0 0.0
        %1307 = vmatprep.subr.mxu0 0.0
        %1308 = vmatpush1.msra.mxu0 0.0
        %1309 = vmatprep.subr.mxu0 0.0
        %1310 = vmatpush1.msra.mxu0 0.0
        %1311 = vmatprep.subr.mxu0 0.0
        %1312 = vmatpush1.msra.mxu0 0.0
        %1313 = vmatprep.subr.mxu0 0.0
        %1314 = vmatpush1.msra.mxu0 0.0
        %1315 = vmatprep.subr.mxu0 0.0
        %1316 = vmatpush1.msra.mxu0 0.0
        %1317 = vmatprep.subr.mxu0 0.0
        %1318 = vmatpush1.msra.mxu0 0.0
        %1319 = vmatprep.subr.mxu0 0.0
        %1320 = vmatpush1.msra.mxu0 %v1282
        %1321 = vmatprep.subr.mxu0 0.0
        %1322 = vmatpush1.msra.mxu0 %v1280
        %1323 = vmatprep.subr.mxu0 0.0
        %1324 = vmatpush2.msra.mxu0 0.0
        %1325 = vmatprep.subr.mxu0 0.0
        %1326 = vmatpush2.msra.mxu0 0.0
        %1327 = vmatprep.subr.mxu0 0.0
        %1328 = vmatpush2.msra.mxu0 0.0
        %1329 = vmatprep.subr.mxu0 0.0
        %1330 = vmatpush2.msra.mxu0 0.0
        %1331 = vmatprep.subr.mxu0 0.0
        %1332 = vmatpush2.msra.mxu0 0.0
        %1333 = vmatprep.subr.mxu0 0.0
        %1334 = vmatpush2.msra.mxu0 0.0
        %1335 = vmatprep.subr.mxu0 0.0
        %1336 = vmatpush2.msra.mxu0 0.0
        %1337 = vmatprep.subr.mxu0 0.0
        %1338 = vmatpush2.msra.mxu0 0.0
        %1339 = vmatprep.subr.mxu0 0.0
        %1340 = vmatpush2.msra.mxu0 0.0
        %1341 = vmatprep.subr.mxu0 0.0
        %1342 = vmatpush2.msra.mxu0 0.0
        %1343 = vmatprep.subr.mxu0 0.0
        %1344 = vmatpush2.msra.mxu0 0.0
        %1345 = vmatprep.subr.mxu0 0.0
        %1346 = vmatpush2.msra.mxu0 0.0
        %1347 = vmatprep.subr.mxu0 0.0
        %1348 = vmatpush2.msra.mxu0 0.0
        %1349 = vmatprep.subr.mxu0 0.0
        %1350 = vmatpush2.msra.mxu0 0.0
        %1351 = vmatprep.subr.mxu0 0.0
        %1352 = vmatpush2.msra.mxu0 0.0
        %1353 = vmatprep.subr.mxu0 0.0
        %1354 = vmatpush2.msra.mxu0 0.0
        %1355 = vmatprep.mubr.f32.mxu0 0.0
        %1356 = vmatmul.mubr.f32.gmra.mxu0 %v1286
        %v1357 = vpop.f32.mrf.mxu0
        %v1358 = vadd.f32 0.0, %v1357
        %v1359 = vpop.f32.mrf.mxu0
        %1360 = vmatprep.mubr.f32.mxu0 0.0
        %1361 = vmatmul.mubr.f32.gmra.mxu0 %v1289
        %v1362 = vpop.f32.mrf.mxu0
        %v1363 = vadd.f32 0.0, %v1362
        %v1364 = vpop.f32.mrf.mxu0
        %1365 = vdwg.mxu0
        %1366 = vrot.lane.b32.xlu0 %v947, 96
        %v1367 = vpop.permute.xlu0 %1366
        %1368 = vrot.lane.b32.xlu0 %v953, 96
        %v1369 = vpop.permute.xlu0 %1368
        %1370 = vrot.lane.b32.xlu0 %v947, 32
        %v1371 = vpop.permute.xlu0 %1370
        %1372 = vrot.lane.b32.xlu0 %v953, 32
        %v1373 = vpop.permute.xlu0 %1372
        %v1374 = vsel %vm963, %v1367, 0
        %v1376 = vsel %vm963, %v1369, 0
        %v1378 = vsel %vm963, %v1371, 0
        %v1380 = vsel %vm963, %v1373, 0
        %1382 = vmatprep.subr.mxu0 0.0
        %1383 = vmatpush1.xpose.msra.mxu0 0.0
        %1384 = vmatprep.subr.mxu0 0.0
        %1385 = vmatpush1.xpose.msra.mxu0 0.0
        %1386 = vmatprep.subr.mxu0 0.0
        %1387 = vmatpush1.xpose.msra.mxu0 0.0
        %1388 = vmatprep.subr.mxu0 0.0
        %1389 = vmatpush1.xpose.msra.mxu0 0.0
        %1390 = vmatprep.subr.mxu0 0.0
        %1391 = vmatpush1.xpose.msra.mxu0 0.0
        %1392 = vmatprep.subr.mxu0 0.0
        %1393 = vmatpush1.xpose.msra.mxu0 0.0
        %1394 = vmatprep.subr.mxu0 0.0
        %1395 = vmatpush1.xpose.msra.mxu0 0.0
        %1396 = vmatprep.subr.mxu0 0.0
        %1397 = vmatpush1.xpose.msra.mxu0 0.0
        %1398 = vmatprep.subr.mxu0 0.0
        %1399 = vmatpush1.xpose.msra.mxu0 0.0
        %1400 = vmatprep.subr.mxu0 0.0
        %1401 = vmatpush1.xpose.msra.mxu0 0.0
        %1402 = vmatprep.subr.mxu0 0.0
        %1403 = vmatpush1.xpose.msra.mxu0 0.0
        %1404 = vmatprep.subr.mxu0 0.0
        %1405 = vmatpush1.xpose.msra.mxu0 0.0
        %1406 = vmatprep.subr.mxu0 0.0
        %1407 = vmatpush1.xpose.msra.mxu0 0.0
        %1408 = vmatprep.subr.mxu0 0.0
        %1409 = vmatpush1.xpose.msra.mxu0 0.0
        %1410 = vmatprep.subr.mxu0 0.0
        %1411 = vmatpush1.xpose.msra.mxu0 %v1380
        %1412 = vmatprep.subr.mxu0 0.0
        %1413 = vmatpush1.xpose.msra.mxu0 %v1378
        %1414 = vmatprep.subr.mxu0 0.0
        %1415 = vmatpush2.xpose.msra.mxu0 0.0
        %1416 = vmatprep.subr.mxu0 0.0
        %1417 = vmatpush2.xpose.msra.mxu0 0.0
        %1418 = vmatprep.subr.mxu0 0.0
        %1419 = vmatpush2.xpose.msra.mxu0 0.0
        %1420 = vmatprep.subr.mxu0 0.0
        %1421 = vmatpush2.xpose.msra.mxu0 0.0
        %1422 = vmatprep.subr.mxu0 0.0
        %1423 = vmatpush2.xpose.msra.mxu0 0.0
        %1424 = vmatprep.subr.mxu0 0.0
        %1425 = vmatpush2.xpose.msra.mxu0 0.0
        %1426 = vmatprep.subr.mxu0 0.0
        %1427 = vmatpush2.xpose.msra.mxu0 0.0
        %1428 = vmatprep.subr.mxu0 0.0
        %1429 = vmatpush2.xpose.msra.mxu0 0.0
        %1430 = vmatprep.subr.mxu0 0.0
        %1431 = vmatpush2.xpose.msra.mxu0 0.0
        %1432 = vmatprep.subr.mxu0 0.0
        %1433 = vmatpush2.xpose.msra.mxu0 0.0
        %1434 = vmatprep.subr.mxu0 0.0
        %1435 = vmatpush2.xpose.msra.mxu0 0.0
        %1436 = vmatprep.subr.mxu0 0.0
        %1437 = vmatpush2.xpose.msra.mxu0 0.0
        %1438 = vmatprep.subr.mxu0 0.0
        %1439 = vmatpush2.xpose.msra.mxu0 0.0
        %1440 = vmatprep.subr.mxu0 0.0
        %1441 = vmatpush2.xpose.msra.mxu0 0.0
        %1442 = vmatprep.subr.mxu0 0.0
        %1443 = vmatpush2.xpose.msra.mxu0 0.0
        %1444 = vmatprep.subr.mxu0 0.0
        %1445 = vmatpush2.xpose.msra.mxu0 0.0
        %1446 = vmatprep.mubr.f32.mxu0 0.0
        %1447 = vmatmul.mubr.f32.gmra.mxu0 %v1374
        %v1448 = vpop.f32.mrf.mxu0
        %v1449 = vadd.f32 0.0, %v1448
        %v1450 = vpop.f32.mrf.mxu0
        %1451 = vmatprep.mubr.f32.mxu0 0.0
        %1452 = vmatmul.mubr.f32.gmra.mxu0 %v1376
        %v1453 = vpop.f32.mrf.mxu0
        %v1454 = vadd.f32 0.0, %v1453
        %v1455 = vpop.f32.mrf.mxu0
        %1456 = vdwg.mxu0
        %v1457 = vmul.f32 %v1449, 0.25
        %v1458 = vmul.f32 %v1454, 0.25
        %v1459 = vadd.f32 %v1457, %v1053
        %v1460 = vadd.f32 %v1458, %v1053
        %v1461 = vsel %vm963, %v1459, -inf
        %1462 = vmax.xlane.f32.xlu0 %v1461
        %v1463 = vpop.xlane.xlu0 %1462
        %v1464 = vsel %vm963, %v1460, -inf
        %1465 = vmax.xlane.f32.xlu0 %v1464
        %v1466 = vpop.xlane.xlu0 %1465
        %v1467 = vsub.f32 %v1459, %v1463
        %v1468 = vsub.f32 %v1460, %v1466
        %v1469 = vmul.f32 %v1467, 1.442695
        %v1470 = vpow.pop %v1469
        %v1471 = vmul.f32 %v1468, 1.442695
        %v1472 = vpow.pop %v1471
        %v1473 = vsel %vm963, %v1470, 0.0
        %1474 = vadd.xlane.f32.xlu0 %v1473
        %v1475 = vpop.xlane.xlu0 %1474
        %v1476 = vsel %vm963, %v1472, 0.0
        %1477 = vadd.xlane.f32.xlu0 %v1476
        %v1478 = vpop.xlane.xlu0 %1477
        %v1479 = vrcp.pop %v1475
        %v1480 = vrcp.pop %v1478
        %v1481 = vmul.f32 %v1470, %v1479
        %v1482 = vmul.f32 %v1472, %v1480
        %1483 = vrot.lane.b32.xlu0 %v949, 96
        %v1484 = vpop.permute.xlu0 %1483
        %1485 = vrot.lane.b32.xlu0 %v955, 96
        %v1486 = vpop.permute.xlu0 %1485
        %v1490 = vsel %vm963, %v1481, 0
        %v1493 = vsel %vm963, %v1482, 0
        %1495 = vmatprep.subr.mxu0 0.0
        %1496 = vmatpush1.msra.mxu0 0.0
        %1497 = vmatprep.subr.mxu0 0.0
        %1498 = vmatpush1.msra.mxu0 0.0
        %1499 = vmatprep.subr.mxu0 0.0
        %1500 = vmatpush1.msra.mxu0 0.0
        %1501 = vmatprep.subr.mxu0 0.0
        %1502 = vmatpush1.msra.mxu0 0.0
        %1503 = vmatprep.subr.mxu0 0.0
        %1504 = vmatpush1.msra.mxu0 0.0
        %1505 = vmatprep.subr.mxu0 0.0
        %1506 = vmatpush1.msra.mxu0 0.0
        %1507 = vmatprep.subr.mxu0 0.0
        %1508 = vmatpush1.msra.mxu0 0.0
        %1509 = vmatprep.subr.mxu0 0.0
        %1510 = vmatpush1.msra.mxu0 0.0
        %1511 = vmatprep.subr.mxu0 0.0
        %1512 = vmatpush1.msra.mxu0 0.0
        %1513 = vmatprep.subr.mxu0 0.0
        %1514 = vmatpush1.msra.mxu0 0.0
        %1515 = vmatprep.subr.mxu0 0.0
        %1516 = vmatpush1.msra.mxu0 0.0
        %1517 = vmatprep.subr.mxu0 0.0
        %1518 = vmatpush1.msra.mxu0 0.0
        %1519 = vmatprep.subr.mxu0 0.0
        %1520 = vmatpush1.msra.mxu0 0.0
        %1521 = vmatprep.subr.mxu0 0.0
        %1522 = vmatpush1.msra.mxu0 0.0
        %1523 = vmatprep.subr.mxu0 0.0
        %1524 = vmatpush1.msra.mxu0 %v1486
        %1525 = vmatprep.subr.mxu0 0.0
        %1526 = vmatpush1.msra.mxu0 %v1484
        %1527 = vmatprep.subr.mxu0 0.0
        %1528 = vmatpush2.msra.mxu0 0.0
        %1529 = vmatprep.subr.mxu0 0.0
        %1530 = vmatpush2.msra.mxu0 0.0
        %1531 = vmatprep.subr.mxu0 0.0
        %1532 = vmatpush2.msra.mxu0 0.0
        %1533 = vmatprep.subr.mxu0 0.0
        %1534 = vmatpush2.msra.mxu0 0.0
        %1535 = vmatprep.subr.mxu0 0.0
        %1536 = vmatpush2.msra.mxu0 0.0
        %1537 = vmatprep.subr.mxu0 0.0
        %1538 = vmatpush2.msra.mxu0 0.0
        %1539 = vmatprep.subr.mxu0 0.0
        %1540 = vmatpush2.msra.mxu0 0.0
        %1541 = vmatprep.subr.mxu0 0.0
        %1542 = vmatpush2.msra.mxu0 0.0
        %1543 = vmatprep.subr.mxu0 0.0
        %1544 = vmatpush2.msra.mxu0 0.0
        %1545 = vmatprep.subr.mxu0 0.0
        %1546 = vmatpush2.msra.mxu0 0.0
        %1547 = vmatprep.subr.mxu0 0.0
        %1548 = vmatpush2.msra.mxu0 0.0
        %1549 = vmatprep.subr.mxu0 0.0
        %1550 = vmatpush2.msra.mxu0 0.0
        %1551 = vmatprep.subr.mxu0 0.0
        %1552 = vmatpush2.msra.mxu0 0.0
        %1553 = vmatprep.subr.mxu0 0.0
        %1554 = vmatpush2.msra.mxu0 0.0
        %1555 = vmatprep.subr.mxu0 0.0
        %1556 = vmatpush2.msra.mxu0 0.0
        %1557 = vmatprep.subr.mxu0 0.0
        %1558 = vmatpush2.msra.mxu0 0.0
        %1559 = vmatprep.mubr.f32.mxu0 0.0
        %1560 = vmatmul.mubr.f32.gmra.mxu0 %v1490
        %v1561 = vpop.f32.mrf.mxu0
        %v1562 = vadd.f32 0.0, %v1561
        %v1563 = vpop.f32.mrf.mxu0
        %1564 = vmatprep.mubr.f32.mxu0 0.0
        %1565 = vmatmul.mubr.f32.gmra.mxu0 %v1493
        %v1566 = vpop.f32.mrf.mxu0
        %v1567 = vadd.f32 0.0, %v1566
        %v1568 = vpop.f32.mrf.mxu0
        %1569 = vdwg.mxu0
        %1570 = vrot.lane.b32.xlu0 %v947, 80
        %v1571 = vpop.permute.xlu0 %1570
        %1572 = vrot.lane.b32.xlu0 %v953, 80
        %v1573 = vpop.permute.xlu0 %1572
        %1574 = vrot.lane.b32.xlu0 %v947, 16
        %v1575 = vpop.permute.xlu0 %1574
        %1576 = vrot.lane.b32.xlu0 %v953, 16
        %v1577 = vpop.permute.xlu0 %1576
        %v1578 = vsel %vm963, %v1571, 0
        %v1580 = vsel %vm963, %v1573, 0
        %v1582 = vsel %vm963, %v1575, 0
        %v1584 = vsel %vm963, %v1577, 0
        %1586 = vmatprep.subr.mxu0 0.0
        %1587 = vmatpush1.xpose.msra.mxu0 0.0
        %1588 = vmatprep.subr.mxu0 0.0
        %1589 = vmatpush1.xpose.msra.mxu0 0.0
        %1590 = vmatprep.subr.mxu0 0.0
        %1591 = vmatpush1.xpose.msra.mxu0 0.0
        %1592 = vmatprep.subr.mxu0 0.0
        %1593 = vmatpush1.xpose.msra.mxu0 0.0
        %1594 = vmatprep.subr.mxu0 0.0
        %1595 = vmatpush1.xpose.msra.mxu0 0.0
        %1596 = vmatprep.subr.mxu0 0.0
        %1597 = vmatpush1.xpose.msra.mxu0 0.0
        %1598 = vmatprep.subr.mxu0 0.0
        %1599 = vmatpush1.xpose.msra.mxu0 0.0
        %1600 = vmatprep.subr.mxu0 0.0
        %1601 = vmatpush1.xpose.msra.mxu0 0.0
        %1602 = vmatprep.subr.mxu0 0.0
        %1603 = vmatpush1.xpose.msra.mxu0 0.0
        %1604 = vmatprep.subr.mxu0 0.0
        %1605 = vmatpush1.xpose.msra.mxu0 0.0
        %1606 = vmatprep.subr.mxu0 0.0
        %1607 = vmatpush1.xpose.msra.mxu0 0.0
        %1608 = vmatprep.subr.mxu0 0.0
        %1609 = vmatpush1.xpose.msra.mxu0 0.0
        %1610 = vmatprep.subr.mxu0 0.0
        %1611 = vmatpush1.xpose.msra.mxu0 0.0
        %1612 = vmatprep.subr.mxu0 0.0
        %1613 = vmatpush1.xpose.msra.mxu0 0.0
        %1614 = vmatprep.subr.mxu0 0.0
        %1615 = vmatpush1.xpose.msra.mxu0 %v1584
        %1616 = vmatprep.subr.mxu0 0.0
        %1617 = vmatpush1.xpose.msra.mxu0 %v1582
        %1618 = vmatprep.subr.mxu0 0.0
        %1619 = vmatpush2.xpose.msra.mxu0 0.0
        %1620 = vmatprep.subr.mxu0 0.0
        %1621 = vmatpush2.xpose.msra.mxu0 0.0
        %1622 = vmatprep.subr.mxu0 0.0
        %1623 = vmatpush2.xpose.msra.mxu0 0.0
        %1624 = vmatprep.subr.mxu0 0.0
        %1625 = vmatpush2.xpose.msra.mxu0 0.0
        %1626 = vmatprep.subr.mxu0 0.0
        %1627 = vmatpush2.xpose.msra.mxu0 0.0
        %1628 = vmatprep.subr.mxu0 0.0
        %1629 = vmatpush2.xpose.msra.mxu0 0.0
        %1630 = vmatprep.subr.mxu0 0.0
        %1631 = vmatpush2.xpose.msra.mxu0 0.0
        %1632 = vmatprep.subr.mxu0 0.0
        %1633 = vmatpush2.xpose.msra.mxu0 0.0
        %1634 = vmatprep.subr.mxu0 0.0
        %1635 = vmatpush2.xpose.msra.mxu0 0.0
        %1636 = vmatprep.subr.mxu0 0.0
        %1637 = vmatpush2.xpose.msra.mxu0 0.0
        %1638 = vmatprep.subr.mxu0 0.0
        %1639 = vmatpush2.xpose.msra.mxu0 0.0
        %1640 = vmatprep.subr.mxu0 0.0
        %1641 = vmatpush2.xpose.msra.mxu0 0.0
        %1642 = vmatprep.subr.mxu0 0.0
        %1643 = vmatpush2.xpose.msra.mxu0 0.0
        %1644 = vmatprep.subr.mxu0 0.0
        %1645 = vmatpush2.xpose.msra.mxu0 0.0
        %1646 = vmatprep.subr.mxu0 0.0
        %1647 = vmatpush2.xpose.msra.mxu0 0.0
        %1648 = vmatprep.subr.mxu0 0.0
        %1649 = vmatpush2.xpose.msra.mxu0 0.0
        %1650 = vmatprep.mubr.f32.mxu0 0.0
        %1651 = vmatmul.mubr.f32.gmra.mxu0 %v1578
        %v1652 = vpop.f32.mrf.mxu0
        %v1653 = vadd.f32 0.0, %v1652
        %v1654 = vpop.f32.mrf.mxu0
        %1655 = vmatprep.mubr.f32.mxu0 0.0
        %1656 = vmatmul.mubr.f32.gmra.mxu0 %v1580
        %v1657 = vpop.f32.mrf.mxu0
        %v1658 = vadd.f32 0.0, %v1657
        %v1659 = vpop.f32.mrf.mxu0
        %1660 = vdwg.mxu0
        %v1661 = vmul.f32 %v1653, 0.25
        %v1662 = vmul.f32 %v1658, 0.25
        %v1663 = vadd.f32 %v1661, %v1053
        %v1664 = vadd.f32 %v1662, %v1053
        %v1665 = vsel %vm963, %v1663, -inf
        %1666 = vmax.xlane.f32.xlu0 %v1665
        %v1667 = vpop.xlane.xlu0 %1666
        %v1668 = vsel %vm963, %v1664, -inf
        %1669 = vmax.xlane.f32.xlu0 %v1668
        %v1670 = vpop.xlane.xlu0 %1669
        %v1671 = vsub.f32 %v1663, %v1667
        %v1672 = vsub.f32 %v1664, %v1670
        %v1673 = vmul.f32 %v1671, 1.442695
        %v1674 = vpow.pop %v1673
        %v1675 = vmul.f32 %v1672, 1.442695
        %v1676 = vpow.pop %v1675
        %v1677 = vsel %vm963, %v1674, 0.0
        %1678 = vadd.xlane.f32.xlu0 %v1677
        %v1679 = vpop.xlane.xlu0 %1678
        %v1680 = vsel %vm963, %v1676, 0.0
        %1681 = vadd.xlane.f32.xlu0 %v1680
        %v1682 = vpop.xlane.xlu0 %1681
        %v1683 = vrcp.pop %v1679
        %v1684 = vrcp.pop %v1682
        %v1685 = vmul.f32 %v1674, %v1683
        %v1686 = vmul.f32 %v1676, %v1684
        %1687 = vrot.lane.b32.xlu0 %v949, 80
        %v1688 = vpop.permute.xlu0 %1687
        %1689 = vrot.lane.b32.xlu0 %v955, 80
        %v1690 = vpop.permute.xlu0 %1689
        %v1694 = vsel %vm963, %v1685, 0
        %v1697 = vsel %vm963, %v1686, 0
        %1699 = vmatprep.subr.mxu0 0.0
        %1700 = vmatpush1.msra.mxu0 0.0
        %1701 = vmatprep.subr.mxu0 0.0
        %1702 = vmatpush1.msra.mxu0 0.0
        %1703 = vmatprep.subr.mxu0 0.0
        %1704 = vmatpush1.msra.mxu0 0.0
        %1705 = vmatprep.subr.mxu0 0.0
        %1706 = vmatpush1.msra.mxu0 0.0
        %1707 = vmatprep.subr.mxu0 0.0
        %1708 = vmatpush1.msra.mxu0 0.0
        %1709 = vmatprep.subr.mxu0 0.0
        %1710 = vmatpush1.msra.mxu0 0.0
        %1711 = vmatprep.subr.mxu0 0.0
        %1712 = vmatpush1.msra.mxu0 0.0
        %1713 = vmatprep.subr.mxu0 0.0
        %1714 = vmatpush1.msra.mxu0 0.0
        %1715 = vmatprep.subr.mxu0 0.0
        %1716 = vmatpush1.msra.mxu0 0.0
        %1717 = vmatprep.subr.mxu0 0.0
        %1718 = vmatpush1.msra.mxu0 0.0
        %1719 = vmatprep.subr.mxu0 0.0
        %1720 = vmatpush1.msra.mxu0 0.0
        %1721 = vmatprep.subr.mxu0 0.0
        %1722 = vmatpush1.msra.mxu0 0.0
        %1723 = vmatprep.subr.mxu0 0.0
        %1724 = vmatpush1.msra.mxu0 0.0
        %1725 = vmatprep.subr.mxu0 0.0
        %1726 = vmatpush1.msra.mxu0 0.0
        %1727 = vmatprep.subr.mxu0 0.0
        %1728 = vmatpush1.msra.mxu0 %v1690
        %1729 = vmatprep.subr.mxu0 0.0
        %1730 = vmatpush1.msra.mxu0 %v1688
        %1731 = vmatprep.subr.mxu0 0.0
        %1732 = vmatpush2.msra.mxu0 0.0
        %1733 = vmatprep.subr.mxu0 0.0
        %1734 = vmatpush2.msra.mxu0 0.0
        %1735 = vmatprep.subr.mxu0 0.0
        %1736 = vmatpush2.msra.mxu0 0.0
        %1737 = vmatprep.subr.mxu0 0.0
        %1738 = vmatpush2.msra.mxu0 0.0
        %1739 = vmatprep.subr.mxu0 0.0
        %1740 = vmatpush2.msra.mxu0 0.0
        %1741 = vmatprep.subr.mxu0 0.0
        %1742 = vmatpush2.msra.mxu0 0.0
        %1743 = vmatprep.subr.mxu0 0.0
        %1744 = vmatpush2.msra.mxu0 0.0
        %1745 = vmatprep.subr.mxu0 0.0
        %1746 = vmatpush2.msra.mxu0 0.0
        %1747 = vmatprep.subr.mxu0 0.0
        %1748 = vmatpush2.msra.mxu0 0.0
        %1749 = vmatprep.subr.mxu0 0.0
        %1750 = vmatpush2.msra.mxu0 0.0
        %1751 = vmatprep.subr.mxu0 0.0
        %1752 = vmatpush2.msra.mxu0 0.0
        %1753 = vmatprep.subr.mxu0 0.0
        %1754 = vmatpush2.msra.mxu0 0.0
        %1755 = vmatprep.subr.mxu0 0.0
        %1756 = vmatpush2.msra.mxu0 0.0
        %1757 = vmatprep.subr.mxu0 0.0
        %1758 = vmatpush2.msra.mxu0 0.0
        %1759 = vmatprep.subr.mxu0 0.0
        %1760 = vmatpush2.msra.mxu0 0.0
        %1761 = vmatprep.subr.mxu0 0.0
        %1762 = vmatpush2.msra.mxu0 0.0
        %1763 = vmatprep.mubr.f32.mxu0 0.0
        %1764 = vmatmul.mubr.f32.gmra.mxu0 %v1694
        %v1765 = vpop.f32.mrf.mxu0
        %v1766 = vadd.f32 0.0, %v1765
        %v1767 = vpop.f32.mrf.mxu0
        %1768 = vmatprep.mubr.f32.mxu0 0.0
        %1769 = vmatmul.mubr.f32.gmra.mxu0 %v1697
        %v1770 = vpop.f32.mrf.mxu0
        %v1771 = vadd.f32 0.0, %v1770
        %v1772 = vpop.f32.mrf.mxu0
        %1773 = vdwg.mxu0
        %1776 = vrot.lane.b32.xlu0 %v1358, 16
        %v1777 = vpop.permute.xlu0 %1776
        %1778 = vrot.lane.b32.xlu0 %v1363, 16
        %v1779 = vpop.permute.xlu0 %1778
        %1784 = vrot.lane.b32.xlu0 %v1562, 32
        %v1785 = vpop.permute.xlu0 %1784
        %1786 = vrot.lane.b32.xlu0 %v1567, 32
        %v1787 = vpop.permute.xlu0 %1786
        %1792 = vrot.lane.b32.xlu0 %v1766, 48
        %v1793 = vpop.permute.xlu0 %1792
        %1794 = vrot.lane.b32.xlu0 %v1771, 48
        %v1795 = vpop.permute.xlu0 %1794
        %v1798 = vsel %vm963, %v1152, %v1777
        %v1799 = vsel %vm963, %v1157, %v1779
        %vm1800 = vcmask 261120
        %v1801 = vsel %vm1800, %v1798, %v1785
        %v1802 = vsel %vm1800, %v1799, %v1787
        %vm1803 = vcmask 392192
        %v1804 = vsel %vm1803, %v1801, %v1793
        %v1805 = vsel %vm1803, %v1802, %v1795
        %v1806 = vld [vmem:[%s7] sm:$0xff]
        %v1807 = vld [vmem:[%s7 + $0x8] sm:$0xff]
        %v1808 = vld [vmem:[%s7 + $0x10] sm:$0xff]
        %v1809 = vld [vmem:[%s7 + $0x18] sm:$0xff]
        %v1810 = vld [vmem:[%s7 + $0x20] sm:$0xff]
        %v1811 = vld [vmem:[%s7 + $0x28] sm:$0xff]
        %v1812 = vld [vmem:[%s7 + $0x30] sm:$0xff]
        %v1813 = vld [vmem:[%s7 + $0x38] sm:$0xff]
        %v1814 = vld [vmem:[%s8] sm:$0x1]
        %v1816 = vlaneseq
        %v1817 = vshrl.u32 %v1816, 7
        %v1818 = vsub.s32 0, %v1817
        %v1819 = vrot.slane %v1814, %v1818
        %v1822 = vsel %vm801, %v1804, 0
        %v1825 = vsel %vm801, %v1805, 0
        %1827 = vmatprep.subr.mxu0 0.0
        %1828 = vmatpush1.msra.mxu0 0.0
        %1829 = vmatprep.subr.mxu0 0.0
        %1830 = vmatpush1.msra.mxu0 0.0
        %1831 = vmatprep.subr.mxu0 0.0
        %1832 = vmatpush1.msra.mxu0 0.0
        %1833 = vmatprep.subr.mxu0 0.0
        %1834 = vmatpush1.msra.mxu0 0.0
        %1835 = vmatprep.subr.mxu0 0.0
        %1836 = vmatpush1.msra.mxu0 0.0
        %1837 = vmatprep.subr.mxu0 0.0
        %1838 = vmatpush1.msra.mxu0 0.0
        %1839 = vmatprep.subr.mxu0 0.0
        %1840 = vmatpush1.msra.mxu0 0.0
        %1841 = vmatprep.subr.mxu0 0.0
        %1842 = vmatpush1.msra.mxu0 0.0
        %1843 = vmatprep.subr.mxu0 0.0
        %1844 = vmatpush1.msra.mxu0 %v1813
        %1845 = vmatprep.subr.mxu0 0.0
        %1846 = vmatpush1.msra.mxu0 %v1812
        %1847 = vmatprep.subr.mxu0 0.0
        %1848 = vmatpush1.msra.mxu0 %v1811
        %1849 = vmatprep.subr.mxu0 0.0
        %1850 = vmatpush1.msra.mxu0 %v1810
        %1851 = vmatprep.subr.mxu0 0.0
        %1852 = vmatpush1.msra.mxu0 %v1809
        %1853 = vmatprep.subr.mxu0 0.0
        %1854 = vmatpush1.msra.mxu0 %v1808
        %1855 = vmatprep.subr.mxu0 0.0
        %1856 = vmatpush1.msra.mxu0 %v1807
        %1857 = vmatprep.subr.mxu0 0.0
        %1858 = vmatpush1.msra.mxu0 %v1806
        %1859 = vmatprep.subr.mxu0 0.0
        %1860 = vmatpush2.msra.mxu0 0.0
        %1861 = vmatprep.subr.mxu0 0.0
        %1862 = vmatpush2.msra.mxu0 0.0
        %1863 = vmatprep.subr.mxu0 0.0
        %1864 = vmatpush2.msra.mxu0 0.0
        %1865 = vmatprep.subr.mxu0 0.0
        %1866 = vmatpush2.msra.mxu0 0.0
        %1867 = vmatprep.subr.mxu0 0.0
        %1868 = vmatpush2.msra.mxu0 0.0
        %1869 = vmatprep.subr.mxu0 0.0
        %1870 = vmatpush2.msra.mxu0 0.0
        %1871 = vmatprep.subr.mxu0 0.0
        %1872 = vmatpush2.msra.mxu0 0.0
        %1873 = vmatprep.subr.mxu0 0.0
        %1874 = vmatpush2.msra.mxu0 0.0
        %1875 = vmatprep.subr.mxu0 0.0
        %1876 = vmatpush2.msra.mxu0 0.0
        %1877 = vmatprep.subr.mxu0 0.0
        %1878 = vmatpush2.msra.mxu0 0.0
        %1879 = vmatprep.subr.mxu0 0.0
        %1880 = vmatpush2.msra.mxu0 0.0
        %1881 = vmatprep.subr.mxu0 0.0
        %1882 = vmatpush2.msra.mxu0 0.0
        %1883 = vmatprep.subr.mxu0 0.0
        %1884 = vmatpush2.msra.mxu0 0.0
        %1885 = vmatprep.subr.mxu0 0.0
        %1886 = vmatpush2.msra.mxu0 0.0
        %1887 = vmatprep.subr.mxu0 0.0
        %1888 = vmatpush2.msra.mxu0 0.0
        %1889 = vmatprep.subr.mxu0 0.0
        %1890 = vmatpush2.msra.mxu0 0.0
        %1891 = vmatprep.mubr.f32.mxu0 0.0
        %1892 = vmatmul.mubr.f32.gmra.mxu0 %v1822
        %v1893 = vpop.f32.mrf.mxu0
        %v1894 = vadd.f32 %v1819, %v1893
        %v1895 = vpop.f32.mrf.mxu0
        %1896 = vmatprep.mubr.f32.mxu0 0.0
        %1897 = vmatmul.mubr.f32.gmra.mxu0 %v1825
        %v1898 = vpop.f32.mrf.mxu0
        %v1899 = vadd.f32 %v1819, %v1898
        %v1900 = vpop.f32.mrf.mxu0
        %1901 = vdwg.mxu0
        %v1902 = vadd.f32 %v843, %v1894
        %v1903 = vadd.f32 %v844, %v1899
        %v1904 = vld [vmem:[%s9] sm:$0x1]
        %v1905 = vld [vmem:[%s10] sm:$0x1]
        %v1906 = vsel %vm801, %v1902, 0.0
        %1907 = vadd.xlane.f32.xlu0 %v1906
        %v1908 = vpop.xlane.xlu0 %1907
        %v1909 = vsel %vm801, %v1903, 0.0
        %1910 = vadd.xlane.f32.xlu0 %v1909
        %v1911 = vpop.xlane.xlu0 %1910
        %v1912 = vmul.f32 %v1908, %v808
        %v1913 = vmul.f32 %v1911, %v808
        %v1914 = vsub.f32 %v1902, %v1912
        %v1915 = vsub.f32 %v1903, %v1913
        %v1916 = vmul.f32 %v1914, %v1914
        %v1917 = vmul.f32 %v1915, %v1915
        %v1918 = vsel %vm801, %v1916, 0.0
        %1919 = vadd.xlane.f32.xlu0 %v1918
        %v1920 = vpop.xlane.xlu0 %1919
        %v1921 = vsel %vm801, %v1917, 0.0
        %1922 = vadd.xlane.f32.xlu0 %v1921
        %v1923 = vpop.xlane.xlu0 %1922
        %v1924 = vmul.f32 %v1920, %v808
        %v1925 = vmul.f32 %v1923, %v808
        %v1926 = vadd.f32 %v1924, 1e-12
        %v1927 = vadd.f32 %v1925, 1e-12
        %v1928 = vrsqrt.pop %v1926
        %v1929 = vrsqrt.pop %v1927
        %v1930 = vmul.f32 %v1914, %v1928
        %v1931 = vmul.f32 %v1915, %v1929
        %v1933 = vlaneseq
        %v1934 = vshrl.u32 %v1933, 7
        %v1935 = vsub.s32 0, %v1934
        %v1936 = vrot.slane %v1904, %v1935
        %v1938 = vmul.f32 %v1930, %v1936
        %v1939 = vmul.f32 %v1931, %v1936
        %v1941 = vlaneseq
        %v1942 = vshrl.u32 %v1941, 7
        %v1943 = vsub.s32 0, %v1942
        %v1944 = vrot.slane %v1905, %v1943
        %v1946 = vadd.f32 %v1938, %v1944
        %v1947 = vadd.f32 %v1939, %v1944
        %v1948 = vld [vmem:[%s11] sm:$0xff]
        %v1949 = vld [vmem:[%s11 + $0x8] sm:$0xff]
        %v1950 = vld [vmem:[%s11 + $0x10] sm:$0xff]
        %v1951 = vld [vmem:[%s11 + $0x18] sm:$0xff]
        %v1952 = vld [vmem:[%s11 + $0x20] sm:$0xff]
        %v1953 = vld [vmem:[%s11 + $0x28] sm:$0xff]
        %v1954 = vld [vmem:[%s11 + $0x30] sm:$0xff]
        %v1955 = vld [vmem:[%s11 + $0x38] sm:$0xff]
        %v1956 = vld [vmem:[%s12] sm:$0x1]
        %v1958 = vlaneseq
        %v1959 = vshrl.u32 %v1958, 7
        %v1960 = vsub.s32 0, %v1959
        %v1961 = vrot.slane %v1956, %v1960
        %v1964 = vsel %vm801, %v1946, 0
        %v1967 = vsel %vm801, %v1947, 0
        %1969 = vmatprep.subr.mxu0 0.0
        %1970 = vmatpush1.msra.mxu0 0.0
        %1971 = vmatprep.subr.mxu0 0.0
        %1972 = vmatpush1.msra.mxu0 0.0
        %1973 = vmatprep.subr.mxu0 0.0
        %1974 = vmatpush1.msra.mxu0 0.0
        %1975 = vmatprep.subr.mxu0 0.0
        %1976 = vmatpush1.msra.mxu0 0.0
        %1977 = vmatprep.subr.mxu0 0.0
        %1978 = vmatpush1.msra.mxu0 0.0
        %1979 = vmatprep.subr.mxu0 0.0
        %1980 = vmatpush1.msra.mxu0 0.0
        %1981 = vmatprep.subr.mxu0 0.0
        %1982 = vmatpush1.msra.mxu0 0.0
        %1983 = vmatprep.subr.mxu0 0.0
        %1984 = vmatpush1.msra.mxu0 0.0
        %1985 = vmatprep.subr.mxu0 0.0
        %1986 = vmatpush1.msra.mxu0 %v1955
        %1987 = vmatprep.subr.mxu0 0.0
        %1988 = vmatpush1.msra.mxu0 %v1954
        %1989 = vmatprep.subr.mxu0 0.0
        %1990 = vmatpush1.msra.mxu0 %v1953
        %1991 = vmatprep.subr.mxu0 0.0
        %1992 = vmatpush1.msra.mxu0 %v1952
        %1993 = vmatprep.subr.mxu0 0.0
        %1994 = vmatpush1.msra.mxu0 %v1951
        %1995 = vmatprep.subr.mxu0 0.0
        %1996 = vmatpush1.msra.mxu0 %v1950
        %1997 = vmatprep.subr.mxu0 0.0
        %1998 = vmatpush1.msra.mxu0 %v1949
        %1999 = vmatprep.subr.mxu0 0.0
        %2000 = vmatpush1.msra.mxu0 %v1948
        %2001 = vmatprep.subr.mxu0 0.0
        %2002 = vmatpush2.msra.mxu0 0.0
        %2003 = vmatprep.subr.mxu0 0.0
        %2004 = vmatpush2.msra.mxu0 0.0
        %2005 = vmatprep.subr.mxu0 0.0
        %2006 = vmatpush2.msra.mxu0 0.0
        %2007 = vmatprep.subr.mxu0 0.0
        %2008 = vmatpush2.msra.mxu0 0.0
        %2009 = vmatprep.subr.mxu0 0.0
        %2010 = vmatpush2.msra.mxu0 0.0
        %2011 = vmatprep.subr.mxu0 0.0
        %2012 = vmatpush2.msra.mxu0 0.0
        %2013 = vmatprep.subr.mxu0 0.0
        %2014 = vmatpush2.msra.mxu0 0.0
        %2015 = vmatprep.subr.mxu0 0.0
        %2016 = vmatpush2.msra.mxu0 0.0
        %2017 = vmatprep.subr.mxu0 0.0
        %2018 = vmatpush2.msra.mxu0 0.0
        %2019 = vmatprep.subr.mxu0 0.0
        %2020 = vmatpush2.msra.mxu0 0.0
        %2021 = vmatprep.subr.mxu0 0.0
        %2022 = vmatpush2.msra.mxu0 0.0
        %2023 = vmatprep.subr.mxu0 0.0
        %2024 = vmatpush2.msra.mxu0 0.0
        %2025 = vmatprep.subr.mxu0 0.0
        %2026 = vmatpush2.msra.mxu0 0.0
        %2027 = vmatprep.subr.mxu0 0.0
        %2028 = vmatpush2.msra.mxu0 0.0
        %2029 = vmatprep.subr.mxu0 0.0
        %2030 = vmatpush2.msra.mxu0 0.0
        %2031 = vmatprep.subr.mxu0 0.0
        %2032 = vmatpush2.msra.mxu0 0.0
        %2033 = vmatprep.mubr.f32.mxu0 0.0
        %2034 = vmatmul.mubr.f32.gmra.mxu0 %v1964
        %v2035 = vpop.f32.mrf.mxu0
        %v2036 = vadd.f32 %v1961, %v2035
        %v2037 = vpop.f32.mrf.mxu0
        %2038 = vmatprep.mubr.f32.mxu0 0.0
        %2039 = vmatmul.mubr.f32.gmra.mxu0 %v1967
        %v2040 = vpop.f32.mrf.mxu0
        %v2041 = vadd.f32 %v1961, %v2040
        %v2042 = vpop.f32.mrf.mxu0
        %2043 = vdwg.mxu0
        %v2044 = vmul.f32 %v2036, 0.5
        %v2045 = vmul.f32 %v2041, 0.5
        %v2046 = vmul.f32 %v2036, 0.70710677
        %v2047 = vmul.f32 %v2041, 0.70710677
        %v2048 = verf.f32.pop %v2046
        %v2049 = verf.f32.pop %v2047
        %v2050 = vadd.f32 %v2048, 1.0
        %v2051 = vadd.f32 %v2049, 1.0
        %v2052 = vmul.f32 %v2044, %v2050
        %v2053 = vmul.f32 %v2045, %v2051
        %v2054 = vld [vmem:[%s13] sm:$0xff]
        %v2055 = vld [vmem:[%s13 + $0x8] sm:$0xff]
        %v2056 = vld [vmem:[%s13 + $0x10] sm:$0xff]
        %v2057 = vld [vmem:[%s13 + $0x18] sm:$0xff]
        %v2058 = vld [vmem:[%s13 + $0x20] sm:$0xff]
        %v2059 = vld [vmem:[%s13 + $0x28] sm:$0xff]
        %v2060 = vld [vmem:[%s13 + $0x30] sm:$0xff]
        %v2061 = vld [vmem:[%s13 + $0x38] sm:$0xff]
        %v2062 = vld [vmem:[%s13 + $0x40] sm:$0xff]
        %v2063 = vld [vmem:[%s13 + $0x48] sm:$0xff]
        %v2064 = vld [vmem:[%s13 + $0x50] sm:$0xff]
        %v2065 = vld [vmem:[%s13 + $0x58] sm:$0xff]
        %v2066 = vld [vmem:[%s13 + $0x60] sm:$0xff]
        %v2067 = vld [vmem:[%s13 + $0x68] sm:$0xff]
        %v2068 = vld [vmem:[%s13 + $0x70] sm:$0xff]
        %v2069 = vld [vmem:[%s13 + $0x78] sm:$0xff]
        %v2070 = vld [vmem:[%s14] sm:$0x1]
        %v2072 = vlaneseq
        %v2073 = vshrl.u32 %v2072, 7
        %v2074 = vsub.s32 0, %v2073
        %v2075 = vrot.slane %v2070, %v2074
        %2077 = vmatprep.subr.mxu0 0.0
        %2078 = vmatpush1.msra.mxu0 %v2069
        %2079 = vmatprep.subr.mxu0 0.0
        %2080 = vmatpush1.msra.mxu0 %v2068
        %2081 = vmatprep.subr.mxu0 0.0
        %2082 = vmatpush1.msra.mxu0 %v2067
        %2083 = vmatprep.subr.mxu0 0.0
        %2084 = vmatpush1.msra.mxu0 %v2066
        %2085 = vmatprep.subr.mxu0 0.0
        %2086 = vmatpush1.msra.mxu0 %v2065
        %2087 = vmatprep.subr.mxu0 0.0
        %2088 = vmatpush1.msra.mxu0 %v2064
        %2089 = vmatprep.subr.mxu0 0.0
        %2090 = vmatpush1.msra.mxu0 %v2063
        %2091 = vmatprep.subr.mxu0 0.0
        %2092 = vmatpush1.msra.mxu0 %v2062
        %2093 = vmatprep.subr.mxu0 0.0
        %2094 = vmatpush1.msra.mxu0 %v2061
        %2095 = vmatprep.subr.mxu0 0.0
        %2096 = vmatpush1.msra.mxu0 %v2060
        %2097 = vmatprep.subr.mxu0 0.0
        %2098 = vmatpush1.msra.mxu0 %v2059
        %2099 = vmatprep.subr.mxu0 0.0
        %2100 = vmatpush1.msra.mxu0 %v2058
        %2101 = vmatprep.subr.mxu0 0.0
        %2102 = vmatpush1.msra.mxu0 %v2057
        %2103 = vmatprep.subr.mxu0 0.0
        %2104 = vmatpush1.msra.mxu0 %v2056
        %2105 = vmatprep.subr.mxu0 0.0
        %2106 = vmatpush1.msra.mxu0 %v2055
        %2107 = vmatprep.subr.mxu0 0.0
        %2108 = vmatpush1.msra.mxu0 %v2054
        %2109 = vmatprep.subr.mxu0 0.0
        %2110 = vmatpush2.msra.mxu0 0.0
        %2111 = vmatprep.subr.mxu0 0.0
        %2112 = vmatpush2.msra.mxu0 0.0
        %2113 = vmatprep.subr.mxu0 0.0
        %2114 = vmatpush2.msra.mxu0 0.0
        %2115 = vmatprep.subr.mxu0 0.0
        %2116 = vmatpush2.msra.mxu0 0.0
        %2117 = vmatprep.subr.mxu0 0.0
        %2118 = vmatpush2.msra.mxu0 0.0
        %2119 = vmatprep.subr.mxu0 0.0
        %2120 = vmatpush2.msra.mxu0 0.0
        %2121 = vmatprep.subr.mxu0 0.0
        %2122 = vmatpush2.msra.mxu0 0.0
        %2123 = vmatprep.subr.mxu0 0.0
        %2124 = vmatpush2.msra.mxu0 0.0
        %2125 = vmatprep.subr.mxu0 0.0
        %2126 = vmatpush2.msra.mxu0 0.0
        %2127 = vmatprep.subr.mxu0 0.0
        %2128 = vmatpush2.msra.mxu0 0.0
        %2129 = vmatprep.subr.mxu0 0.0
        %2130 = vmatpush2.msra.mxu0 0.0
        %2131 = vmatprep.subr.mxu0 0.0
        %2132 = vmatpush2.msra.mxu0 0.0
        %2133 = vmatprep.subr.mxu0 0.0
        %2134 = vmatpush2.msra.mxu0 0.0
        %2135 = vmatprep.subr.mxu0 0.0
        %2136 = vmatpush2.msra.mxu0 0.0
        %2137 = vmatprep.subr.mxu0 0.0
        %2138 = vmatpush2.msra.mxu0 0.0
        %2139 = vmatprep.subr.mxu0 0.0
        %2140 = vmatpush2.msra.mxu0 0.0
        %2141 = vmatprep.mubr.f32.mxu0 0.0
        %2142 = vmatmul.mubr.f32.gmra.mxu0 %v2052
        %v2143 = vpop.f32.mrf.mxu0
        %v2144 = vadd.f32 %v2075, %v2143
        %v2145 = vpop.f32.mrf.mxu0
        %2146 = vmatprep.mubr.f32.mxu0 0.0
        %2147 = vmatmul.mubr.f32.gmra.mxu0 %v2053
        %v2148 = vpop.f32.mrf.mxu0
        %v2149 = vadd.f32 %v2075, %v2148
        %v2150 = vpop.f32.mrf.mxu0
        %2151 = vdwg.mxu0
        %v2152 = vadd.f32 %v1946, %v2144
        %v2153 = vadd.f32 %v1947, %v2149
        %v2154 = vld [vmem:[%s15] sm:$0x1]
        %v2155 = vld [vmem:[%s16] sm:$0x1]
        %v2156 = vsel %vm801, %v2152, 0.0
        %2157 = vadd.xlane.f32.xlu0 %v2156
        %v2158 = vpop.xlane.xlu0 %2157
        %v2159 = vsel %vm801, %v2153, 0.0
        %2160 = vadd.xlane.f32.xlu0 %v2159
        %v2161 = vpop.xlane.xlu0 %2160
        %v2162 = vmul.f32 %v2158, %v808
        %v2163 = vmul.f32 %v2161, %v808
        %v2164 = vsub.f32 %v2152, %v2162
        %v2165 = vsub.f32 %v2153, %v2163
        %v2166 = vmul.f32 %v2164, %v2164
        %v2167 = vmul.f32 %v2165, %v2165
        %v2168 = vsel %vm801, %v2166, 0.0
        %2169 = vadd.xlane.f32.xlu0 %v2168
        %v2170 = vpop.xlane.xlu0 %2169
        %v2171 = vsel %vm801, %v2167, 0.0
        %2172 = vadd.xlane.f32.xlu0 %v2171
        %v2173 = vpop.xlane.xlu0 %2172
        %v2174 = vmul.f32 %v2170, %v808
        %v2175 = vmul.f32 %v2173, %v808
        %v2176 = vadd.f32 %v2174, 1e-12
        %v2177 = vadd.f32 %v2175, 1e-12
        %v2178 = vrsqrt.pop %v2176
        %v2179 = vrsqrt.pop %v2177
        %v2180 = vmul.f32 %v2164, %v2178
        %v2181 = vmul.f32 %v2165, %v2179
        %v2183 = vlaneseq
        %v2184 = vshrl.u32 %v2183, 7
        %v2185 = vsub.s32 0, %v2184
        %v2186 = vrot.slane %v2154, %v2185
        %v2188 = vmul.f32 %v2180, %v2186
        %v2189 = vmul.f32 %v2181, %v2186
        %v2191 = vlaneseq
        %v2192 = vshrl.u32 %v2191, 7
        %v2193 = vsub.s32 0, %v2192
        %v2194 = vrot.slane %v2155, %v2193
        %v2196 = vadd.f32 %v2188, %v2194
        %v2197 = vadd.f32 %v2189, %v2194
        %s2198 = scalar_lea.vmem %s5, 128
        %v2199 = vld [vmem:[%s2198] sm:$0xff]
        %v2200 = vld [vmem:[%s2198 + $0x8] sm:$0xff]
        %v2201 = vld [vmem:[%s2198 + $0x10] sm:$0xff]
        %v2202 = vld [vmem:[%s2198 + $0x18] sm:$0xff]
        %v2203 = vld [vmem:[%s2198 + $0x20] sm:$0xff]
        %v2204 = vld [vmem:[%s2198 + $0x28] sm:$0xff]
        %v2205 = vld [vmem:[%s2198 + $0x30] sm:$0xff]
        %v2206 = vld [vmem:[%s2198 + $0x38] sm:$0xff]
        %v2207 = vld [vmem:[%s2198 + $0x40] sm:$0xff]
        %v2208 = vld [vmem:[%s2198 + $0x48] sm:$0xff]
        %v2209 = vld [vmem:[%s2198 + $0x50] sm:$0xff]
        %v2210 = vld [vmem:[%s2198 + $0x58] sm:$0xff]
        %v2211 = vld [vmem:[%s2198 + $0x60] sm:$0xff]
        %v2212 = vld [vmem:[%s2198 + $0x68] sm:$0xff]
        %v2213 = vld [vmem:[%s2198 + $0x70] sm:$0xff]
        %v2214 = vld [vmem:[%s2198 + $0x78] sm:$0xff]
        %s2215 = scalar_lea.vmem %s6, 2
        %v2216 = vld [vmem:[%s2215] sm:$0x3]
        %v2218 = vlaneseq
        %v2219 = vshrl.u32 %v2218, 7
        %v2220 = vsub.s32 0, %v2219
        %v2221 = vrot.slane %v2216, %v2220
        %v2222 = vlaneseq
        %v2223 = vshrl.u32 %v2222, 7
        %v2224 = vsub.s32 1, %v2223
        %v2225 = vrot.slane %v2216, %v2224
        %v2229 = vsel %vm801, %v2196, 0
        %v2232 = vsel %vm801, %v2197, 0
        %2234 = vmatprep.subr.mxu0 0.0
        %2235 = vmatpush1.msra.mxu0 0.0
        %2236 = vmatprep.subr.mxu0 0.0
        %2237 = vmatpush1.msra.mxu0 0.0
        %2238 = vmatprep.subr.mxu0 0.0
        %2239 = vmatpush1.msra.mxu0 0.0
        %2240 = vmatprep.subr.mxu0 0.0
        %2241 = vmatpush1.msra.mxu0 0.0
        %2242 = vmatprep.subr.mxu0 0.0
        %2243 = vmatpush1.msra.mxu0 0.0
        %2244 = vmatprep.subr.mxu0 0.0
        %2245 = vmatpush1.msra.mxu0 0.0
        %2246 = vmatprep.subr.mxu0 0.0
        %2247 = vmatpush1.msra.mxu0 0.0
        %2248 = vmatprep.subr.mxu0 0.0
        %2249 = vmatpush1.msra.mxu0 0.0
        %2250 = vmatprep.subr.mxu0 %v2214
        %2251 = vmatpush1.msra.mxu0 %v2213
        %2252 = vmatprep.subr.mxu0 %v2212
        %2253 = vmatpush1.msra.mxu0 %v2211
        %2254 = vmatprep.subr.mxu0 %v2210
        %2255 = vmatpush1.msra.mxu0 %v2209
        %2256 = vmatprep.subr.mxu0 %v2208
        %2257 = vmatpush1.msra.mxu0 %v2207
        %2258 = vmatprep.subr.mxu0 %v2206
        %2259 = vmatpush1.msra.mxu0 %v2205
        %2260 = vmatprep.subr.mxu0 %v2204
        %2261 = vmatpush1.msra.mxu0 %v2203
        %2262 = vmatprep.subr.mxu0 %v2202
        %2263 = vmatpush1.msra.mxu0 %v2201
        %2264 = vmatprep.subr.mxu0 %v2200
        %2265 = vmatpush1.msra.mxu0 %v2199
        %2266 = vmatprep.subr.mxu0 0.0
        %2267 = vmatpush2.msra.mxu0 0.0
        %2268 = vmatprep.subr.mxu0 0.0
        %2269 = vmatpush2.msra.mxu0 0.0
        %2270 = vmatprep.subr.mxu0 0.0
        %2271 = vmatpush2.msra.mxu0 0.0
        %2272 = vmatprep.subr.mxu0 0.0
        %2273 = vmatpush2.msra.mxu0 0.0
        %2274 = vmatprep.subr.mxu0 0.0
        %2275 = vmatpush2.msra.mxu0 0.0
        %2276 = vmatprep.subr.mxu0 0.0
        %2277 = vmatpush2.msra.mxu0 0.0
        %2278 = vmatprep.subr.mxu0 0.0
        %2279 = vmatpush2.msra.mxu0 0.0
        %2280 = vmatprep.subr.mxu0 0.0
        %2281 = vmatpush2.msra.mxu0 0.0
        %2282 = vmatprep.subr.mxu0 0.0
        %2283 = vmatpush2.msra.mxu0 0.0
        %2284 = vmatprep.subr.mxu0 0.0
        %2285 = vmatpush2.msra.mxu0 0.0
        %2286 = vmatprep.subr.mxu0 0.0
        %2287 = vmatpush2.msra.mxu0 0.0
        %2288 = vmatprep.subr.mxu0 0.0
        %2289 = vmatpush2.msra.mxu0 0.0
        %2290 = vmatprep.subr.mxu0 0.0
        %2291 = vmatpush2.msra.mxu0 0.0
        %2292 = vmatprep.subr.mxu0 0.0
        %2293 = vmatpush2.msra.mxu0 0.0
        %2294 = vmatprep.subr.mxu0 0.0
        %2295 = vmatpush2.msra.mxu0 0.0
        %2296 = vmatprep.subr.mxu0 0.0
        %2297 = vmatpush2.msra.mxu0 0.0
        %2298 = vmatprep.mubr.f32.mxu0 0.0
        %2299 = vmatmul.mubr.f32.gmra.mxu0 %v2229
        %v2300 = vpop.f32.mrf.mxu0
        %v2301 = vadd.f32 %v2221, %v2300
        %v2302 = vpop.f32.mrf.mxu0
        %v2303 = vadd.f32 %v2225, %v2302
        %2304 = vmatprep.mubr.f32.mxu0 0.0
        %2305 = vmatmul.mubr.f32.gmra.mxu0 %v2232
        %v2306 = vpop.f32.mrf.mxu0
        %v2307 = vadd.f32 %v2221, %v2306
        %v2308 = vpop.f32.mrf.mxu0
        %v2309 = vadd.f32 %v2225, %v2308
        %2310 = vdwg.mxu0
        %2313 = vrot.lane.b32.xlu0 %v2301, 64
        %v2314 = vpop.permute.xlu0 %2313
        %2315 = vrot.lane.b32.xlu0 %v2307, 64
        %v2316 = vpop.permute.xlu0 %2315
        %v2317 = vsel %vm963, %v2301, 0
        %v2319 = vsel %vm963, %v2307, 0
        %v2321 = vsel %vm963, %v2314, 0
        %v2323 = vsel %vm963, %v2316, 0
        %2325 = vmatprep.subr.mxu0 0.0
        %2326 = vmatpush1.xpose.msra.mxu0 0.0
        %2327 = vmatprep.subr.mxu0 0.0
        %2328 = vmatpush1.xpose.msra.mxu0 0.0
        %2329 = vmatprep.subr.mxu0 0.0
        %2330 = vmatpush1.xpose.msra.mxu0 0.0
        %2331 = vmatprep.subr.mxu0 0.0
        %2332 = vmatpush1.xpose.msra.mxu0 0.0
        %2333 = vmatprep.subr.mxu0 0.0
        %2334 = vmatpush1.xpose.msra.mxu0 0.0
        %2335 = vmatprep.subr.mxu0 0.0
        %2336 = vmatpush1.xpose.msra.mxu0 0.0
        %2337 = vmatprep.subr.mxu0 0.0
        %2338 = vmatpush1.xpose.msra.mxu0 0.0
        %2339 = vmatprep.subr.mxu0 0.0
        %2340 = vmatpush1.xpose.msra.mxu0 0.0
        %2341 = vmatprep.subr.mxu0 0.0
        %2342 = vmatpush1.xpose.msra.mxu0 0.0
        %2343 = vmatprep.subr.mxu0 0.0
        %2344 = vmatpush1.xpose.msra.mxu0 0.0
        %2345 = vmatprep.subr.mxu0 0.0
        %2346 = vmatpush1.xpose.msra.mxu0 0.0
        %2347 = vmatprep.subr.mxu0 0.0
        %2348 = vmatpush1.xpose.msra.mxu0 0.0
        %2349 = vmatprep.subr.mxu0 0.0
        %2350 = vmatpush1.xpose.msra.mxu0 0.0
        %2351 = vmatprep.subr.mxu0 0.0
        %2352 = vmatpush1.xpose.msra.mxu0 0.0
        %2353 = vmatprep.subr.mxu0 0.0
        %2354 = vmatpush1.xpose.msra.mxu0 %v2323
        %2355 = vmatprep.subr.mxu0 0.0
        %2356 = vmatpush1.xpose.msra.mxu0 %v2321
        %2357 = vmatprep.subr.mxu0 0.0
        %2358 = vmatpush2.xpose.msra.mxu0 0.0
        %2359 = vmatprep.subr.mxu0 0.0
        %2360 = vmatpush2.xpose.msra.mxu0 0.0
        %2361 = vmatprep.subr.mxu0 0.0
        %2362 = vmatpush2.xpose.msra.mxu0 0.0
        %2363 = vmatprep.subr.mxu0 0.0
        %2364 = vmatpush2.xpose.msra.mxu0 0.0
        %2365 = vmatprep.subr.mxu0 0.0
        %2366 = vmatpush2.xpose.msra.mxu0 0.0
        %2367 = vmatprep.subr.mxu0 0.0
        %2368 = vmatpush2.xpose.msra.mxu0 0.0
        %2369 = vmatprep.subr.mxu0 0.0
        %2370 = vmatpush2.xpose.msra.mxu0 0.0
        %2371 = vmatprep.subr.mxu0 0.0
        %2372 = vmatpush2.xpose.msra.mxu0 0.0
        %2373 = vmatprep.subr.mxu0 0.0
        %2374 = vmatpush2.xpose.msra.mxu0 0.0
        %2375 = vmatprep.subr.mxu0 0.0
        %2376 = vmatpush2.xpose.msra.mxu0 0.0
        %2377 = vmatprep.subr.mxu0 0.0
        %2378 = vmatpush2.xpose.msra.mxu0 0.0
        %2379 = vmatprep.subr.mxu0 0.0
        %2380 = vmatpush2.xpose.msra.mxu0 0.0
        %2381 = vmatprep.subr.mxu0 0.0
        %2382 = vmatpush2.xpose.msra.mxu0 0.0
        %2383 = vmatprep.subr.mxu0 0.0
        %2384 = vmatpush2.xpose.msra.mxu0 0.0
        %2385 = vmatprep.subr.mxu0 0.0
        %2386 = vmatpush2.xpose.msra.mxu0 0.0
        %2387 = vmatprep.subr.mxu0 0.0
        %2388 = vmatpush2.xpose.msra.mxu0 0.0
        %2389 = vmatprep.mubr.f32.mxu0 0.0
        %2390 = vmatmul.mubr.f32.gmra.mxu0 %v2317
        %v2391 = vpop.f32.mrf.mxu0
        %v2392 = vadd.f32 0.0, %v2391
        %v2393 = vpop.f32.mrf.mxu0
        %2394 = vmatprep.mubr.f32.mxu0 0.0
        %2395 = vmatmul.mubr.f32.gmra.mxu0 %v2319
        %v2396 = vpop.f32.mrf.mxu0
        %v2397 = vadd.f32 0.0, %v2396
        %v2398 = vpop.f32.mrf.mxu0
        %2399 = vdwg.mxu0
        %v2400 = vmul.f32 %v2392, 0.25
        %v2401 = vmul.f32 %v2397, 0.25
        %v2402 = vadd.f32 %v2400, %v1053
        %v2403 = vadd.f32 %v2401, %v1053
        %v2404 = vsel %vm963, %v2402, -inf
        %2405 = vmax.xlane.f32.xlu0 %v2404
        %v2406 = vpop.xlane.xlu0 %2405
        %v2407 = vsel %vm963, %v2403, -inf
        %2408 = vmax.xlane.f32.xlu0 %v2407
        %v2409 = vpop.xlane.xlu0 %2408
        %v2410 = vsub.f32 %v2402, %v2406
        %v2411 = vsub.f32 %v2403, %v2409
        %v2412 = vmul.f32 %v2410, 1.442695
        %v2413 = vpow.pop %v2412
        %v2414 = vmul.f32 %v2411, 1.442695
        %v2415 = vpow.pop %v2414
        %v2416 = vsel %vm963, %v2413, 0.0
        %2417 = vadd.xlane.f32.xlu0 %v2416
        %v2418 = vpop.xlane.xlu0 %2417
        %v2419 = vsel %vm963, %v2415, 0.0
        %2420 = vadd.xlane.f32.xlu0 %v2419
        %v2421 = vpop.xlane.xlu0 %2420
        %v2422 = vrcp.pop %v2418
        %v2423 = vrcp.pop %v2421
        %v2424 = vmul.f32 %v2413, %v2422
        %v2425 = vmul.f32 %v2415, %v2423
        %v2427 = vsel %vm963, %v2424, 0
        %v2430 = vsel %vm963, %v2425, 0
        %2432 = vmatprep.subr.mxu0 0.0
        %2433 = vmatpush1.msra.mxu0 0.0
        %2434 = vmatprep.subr.mxu0 0.0
        %2435 = vmatpush1.msra.mxu0 0.0
        %2436 = vmatprep.subr.mxu0 0.0
        %2437 = vmatpush1.msra.mxu0 0.0
        %2438 = vmatprep.subr.mxu0 0.0
        %2439 = vmatpush1.msra.mxu0 0.0
        %2440 = vmatprep.subr.mxu0 0.0
        %2441 = vmatpush1.msra.mxu0 0.0
        %2442 = vmatprep.subr.mxu0 0.0
        %2443 = vmatpush1.msra.mxu0 0.0
        %2444 = vmatprep.subr.mxu0 0.0
        %2445 = vmatpush1.msra.mxu0 0.0
        %2446 = vmatprep.subr.mxu0 0.0
        %2447 = vmatpush1.msra.mxu0 0.0
        %2448 = vmatprep.subr.mxu0 0.0
        %2449 = vmatpush1.msra.mxu0 0.0
        %2450 = vmatprep.subr.mxu0 0.0
        %2451 = vmatpush1.msra.mxu0 0.0
        %2452 = vmatprep.subr.mxu0 0.0
        %2453 = vmatpush1.msra.mxu0 0.0
        %2454 = vmatprep.subr.mxu0 0.0
        %2455 = vmatpush1.msra.mxu0 0.0
        %2456 = vmatprep.subr.mxu0 0.0
        %2457 = vmatpush1.msra.mxu0 0.0
        %2458 = vmatprep.subr.mxu0 0.0
        %2459 = vmatpush1.msra.mxu0 0.0
        %2460 = vmatprep.subr.mxu0 0.0
        %2461 = vmatpush1.msra.mxu0 %v2309
        %2462 = vmatprep.subr.mxu0 0.0
        %2463 = vmatpush1.msra.mxu0 %v2303
        %2464 = vmatprep.subr.mxu0 0.0
        %2465 = vmatpush2.msra.mxu0 0.0
        %2466 = vmatprep.subr.mxu0 0.0
        %2467 = vmatpush2.msra.mxu0 0.0
        %2468 = vmatprep.subr.mxu0 0.0
        %2469 = vmatpush2.msra.mxu0 0.0
        %2470 = vmatprep.subr.mxu0 0.0
        %2471 = vmatpush2.msra.mxu0 0.0
        %2472 = vmatprep.subr.mxu0 0.0
        %2473 = vmatpush2.msra.mxu0 0.0
        %2474 = vmatprep.subr.mxu0 0.0
        %2475 = vmatpush2.msra.mxu0 0.0
        %2476 = vmatprep.subr.mxu0 0.0
        %2477 = vmatpush2.msra.mxu0 0.0
        %2478 = vmatprep.subr.mxu0 0.0
        %2479 = vmatpush2.msra.mxu0 0.0
        %2480 = vmatprep.subr.mxu0 0.0
        %2481 = vmatpush2.msra.mxu0 0.0
        %2482 = vmatprep.subr.mxu0 0.0
        %2483 = vmatpush2.msra.mxu0 0.0
        %2484 = vmatprep.subr.mxu0 0.0
        %2485 = vmatpush2.msra.mxu0 0.0
        %2486 = vmatprep.subr.mxu0 0.0
        %2487 = vmatpush2.msra.mxu0 0.0
        %2488 = vmatprep.subr.mxu0 0.0
        %2489 = vmatpush2.msra.mxu0 0.0
        %2490 = vmatprep.subr.mxu0 0.0
        %2491 = vmatpush2.msra.mxu0 0.0
        %2492 = vmatprep.subr.mxu0 0.0
        %2493 = vmatpush2.msra.mxu0 0.0
        %2494 = vmatprep.subr.mxu0 0.0
        %2495 = vmatpush2.msra.mxu0 0.0
        %2496 = vmatprep.mubr.f32.mxu0 0.0
        %2497 = vmatmul.mubr.f32.gmra.mxu0 %v2427
        %v2498 = vpop.f32.mrf.mxu0
        %v2499 = vadd.f32 0.0, %v2498
        %v2500 = vpop.f32.mrf.mxu0
        %2501 = vmatprep.mubr.f32.mxu0 0.0
        %2502 = vmatmul.mubr.f32.gmra.mxu0 %v2430
        %v2503 = vpop.f32.mrf.mxu0
        %v2504 = vadd.f32 0.0, %v2503
        %v2505 = vpop.f32.mrf.mxu0
        %2506 = vdwg.mxu0
        %2507 = vrot.lane.b32.xlu0 %v2301, 112
        %v2508 = vpop.permute.xlu0 %2507
        %2509 = vrot.lane.b32.xlu0 %v2307, 112
        %v2510 = vpop.permute.xlu0 %2509
        %2511 = vrot.lane.b32.xlu0 %v2301, 48
        %v2512 = vpop.permute.xlu0 %2511
        %2513 = vrot.lane.b32.xlu0 %v2307, 48
        %v2514 = vpop.permute.xlu0 %2513
        %v2515 = vsel %vm963, %v2508, 0
        %v2517 = vsel %vm963, %v2510, 0
        %v2519 = vsel %vm963, %v2512, 0
        %v2521 = vsel %vm963, %v2514, 0
        %2523 = vmatprep.subr.mxu0 0.0
        %2524 = vmatpush1.xpose.msra.mxu0 0.0
        %2525 = vmatprep.subr.mxu0 0.0
        %2526 = vmatpush1.xpose.msra.mxu0 0.0
        %2527 = vmatprep.subr.mxu0 0.0
        %2528 = vmatpush1.xpose.msra.mxu0 0.0
        %2529 = vmatprep.subr.mxu0 0.0
        %2530 = vmatpush1.xpose.msra.mxu0 0.0
        %2531 = vmatprep.subr.mxu0 0.0
        %2532 = vmatpush1.xpose.msra.mxu0 0.0
        %2533 = vmatprep.subr.mxu0 0.0
        %2534 = vmatpush1.xpose.msra.mxu0 0.0
        %2535 = vmatprep.subr.mxu0 0.0
        %2536 = vmatpush1.xpose.msra.mxu0 0.0
        %2537 = vmatprep.subr.mxu0 0.0
        %2538 = vmatpush1.xpose.msra.mxu0 0.0
        %2539 = vmatprep.subr.mxu0 0.0
        %2540 = vmatpush1.xpose.msra.mxu0 0.0
        %2541 = vmatprep.subr.mxu0 0.0
        %2542 = vmatpush1.xpose.msra.mxu0 0.0
        %2543 = vmatprep.subr.mxu0 0.0
        %2544 = vmatpush1.xpose.msra.mxu0 0.0
        %2545 = vmatprep.subr.mxu0 0.0
        %2546 = vmatpush1.xpose.msra.mxu0 0.0
        %2547 = vmatprep.subr.mxu0 0.0
        %2548 = vmatpush1.xpose.msra.mxu0 0.0
        %2549 = vmatprep.subr.mxu0 0.0
        %2550 = vmatpush1.xpose.msra.mxu0 0.0
        %2551 = vmatprep.subr.mxu0 0.0
        %2552 = vmatpush1.xpose.msra.mxu0 %v2521
        %2553 = vmatprep.subr.mxu0 0.0
        %2554 = vmatpush1.xpose.msra.mxu0 %v2519
        %2555 = vmatprep.subr.mxu0 0.0
        %2556 = vmatpush2.xpose.msra.mxu0 0.0
        %2557 = vmatprep.subr.mxu0 0.0
        %2558 = vmatpush2.xpose.msra.mxu0 0.0
        %2559 = vmatprep.subr.mxu0 0.0
        %2560 = vmatpush2.xpose.msra.mxu0 0.0
        %2561 = vmatprep.subr.mxu0 0.0
        %2562 = vmatpush2.xpose.msra.mxu0 0.0
        %2563 = vmatprep.subr.mxu0 0.0
        %2564 = vmatpush2.xpose.msra.mxu0 0.0
        %2565 = vmatprep.subr.mxu0 0.0
        %2566 = vmatpush2.xpose.msra.mxu0 0.0
        %2567 = vmatprep.subr.mxu0 0.0
        %2568 = vmatpush2.xpose.msra.mxu0 0.0
        %2569 = vmatprep.subr.mxu0 0.0
        %2570 = vmatpush2.xpose.msra.mxu0 0.0
        %2571 = vmatprep.subr.mxu0 0.0
        %2572 = vmatpush2.xpose.msra.mxu0 0.0
        %2573 = vmatprep.subr.mxu0 0.0
        %2574 = vmatpush2.xpose.msra.mxu0 0.0
        %2575 = vmatprep.subr.mxu0 0.0
        %2576 = vmatpush2.xpose.msra.mxu0 0.0
        %2577 = vmatprep.subr.mxu0 0.0
        %2578 = vmatpush2.xpose.msra.mxu0 0.0
        %2579 = vmatprep.subr.mxu0 0.0
        %2580 = vmatpush2.xpose.msra.mxu0 0.0
        %2581 = vmatprep.subr.mxu0 0.0
        %2582 = vmatpush2.xpose.msra.mxu0 0.0
        %2583 = vmatprep.subr.mxu0 0.0
        %2584 = vmatpush2.xpose.msra.mxu0 0.0
        %2585 = vmatprep.subr.mxu0 0.0
        %2586 = vmatpush2.xpose.msra.mxu0 0.0
        %2587 = vmatprep.mubr.f32.mxu0 0.0
        %2588 = vmatmul.mubr.f32.gmra.mxu0 %v2515
        %v2589 = vpop.f32.mrf.mxu0
        %v2590 = vadd.f32 0.0, %v2589
        %v2591 = vpop.f32.mrf.mxu0
        %2592 = vmatprep.mubr.f32.mxu0 0.0
        %2593 = vmatmul.mubr.f32.gmra.mxu0 %v2517
        %v2594 = vpop.f32.mrf.mxu0
        %v2595 = vadd.f32 0.0, %v2594
        %v2596 = vpop.f32.mrf.mxu0
        %2597 = vdwg.mxu0
        %v2598 = vmul.f32 %v2590, 0.25
        %v2599 = vmul.f32 %v2595, 0.25
        %v2600 = vadd.f32 %v2598, %v1053
        %v2601 = vadd.f32 %v2599, %v1053
        %v2602 = vsel %vm963, %v2600, -inf
        %2603 = vmax.xlane.f32.xlu0 %v2602
        %v2604 = vpop.xlane.xlu0 %2603
        %v2605 = vsel %vm963, %v2601, -inf
        %2606 = vmax.xlane.f32.xlu0 %v2605
        %v2607 = vpop.xlane.xlu0 %2606
        %v2608 = vsub.f32 %v2600, %v2604
        %v2609 = vsub.f32 %v2601, %v2607
        %v2610 = vmul.f32 %v2608, 1.442695
        %v2611 = vpow.pop %v2610
        %v2612 = vmul.f32 %v2609, 1.442695
        %v2613 = vpow.pop %v2612
        %v2614 = vsel %vm963, %v2611, 0.0
        %2615 = vadd.xlane.f32.xlu0 %v2614
        %v2616 = vpop.xlane.xlu0 %2615
        %v2617 = vsel %vm963, %v2613, 0.0
        %2618 = vadd.xlane.f32.xlu0 %v2617
        %v2619 = vpop.xlane.xlu0 %2618
        %v2620 = vrcp.pop %v2616
        %v2621 = vrcp.pop %v2619
        %v2622 = vmul.f32 %v2611, %v2620
        %v2623 = vmul.f32 %v2613, %v2621
        %2626 = vrot.lane.b32.xlu0 %v2303, 112
        %v2627 = vpop.permute.xlu0 %2626
        %2628 = vrot.lane.b32.xlu0 %v2309, 112
        %v2629 = vpop.permute.xlu0 %2628
        %v2633 = vsel %vm963, %v2622, 0
        %v2636 = vsel %vm963, %v2623, 0
        %2638 = vmatprep.subr.mxu0 0.0
        %2639 = vmatpush1.msra.mxu0 0.0
        %2640 = vmatprep.subr.mxu0 0.0
        %2641 = vmatpush1.msra.mxu0 0.0
        %2642 = vmatprep.subr.mxu0 0.0
        %2643 = vmatpush1.msra.mxu0 0.0
        %2644 = vmatprep.subr.mxu0 0.0
        %2645 = vmatpush1.msra.mxu0 0.0
        %2646 = vmatprep.subr.mxu0 0.0
        %2647 = vmatpush1.msra.mxu0 0.0
        %2648 = vmatprep.subr.mxu0 0.0
        %2649 = vmatpush1.msra.mxu0 0.0
        %2650 = vmatprep.subr.mxu0 0.0
        %2651 = vmatpush1.msra.mxu0 0.0
        %2652 = vmatprep.subr.mxu0 0.0
        %2653 = vmatpush1.msra.mxu0 0.0
        %2654 = vmatprep.subr.mxu0 0.0
        %2655 = vmatpush1.msra.mxu0 0.0
        %2656 = vmatprep.subr.mxu0 0.0
        %2657 = vmatpush1.msra.mxu0 0.0
        %2658 = vmatprep.subr.mxu0 0.0
        %2659 = vmatpush1.msra.mxu0 0.0
        %2660 = vmatprep.subr.mxu0 0.0
        %2661 = vmatpush1.msra.mxu0 0.0
        %2662 = vmatprep.subr.mxu0 0.0
        %2663 = vmatpush1.msra.mxu0 0.0
        %2664 = vmatprep.subr.mxu0 0.0
        %2665 = vmatpush1.msra.mxu0 0.0
        %2666 = vmatprep.subr.mxu0 0.0
        %2667 = vmatpush1.msra.mxu0 %v2629
        %2668 = vmatprep.subr.mxu0 0.0
        %2669 = vmatpush1.msra.mxu0 %v2627
        %2670 = vmatprep.subr.mxu0 0.0
        %2671 = vmatpush2.msra.mxu0 0.0
        %2672 = vmatprep.subr.mxu0 0.0
        %2673 = vmatpush2.msra.mxu0 0.0
        %2674 = vmatprep.subr.mxu0 0.0
        %2675 = vmatpush2.msra.mxu0 0.0
        %2676 = vmatprep.subr.mxu0 0.0
        %2677 = vmatpush2.msra.mxu0 0.0
        %2678 = vmatprep.subr.mxu0 0.0
        %2679 = vmatpush2.msra.mxu0 0.0
        %2680 = vmatprep.subr.mxu0 0.0
        %2681 = vmatpush2.msra.mxu0 0.0
        %2682 = vmatprep.subr.mxu0 0.0
        %2683 = vmatpush2.msra.mxu0 0.0
        %2684 = vmatprep.subr.mxu0 0.0
        %2685 = vmatpush2.msra.mxu0 0.0
        %2686 = vmatprep.subr.mxu0 0.0
        %2687 = vmatpush2.msra.mxu0 0.0
        %2688 = vmatprep.subr.mxu0 0.0
        %2689 = vmatpush2.msra.mxu0 0.0
        %2690 = vmatprep.subr.mxu0 0.0
        %2691 = vmatpush2.msra.mxu0 0.0
        %2692 = vmatprep.subr.mxu0 0.0
        %2693 = vmatpush2.msra.mxu0 0.0
        %2694 = vmatprep.subr.mxu0 0.0
        %2695 = vmatpush2.msra.mxu0 0.0
        %2696 = vmatprep.subr.mxu0 0.0
        %2697 = vmatpush2.msra.mxu0 0.0
        %2698 = vmatprep.subr.mxu0 0.0
        %2699 = vmatpush2.msra.mxu0 0.0
        %2700 = vmatprep.subr.mxu0 0.0
        %2701 = vmatpush2.msra.mxu0 0.0
        %2702 = vmatprep.mubr.f32.mxu0 0.0
        %2703 = vmatmul.mubr.f32.gmra.mxu0 %v2633
        %v2704 = vpop.f32.mrf.mxu0
        %v2705 = vadd.f32 0.0, %v2704
        %v2706 = vpop.f32.mrf.mxu0
        %2707 = vmatprep.mubr.f32.mxu0 0.0
        %2708 = vmatmul.mubr.f32.gmra.mxu0 %v2636
        %v2709 = vpop.f32.mrf.mxu0
        %v2710 = vadd.f32 0.0, %v2709
        %v2711 = vpop.f32.mrf.mxu0
        %2712 = vdwg.mxu0
        %2713 = vrot.lane.b32.xlu0 %v2301, 96
        %v2714 = vpop.permute.xlu0 %2713
        %2715 = vrot.lane.b32.xlu0 %v2307, 96
        %v2716 = vpop.permute.xlu0 %2715
        %2717 = vrot.lane.b32.xlu0 %v2301, 32
        %v2718 = vpop.permute.xlu0 %2717
        %2719 = vrot.lane.b32.xlu0 %v2307, 32
        %v2720 = vpop.permute.xlu0 %2719
        %v2721 = vsel %vm963, %v2714, 0
        %v2723 = vsel %vm963, %v2716, 0
        %v2725 = vsel %vm963, %v2718, 0
        %v2727 = vsel %vm963, %v2720, 0
        %2729 = vmatprep.subr.mxu0 0.0
        %2730 = vmatpush1.xpose.msra.mxu0 0.0
        %2731 = vmatprep.subr.mxu0 0.0
        %2732 = vmatpush1.xpose.msra.mxu0 0.0
        %2733 = vmatprep.subr.mxu0 0.0
        %2734 = vmatpush1.xpose.msra.mxu0 0.0
        %2735 = vmatprep.subr.mxu0 0.0
        %2736 = vmatpush1.xpose.msra.mxu0 0.0
        %2737 = vmatprep.subr.mxu0 0.0
        %2738 = vmatpush1.xpose.msra.mxu0 0.0
        %2739 = vmatprep.subr.mxu0 0.0
        %2740 = vmatpush1.xpose.msra.mxu0 0.0
        %2741 = vmatprep.subr.mxu0 0.0
        %2742 = vmatpush1.xpose.msra.mxu0 0.0
        %2743 = vmatprep.subr.mxu0 0.0
        %2744 = vmatpush1.xpose.msra.mxu0 0.0
        %2745 = vmatprep.subr.mxu0 0.0
        %2746 = vmatpush1.xpose.msra.mxu0 0.0
        %2747 = vmatprep.subr.mxu0 0.0
        %2748 = vmatpush1.xpose.msra.mxu0 0.0
        %2749 = vmatprep.subr.mxu0 0.0
        %2750 = vmatpush1.xpose.msra.mxu0 0.0
        %2751 = vmatprep.subr.mxu0 0.0
        %2752 = vmatpush1.xpose.msra.mxu0 0.0
        %2753 = vmatprep.subr.mxu0 0.0
        %2754 = vmatpush1.xpose.msra.mxu0 0.0
        %2755 = vmatprep.subr.mxu0 0.0
        %2756 = vmatpush1.xpose.msra.mxu0 0.0
        %2757 = vmatprep.subr.mxu0 0.0
        %2758 = vmatpush1.xpose.msra.mxu0 %v2727
        %2759 = vmatprep.subr.mxu0 0.0
        %2760 = vmatpush1.xpose.msra.mxu0 %v2725
        %2761 = vmatprep.subr.mxu0 0.0
        %2762 = vmatpush2.xpose.msra.mxu0 0.0
        %2763 = vmatprep.subr.mxu0 0.0
        %2764 = vmatpush2.xpose.msra.mxu0 0.0
        %2765 = vmatprep.subr.mxu0 0.0
        %2766 = vmatpush2.xpose.msra.mxu0 0.0
        %2767 = vmatprep.subr.mxu0 0.0
        %2768 = vmatpush2.xpose.msra.mxu0 0.0
        %2769 = vmatprep.subr.mxu0 0.0
        %2770 = vmatpush2.xpose.msra.mxu0 0.0
        %2771 = vmatprep.subr.mxu0 0.0
        %2772 = vmatpush2.xpose.msra.mxu0 0.0
        %2773 = vmatprep.subr.mxu0 0.0
        %2774 = vmatpush2.xpose.msra.mxu0 0.0
        %2775 = vmatprep.subr.mxu0 0.0
        %2776 = vmatpush2.xpose.msra.mxu0 0.0
        %2777 = vmatprep.subr.mxu0 0.0
        %2778 = vmatpush2.xpose.msra.mxu0 0.0
        %2779 = vmatprep.subr.mxu0 0.0
        %2780 = vmatpush2.xpose.msra.mxu0 0.0
        %2781 = vmatprep.subr.mxu0 0.0
        %2782 = vmatpush2.xpose.msra.mxu0 0.0
        %2783 = vmatprep.subr.mxu0 0.0
        %2784 = vmatpush2.xpose.msra.mxu0 0.0
        %2785 = vmatprep.subr.mxu0 0.0
        %2786 = vmatpush2.xpose.msra.mxu0 0.0
        %2787 = vmatprep.subr.mxu0 0.0
        %2788 = vmatpush2.xpose.msra.mxu0 0.0
        %2789 = vmatprep.subr.mxu0 0.0
        %2790 = vmatpush2.xpose.msra.mxu0 0.0
        %2791 = vmatprep.subr.mxu0 0.0
        %2792 = vmatpush2.xpose.msra.mxu0 0.0
        %2793 = vmatprep.mubr.f32.mxu0 0.0
        %2794 = vmatmul.mubr.f32.gmra.mxu0 %v2721
        %v2795 = vpop.f32.mrf.mxu0
        %v2796 = vadd.f32 0.0, %v2795
        %v2797 = vpop.f32.mrf.mxu0
        %2798 = vmatprep.mubr.f32.mxu0 0.0
        %2799 = vmatmul.mubr.f32.gmra.mxu0 %v2723
        %v2800 = vpop.f32.mrf.mxu0
        %v2801 = vadd.f32 0.0, %v2800
        %v2802 = vpop.f32.mrf.mxu0
        %2803 = vdwg.mxu0
        %v2804 = vmul.f32 %v2796, 0.25
        %v2805 = vmul.f32 %v2801, 0.25
        %v2806 = vadd.f32 %v2804, %v1053
        %v2807 = vadd.f32 %v2805, %v1053
        %v2808 = vsel %vm963, %v2806, -inf
        %2809 = vmax.xlane.f32.xlu0 %v2808
        %v2810 = vpop.xlane.xlu0 %2809
        %v2811 = vsel %vm963, %v2807, -inf
        %2812 = vmax.xlane.f32.xlu0 %v2811
        %v2813 = vpop.xlane.xlu0 %2812
        %v2814 = vsub.f32 %v2806, %v2810
        %v2815 = vsub.f32 %v2807, %v2813
        %v2816 = vmul.f32 %v2814, 1.442695
        %v2817 = vpow.pop %v2816
        %v2818 = vmul.f32 %v2815, 1.442695
        %v2819 = vpow.pop %v2818
        %v2820 = vsel %vm963, %v2817, 0.0
        %2821 = vadd.xlane.f32.xlu0 %v2820
        %v2822 = vpop.xlane.xlu0 %2821
        %v2823 = vsel %vm963, %v2819, 0.0
        %2824 = vadd.xlane.f32.xlu0 %v2823
        %v2825 = vpop.xlane.xlu0 %2824
        %v2826 = vrcp.pop %v2822
        %v2827 = vrcp.pop %v2825
        %v2828 = vmul.f32 %v2817, %v2826
        %v2829 = vmul.f32 %v2819, %v2827
        %2830 = vrot.lane.b32.xlu0 %v2303, 96
        %v2831 = vpop.permute.xlu0 %2830
        %2832 = vrot.lane.b32.xlu0 %v2309, 96
        %v2833 = vpop.permute.xlu0 %2832
        %v2837 = vsel %vm963, %v2828, 0
        %v2840 = vsel %vm963, %v2829, 0
        %2842 = vmatprep.subr.mxu0 0.0
        %2843 = vmatpush1.msra.mxu0 0.0
        %2844 = vmatprep.subr.mxu0 0.0
        %2845 = vmatpush1.msra.mxu0 0.0
        %2846 = vmatprep.subr.mxu0 0.0
        %2847 = vmatpush1.msra.mxu0 0.0
        %2848 = vmatprep.subr.mxu0 0.0
        %2849 = vmatpush1.msra.mxu0 0.0
        %2850 = vmatprep.subr.mxu0 0.0
        %2851 = vmatpush1.msra.mxu0 0.0
        %2852 = vmatprep.subr.mxu0 0.0
        %2853 = vmatpush1.msra.mxu0 0.0
        %2854 = vmatprep.subr.mxu0 0.0
        %2855 = vmatpush1.msra.mxu0 0.0
        %2856 = vmatprep.subr.mxu0 0.0
        %2857 = vmatpush1.msra.mxu0 0.0
        %2858 = vmatprep.subr.mxu0 0.0
        %2859 = vmatpush1.msra.mxu0 0.0
        %2860 = vmatprep.subr.mxu0 0.0
        %2861 = vmatpush1.msra.mxu0 0.0
        %2862 = vmatprep.subr.mxu0 0.0
        %2863 = vmatpush1.msra.mxu0 0.0
        %2864 = vmatprep.subr.mxu0 0.0
        %2865 = vmatpush1.msra.mxu0 0.0
        %2866 = vmatprep.subr.mxu0 0.0
        %2867 = vmatpush1.msra.mxu0 0.0
        %2868 = vmatprep.subr.mxu0 0.0
        %2869 = vmatpush1.msra.mxu0 0.0
        %2870 = vmatprep.subr.mxu0 0.0
        %2871 = vmatpush1.msra.mxu0 %v2833
        %2872 = vmatprep.subr.mxu0 0.0
        %2873 = vmatpush1.msra.mxu0 %v2831
        %2874 = vmatprep.subr.mxu0 0.0
        %2875 = vmatpush2.msra.mxu0 0.0
        %2876 = vmatprep.subr.mxu0 0.0
        %2877 = vmatpush2.msra.mxu0 0.0
        %2878 = vmatprep.subr.mxu0 0.0
        %2879 = vmatpush2.msra.mxu0 0.0
        %2880 = vmatprep.subr.mxu0 0.0
        %2881 = vmatpush2.msra.mxu0 0.0
        %2882 = vmatprep.subr.mxu0 0.0
        %2883 = vmatpush2.msra.mxu0 0.0
        %2884 = vmatprep.subr.mxu0 0.0
        %2885 = vmatpush2.msra.mxu0 0.0
        %2886 = vmatprep.subr.mxu0 0.0
        %2887 = vmatpush2.msra.mxu0 0.0
        %2888 = vmatprep.subr.mxu0 0.0
        %2889 = vmatpush2.msra.mxu0 0.0
        %2890 = vmatprep.subr.mxu0 0.0
        %2891 = vmatpush2.msra.mxu0 0.0
        %2892 = vmatprep.subr.mxu0 0.0
        %2893 = vmatpush2.msra.mxu0 0.0
        %2894 = vmatprep.subr.mxu0 0.0
        %2895 = vmatpush2.msra.mxu0 0.0
        %2896 = vmatprep.subr.mxu0 0.0
        %2897 = vmatpush2.msra.mxu0 0.0
        %2898 = vmatprep.subr.mxu0 0.0
        %2899 = vmatpush2.msra.mxu0 0.0
        %2900 = vmatprep.subr.mxu0 0.0
        %2901 = vmatpush2.msra.mxu0 0.0
        %2902 = vmatprep.subr.mxu0 0.0
        %2903 = vmatpush2.msra.mxu0 0.0
        %2904 = vmatprep.subr.mxu0 0.0
        %2905 = vmatpush2.msra.mxu0 0.0
        %2906 = vmatprep.mubr.f32.mxu0 0.0
        %2907 = vmatmul.mubr.f32.gmra.mxu0 %v2837
        %v2908 = vpop.f32.mrf.mxu0
        %v2909 = vadd.f32 0.0, %v2908
        %v2910 = vpop.f32.mrf.mxu0
        %2911 = vmatprep.mubr.f32.mxu0 0.0
        %2912 = vmatmul.mubr.f32.gmra.mxu0 %v2840
        %v2913 = vpop.f32.mrf.mxu0
        %v2914 = vadd.f32 0.0, %v2913
        %v2915 = vpop.f32.mrf.mxu0
        %2916 = vdwg.mxu0
        %2917 = vrot.lane.b32.xlu0 %v2301, 80
        %v2918 = vpop.permute.xlu0 %2917
        %2919 = vrot.lane.b32.xlu0 %v2307, 80
        %v2920 = vpop.permute.xlu0 %2919
        %2921 = vrot.lane.b32.xlu0 %v2301, 16
        %v2922 = vpop.permute.xlu0 %2921
        %2923 = vrot.lane.b32.xlu0 %v2307, 16
        %v2924 = vpop.permute.xlu0 %2923
        %v2925 = vsel %vm963, %v2918, 0
        %v2927 = vsel %vm963, %v2920, 0
        %v2929 = vsel %vm963, %v2922, 0
        %v2931 = vsel %vm963, %v2924, 0
        %2933 = vmatprep.subr.mxu0 0.0
        %2934 = vmatpush1.xpose.msra.mxu0 0.0
        %2935 = vmatprep.subr.mxu0 0.0
        %2936 = vmatpush1.xpose.msra.mxu0 0.0
        %2937 = vmatprep.subr.mxu0 0.0
        %2938 = vmatpush1.xpose.msra.mxu0 0.0
        %2939 = vmatprep.subr.mxu0 0.0
        %2940 = vmatpush1.xpose.msra.mxu0 0.0
        %2941 = vmatprep.subr.mxu0 0.0
        %2942 = vmatpush1.xpose.msra.mxu0 0.0
        %2943 = vmatprep.subr.mxu0 0.0
        %2944 = vmatpush1.xpose.msra.mxu0 0.0
        %2945 = vmatprep.subr.mxu0 0.0
        %2946 = vmatpush1.xpose.msra.mxu0 0.0
        %2947 = vmatprep.subr.mxu0 0.0
        %2948 = vmatpush1.xpose.msra.mxu0 0.0
        %2949 = vmatprep.subr.mxu0 0.0
        %2950 = vmatpush1.xpose.msra.mxu0 0.0
        %2951 = vmatprep.subr.mxu0 0.0
        %2952 = vmatpush1.xpose.msra.mxu0 0.0
        %2953 = vmatprep.subr.mxu0 0.0
        %2954 = vmatpush1.xpose.msra.mxu0 0.0
        %2955 = vmatprep.subr.mxu0 0.0
        %2956 = vmatpush1.xpose.msra.mxu0 0.0
        %2957 = vmatprep.subr.mxu0 0.0
        %2958 = vmatpush1.xpose.msra.mxu0 0.0
        %2959 = vmatprep.subr.mxu0 0.0
        %2960 = vmatpush1.xpose.msra.mxu0 0.0
        %2961 = vmatprep.subr.mxu0 0.0
        %2962 = vmatpush1.xpose.msra.mxu0 %v2931
        %2963 = vmatprep.subr.mxu0 0.0
        %2964 = vmatpush1.xpose.msra.mxu0 %v2929
        %2965 = vmatprep.subr.mxu0 0.0
        %2966 = vmatpush2.xpose.msra.mxu0 0.0
        %2967 = vmatprep.subr.mxu0 0.0
        %2968 = vmatpush2.xpose.msra.mxu0 0.0
        %2969 = vmatprep.subr.mxu0 0.0
        %2970 = vmatpush2.xpose.msra.mxu0 0.0
        %2971 = vmatprep.subr.mxu0 0.0
        %2972 = vmatpush2.xpose.msra.mxu0 0.0
        %2973 = vmatprep.subr.mxu0 0.0
        %2974 = vmatpush2.xpose.msra.mxu0 0.0
        %2975 = vmatprep.subr.mxu0 0.0
        %2976 = vmatpush2.xpose.msra.mxu0 0.0
        %2977 = vmatprep.subr.mxu0 0.0
        %2978 = vmatpush2.xpose.msra.mxu0 0.0
        %2979 = vmatprep.subr.mxu0 0.0
        %2980 = vmatpush2.xpose.msra.mxu0 0.0
        %2981 = vmatprep.subr.mxu0 0.0
        %2982 = vmatpush2.xpose.msra.mxu0 0.0
        %2983 = vmatprep.subr.mxu0 0.0
        %2984 = vmatpush2.xpose.msra.mxu0 0.0
        %2985 = vmatprep.subr.mxu0 0.0
        %2986 = vmatpush2.xpose.msra.mxu0 0.0
        %2987 = vmatprep.subr.mxu0 0.0
        %2988 = vmatpush2.xpose.msra.mxu0 0.0
        %2989 = vmatprep.subr.mxu0 0.0
        %2990 = vmatpush2.xpose.msra.mxu0 0.0
        %2991 = vmatprep.subr.mxu0 0.0
        %2992 = vmatpush2.xpose.msra.mxu0 0.0
        %2993 = vmatprep.subr.mxu0 0.0
        %2994 = vmatpush2.xpose.msra.mxu0 0.0
        %2995 = vmatprep.subr.mxu0 0.0
        %2996 = vmatpush2.xpose.msra.mxu0 0.0
        %2997 = vmatprep.mubr.f32.mxu0 0.0
        %2998 = vmatmul.mubr.f32.gmra.mxu0 %v2925
        %v2999 = vpop.f32.mrf.mxu0
        %v3000 = vadd.f32 0.0, %v2999
        %v3001 = vpop.f32.mrf.mxu0
        %3002 = vmatprep.mubr.f32.mxu0 0.0
        %3003 = vmatmul.mubr.f32.gmra.mxu0 %v2927
        %v3004 = vpop.f32.mrf.mxu0
        %v3005 = vadd.f32 0.0, %v3004
        %v3006 = vpop.f32.mrf.mxu0
        %3007 = vdwg.mxu0
        %v3008 = vmul.f32 %v3000, 0.25
        %v3009 = vmul.f32 %v3005, 0.25
        %v3010 = vadd.f32 %v3008, %v1053
        %v3011 = vadd.f32 %v3009, %v1053
        %v3012 = vsel %vm963, %v3010, -inf
        %3013 = vmax.xlane.f32.xlu0 %v3012
        %v3014 = vpop.xlane.xlu0 %3013
        %v3015 = vsel %vm963, %v3011, -inf
        %3016 = vmax.xlane.f32.xlu0 %v3015
        %v3017 = vpop.xlane.xlu0 %3016
        %v3018 = vsub.f32 %v3010, %v3014
        %v3019 = vsub.f32 %v3011, %v3017
        %v3020 = vmul.f32 %v3018, 1.442695
        %v3021 = vpow.pop %v3020
        %v3022 = vmul.f32 %v3019, 1.442695
        %v3023 = vpow.pop %v3022
        %v3024 = vsel %vm963, %v3021, 0.0
        %3025 = vadd.xlane.f32.xlu0 %v3024
        %v3026 = vpop.xlane.xlu0 %3025
        %v3027 = vsel %vm963, %v3023, 0.0
        %3028 = vadd.xlane.f32.xlu0 %v3027
        %v3029 = vpop.xlane.xlu0 %3028
        %v3030 = vrcp.pop %v3026
        %v3031 = vrcp.pop %v3029
        %v3032 = vmul.f32 %v3021, %v3030
        %v3033 = vmul.f32 %v3023, %v3031
        %3034 = vrot.lane.b32.xlu0 %v2303, 80
        %v3035 = vpop.permute.xlu0 %3034
        %3036 = vrot.lane.b32.xlu0 %v2309, 80
        %v3037 = vpop.permute.xlu0 %3036
        %v3041 = vsel %vm963, %v3032, 0
        %v3044 = vsel %vm963, %v3033, 0
        %3046 = vmatprep.subr.mxu0 0.0
        %3047 = vmatpush1.msra.mxu0 0.0
        %3048 = vmatprep.subr.mxu0 0.0
        %3049 = vmatpush1.msra.mxu0 0.0
        %3050 = vmatprep.subr.mxu0 0.0
        %3051 = vmatpush1.msra.mxu0 0.0
        %3052 = vmatprep.subr.mxu0 0.0
        %3053 = vmatpush1.msra.mxu0 0.0
        %3054 = vmatprep.subr.mxu0 0.0
        %3055 = vmatpush1.msra.mxu0 0.0
        %3056 = vmatprep.subr.mxu0 0.0
        %3057 = vmatpush1.msra.mxu0 0.0
        %3058 = vmatprep.subr.mxu0 0.0
        %3059 = vmatpush1.msra.mxu0 0.0
        %3060 = vmatprep.subr.mxu0 0.0
        %3061 = vmatpush1.msra.mxu0 0.0
        %3062 = vmatprep.subr.mxu0 0.0
        %3063 = vmatpush1.msra.mxu0 0.0
        %3064 = vmatprep.subr.mxu0 0.0
        %3065 = vmatpush1.msra.mxu0 0.0
        %3066 = vmatprep.subr.mxu0 0.0
        %3067 = vmatpush1.msra.mxu0 0.0
        %3068 = vmatprep.subr.mxu0 0.0
        %3069 = vmatpush1.msra.mxu0 0.0
        %3070 = vmatprep.subr.mxu0 0.0
        %3071 = vmatpush1.msra.mxu0 0.0
        %3072 = vmatprep.subr.mxu0 0.0
        %3073 = vmatpush1.msra.mxu0 0.0
        %3074 = vmatprep.subr.mxu0 0.0
        %3075 = vmatpush1.msra.mxu0 %v3037
        %3076 = vmatprep.subr.mxu0 0.0
        %3077 = vmatpush1.msra.mxu0 %v3035
        %3078 = vmatprep.subr.mxu0 0.0
        %3079 = vmatpush2.msra.mxu0 0.0
        %3080 = vmatprep.subr.mxu0 0.0
        %3081 = vmatpush2.msra.mxu0 0.0
        %3082 = vmatprep.subr.mxu0 0.0
        %3083 = vmatpush2.msra.mxu0 0.0
        %3084 = vmatprep.subr.mxu0 0.0
        %3085 = vmatpush2.msra.mxu0 0.0
        %3086 = vmatprep.subr.mxu0 0.0
        %3087 = vmatpush2.msra.mxu0 0.0
        %3088 = vmatprep.subr.mxu0 0.0
        %3089 = vmatpush2.msra.mxu0 0.0
        %3090 = vmatprep.subr.mxu0 0.0
        %3091 = vmatpush2.msra.mxu0 0.0
        %3092 = vmatprep.subr.mxu0 0.0
        %3093 = vmatpush2.msra.mxu0 0.0
        %3094 = vmatprep.subr.mxu0 0.0
        %3095 = vmatpush2.msra.mxu0 0.0
        %3096 = vmatprep.subr.mxu0 0.0
        %3097 = vmatpush2.msra.mxu0 0.0
        %3098 = vmatprep.subr.mxu0 0.0
        %3099 = vmatpush2.msra.mxu0 0.0
        %3100 = vmatprep.subr.mxu0 0.0
        %3101 = vmatpush2.msra.mxu0 0.0
        %3102 = vmatprep.subr.mxu0 0.0
        %3103 = vmatpush2.msra.mxu0 0.0
        %3104 = vmatprep.subr.mxu0 0.0
        %3105 = vmatpush2.msra.mxu0 0.0
        %3106 = vmatprep.subr.mxu0 0.0
        %3107 = vmatpush2.msra.mxu0 0.0
        %3108 = vmatprep.subr.mxu0 0.0
        %3109 = vmatpush2.msra.mxu0 0.0
        %3110 = vmatprep.mubr.f32.mxu0 0.0
        %3111 = vmatmul.mubr.f32.gmra.mxu0 %v3041
        %v3112 = vpop.f32.mrf.mxu0
        %v3113 = vadd.f32 0.0, %v3112
        %v3114 = vpop.f32.mrf.mxu0
        %3115 = vmatprep.mubr.f32.mxu0 0.0
        %3116 = vmatmul.mubr.f32.gmra.mxu0 %v3044
        %v3117 = vpop.f32.mrf.mxu0
        %v3118 = vadd.f32 0.0, %v3117
        %v3119 = vpop.f32.mrf.mxu0
        %3120 = vdwg.mxu0
        %3123 = vrot.lane.b32.xlu0 %v2705, 16
        %v3124 = vpop.permute.xlu0 %3123
        %3125 = vrot.lane.b32.xlu0 %v2710, 16
        %v3126 = vpop.permute.xlu0 %3125
        %3131 = vrot.lane.b32.xlu0 %v2909, 32
        %v3132 = vpop.permute.xlu0 %3131
        %3133 = vrot.lane.b32.xlu0 %v2914, 32
        %v3134 = vpop.permute.xlu0 %3133
        %3139 = vrot.lane.b32.xlu0 %v3113, 48
        %v3140 = vpop.permute.xlu0 %3139
        %3141 = vrot.lane.b32.xlu0 %v3118, 48
        %v3142 = vpop.permute.xlu0 %3141
        %v3145 = vsel %vm963, %v2499, %v3124
        %v3146 = vsel %vm963, %v2504, %v3126
        %v3147 = vsel %vm1800, %v3145, %v3132
        %v3148 = vsel %vm1800, %v3146, %v3134
        %v3149 = vsel %vm1803, %v3147, %v3140
        %v3150 = vsel %vm1803, %v3148, %v3142
        %s3151 = scalar_lea.vmem %s7, 64
        %v3152 = vld [vmem:[%s3151] sm:$0xff]
        %v3153 = vld [vmem:[%s3151 + $0x8] sm:$0xff]
        %v3154 = vld [vmem:[%s3151 + $0x10] sm:$0xff]
        %v3155 = vld [vmem:[%s3151 + $0x18] sm:$0xff]
        %v3156 = vld [vmem:[%s3151 + $0x20] sm:$0xff]
        %v3157 = vld [vmem:[%s3151 + $0x28] sm:$0xff]
        %v3158 = vld [vmem:[%s3151 + $0x30] sm:$0xff]
        %v3159 = vld [vmem:[%s3151 + $0x38] sm:$0xff]
        %s3160 = scalar_lea.vmem %s8, 1
        %v3161 = vld [vmem:[%s3160] sm:$0x1]
        %v3163 = vlaneseq
        %v3164 = vshrl.u32 %v3163, 7
        %v3165 = vsub.s32 0, %v3164
        %v3166 = vrot.slane %v3161, %v3165
        %v3169 = vsel %vm801, %v3149, 0
        %v3172 = vsel %vm801, %v3150, 0
        %3174 = vmatprep.subr.mxu0 0.0
        %3175 = vmatpush1.msra.mxu0 0.0
        %3176 = vmatprep.subr.mxu0 0.0
        %3177 = vmatpush1.msra.mxu0 0.0
        %3178 = vmatprep.subr.mxu0 0.0
        %3179 = vmatpush1.msra.mxu0 0.0
        %3180 = vmatprep.subr.mxu0 0.0
        %3181 = vmatpush1.msra.mxu0 0.0
        %3182 = vmatprep.subr.mxu0 0.0
        %3183 = vmatpush1.msra.mxu0 0.0
        %3184 = vmatprep.subr.mxu0 0.0
        %3185 = vmatpush1.msra.mxu0 0.0
        %3186 = vmatprep.subr.mxu0 0.0
        %3187 = vmatpush1.msra.mxu0 0.0
        %3188 = vmatprep.subr.mxu0 0.0
        %3189 = vmatpush1.msra.mxu0 0.0
        %3190 = vmatprep.subr.mxu0 0.0
        %3191 = vmatpush1.msra.mxu0 %v3159
        %3192 = vmatprep.subr.mxu0 0.0
        %3193 = vmatpush1.msra.mxu0 %v3158
        %3194 = vmatprep.subr.mxu0 0.0
        %3195 = vmatpush1.msra.mxu0 %v3157
        %3196 = vmatprep.subr.mxu0 0.0
        %3197 = vmatpush1.msra.mxu0 %v3156
        %3198 = vmatprep.subr.mxu0 0.0
        %3199 = vmatpush1.msra.mxu0 %v3155
        %3200 = vmatprep.subr.mxu0 0.0
        %3201 = vmatpush1.msra.mxu0 %v3154
        %3202 = vmatprep.subr.mxu0 0.0
        %3203 = vmatpush1.msra.mxu0 %v3153
        %3204 = vmatprep.subr.mxu0 0.0
        %3205 = vmatpush1.msra.mxu0 %v3152
        %3206 = vmatprep.subr.mxu0 0.0
        %3207 = vmatpush2.msra.mxu0 0.0
        %3208 = vmatprep.subr.mxu0 0.0
        %3209 = vmatpush2.msra.mxu0 0.0
        %3210 = vmatprep.subr.mxu0 0.0
        %3211 = vmatpush2.msra.mxu0 0.0
        %3212 = vmatprep.subr.mxu0 0.0
        %3213 = vmatpush2.msra.mxu0 0.0
        %3214 = vmatprep.subr.mxu0 0.0
        %3215 = vmatpush2.msra.mxu0 0.0
        %3216 = vmatprep.subr.mxu0 0.0
        %3217 = vmatpush2.msra.mxu0 0.0
        %3218 = vmatprep.subr.mxu0 0.0
        %3219 = vmatpush2.msra.mxu0 0.0
        %3220 = vmatprep.subr.mxu0 0.0
        %3221 = vmatpush2.msra.mxu0 0.0
        %3222 = vmatprep.subr.mxu0 0.0
        %3223 = vmatpush2.msra.mxu0 0.0
        %3224 = vmatprep.subr.mxu0 0.0
        %3225 = vmatpush2.msra.mxu0 0.0
        %3226 = vmatprep.subr.mxu0 0.0
        %3227 = vmatpush2.msra.mxu0 0.0
        %3228 = vmatprep.subr.mxu0 0.0
        %3229 = vmatpush2.msra.mxu0 0.0
        %3230 = vmatprep.subr.mxu0 0.0
        %3231 = vmatpush2.msra.mxu0 0.0
        %3232 = vmatprep.subr.mxu0 0.0
        %3233 = vmatpush2.msra.mxu0 0.0
        %3234 = vmatprep.subr.mxu0 0.0
        %3235 = vmatpush2.msra.mxu0 0.0
        %3236 = vmatprep.subr.mxu0 0.0
        %3237 = vmatpush2.msra.mxu0 0.0
        %3238 = vmatprep.mubr.f32.mxu0 0.0
        %3239 = vmatmul.mubr.f32.gmra.mxu0 %v3169
        %v3240 = vpop.f32.mrf.mxu0
        %v3241 = vadd.f32 %v3166, %v3240
        %v3242 = vpop.f32.mrf.mxu0
        %3243 = vmatprep.mubr.f32.mxu0 0.0
        %3244 = vmatmul.mubr.f32.gmra.mxu0 %v3172
        %v3245 = vpop.f32.mrf.mxu0
        %v3246 = vadd.f32 %v3166, %v3245
        %v3247 = vpop.f32.mrf.mxu0
        %3248 = vdwg.mxu0
        %v3249 = vadd.f32 %v2196, %v3241
        %v3250 = vadd.f32 %v2197, %v3246
        %s3251 = scalar_lea.vmem %s9, 1
        %v3252 = vld [vmem:[%s3251] sm:$0x1]
        %s3253 = scalar_lea.vmem %s10, 1
        %v3254 = vld [vmem:[%s3253] sm:$0x1]
        %v3255 = vsel %vm801, %v3249, 0.0
        %3256 = vadd.xlane.f32.xlu0 %v3255
        %v3257 = vpop.xlane.xlu0 %3256
        %v3258 = vsel %vm801, %v3250, 0.0
        %3259 = vadd.xlane.f32.xlu0 %v3258
        %v3260 = vpop.xlane.xlu0 %3259
        %v3261 = vmul.f32 %v3257, %v808
        %v3262 = vmul.f32 %v3260, %v808
        %v3263 = vsub.f32 %v3249, %v3261
        %v3264 = vsub.f32 %v3250, %v3262
        %v3265 = vmul.f32 %v3263, %v3263
        %v3266 = vmul.f32 %v3264, %v3264
        %v3267 = vsel %vm801, %v3265, 0.0
        %3268 = vadd.xlane.f32.xlu0 %v3267
        %v3269 = vpop.xlane.xlu0 %3268
        %v3270 = vsel %vm801, %v3266, 0.0
        %3271 = vadd.xlane.f32.xlu0 %v3270
        %v3272 = vpop.xlane.xlu0 %3271
        %v3273 = vmul.f32 %v3269, %v808
        %v3274 = vmul.f32 %v3272, %v808
        %v3275 = vadd.f32 %v3273, 1e-12
        %v3276 = vadd.f32 %v3274, 1e-12
        %v3277 = vrsqrt.pop %v3275
        %v3278 = vrsqrt.pop %v3276
        %v3279 = vmul.f32 %v3263, %v3277
        %v3280 = vmul.f32 %v3264, %v3278
        %v3282 = vlaneseq
        %v3283 = vshrl.u32 %v3282, 7
        %v3284 = vsub.s32 0, %v3283
        %v3285 = vrot.slane %v3252, %v3284
        %v3287 = vmul.f32 %v3279, %v3285
        %v3288 = vmul.f32 %v3280, %v3285
        %v3290 = vlaneseq
        %v3291 = vshrl.u32 %v3290, 7
        %v3292 = vsub.s32 0, %v3291
        %v3293 = vrot.slane %v3254, %v3292
        %v3295 = vadd.f32 %v3287, %v3293
        %v3296 = vadd.f32 %v3288, %v3293
        %s3297 = scalar_lea.vmem %s11, 64
        %v3298 = vld [vmem:[%s3297] sm:$0xff]
        %v3299 = vld [vmem:[%s3297 + $0x8] sm:$0xff]
        %v3300 = vld [vmem:[%s3297 + $0x10] sm:$0xff]
        %v3301 = vld [vmem:[%s3297 + $0x18] sm:$0xff]
        %v3302 = vld [vmem:[%s3297 + $0x20] sm:$0xff]
        %v3303 = vld [vmem:[%s3297 + $0x28] sm:$0xff]
        %v3304 = vld [vmem:[%s3297 + $0x30] sm:$0xff]
        %v3305 = vld [vmem:[%s3297 + $0x38] sm:$0xff]
        %s3306 = scalar_lea.vmem %s12, 1
        %v3307 = vld [vmem:[%s3306] sm:$0x1]
        %v3309 = vlaneseq
        %v3310 = vshrl.u32 %v3309, 7
        %v3311 = vsub.s32 0, %v3310
        %v3312 = vrot.slane %v3307, %v3311
        %v3315 = vsel %vm801, %v3295, 0
        %v3318 = vsel %vm801, %v3296, 0
        %3320 = vmatprep.subr.mxu0 0.0
        %3321 = vmatpush1.msra.mxu0 0.0
        %3322 = vmatprep.subr.mxu0 0.0
        %3323 = vmatpush1.msra.mxu0 0.0
        %3324 = vmatprep.subr.mxu0 0.0
        %3325 = vmatpush1.msra.mxu0 0.0
        %3326 = vmatprep.subr.mxu0 0.0
        %3327 = vmatpush1.msra.mxu0 0.0
        %3328 = vmatprep.subr.mxu0 0.0
        %3329 = vmatpush1.msra.mxu0 0.0
        %3330 = vmatprep.subr.mxu0 0.0
        %3331 = vmatpush1.msra.mxu0 0.0
        %3332 = vmatprep.subr.mxu0 0.0
        %3333 = vmatpush1.msra.mxu0 0.0
        %3334 = vmatprep.subr.mxu0 0.0
        %3335 = vmatpush1.msra.mxu0 0.0
        %3336 = vmatprep.subr.mxu0 0.0
        %3337 = vmatpush1.msra.mxu0 %v3305
        %3338 = vmatprep.subr.mxu0 0.0
        %3339 = vmatpush1.msra.mxu0 %v3304
        %3340 = vmatprep.subr.mxu0 0.0
        %3341 = vmatpush1.msra.mxu0 %v3303
        %3342 = vmatprep.subr.mxu0 0.0
        %3343 = vmatpush1.msra.mxu0 %v3302
        %3344 = vmatprep.subr.mxu0 0.0
        %3345 = vmatpush1.msra.mxu0 %v3301
        %3346 = vmatprep.subr.mxu0 0.0
        %3347 = vmatpush1.msra.mxu0 %v3300
        %3348 = vmatprep.subr.mxu0 0.0
        %3349 = vmatpush1.msra.mxu0 %v3299
        %3350 = vmatprep.subr.mxu0 0.0
        %3351 = vmatpush1.msra.mxu0 %v3298
        %3352 = vmatprep.subr.mxu0 0.0
        %3353 = vmatpush2.msra.mxu0 0.0
        %3354 = vmatprep.subr.mxu0 0.0
        %3355 = vmatpush2.msra.mxu0 0.0
        %3356 = vmatprep.subr.mxu0 0.0
        %3357 = vmatpush2.msra.mxu0 0.0
        %3358 = vmatprep.subr.mxu0 0.0
        %3359 = vmatpush2.msra.mxu0 0.0
        %3360 = vmatprep.subr.mxu0 0.0
        %3361 = vmatpush2.msra.mxu0 0.0
        %3362 = vmatprep.subr.mxu0 0.0
        %3363 = vmatpush2.msra.mxu0 0.0
        %3364 = vmatprep.subr.mxu0 0.0
        %3365 = vmatpush2.msra.mxu0 0.0
        %3366 = vmatprep.subr.mxu0 0.0
        %3367 = vmatpush2.msra.mxu0 0.0
        %3368 = vmatprep.subr.mxu0 0.0
        %3369 = vmatpush2.msra.mxu0 0.0
        %3370 = vmatprep.subr.mxu0 0.0
        %3371 = vmatpush2.msra.mxu0 0.0
        %3372 = vmatprep.subr.mxu0 0.0
        %3373 = vmatpush2.msra.mxu0 0.0
        %3374 = vmatprep.subr.mxu0 0.0
        %3375 = vmatpush2.msra.mxu0 0.0
        %3376 = vmatprep.subr.mxu0 0.0
        %3377 = vmatpush2.msra.mxu0 0.0
        %3378 = vmatprep.subr.mxu0 0.0
        %3379 = vmatpush2.msra.mxu0 0.0
        %3380 = vmatprep.subr.mxu0 0.0
        %3381 = vmatpush2.msra.mxu0 0.0
        %3382 = vmatprep.subr.mxu0 0.0
        %3383 = vmatpush2.msra.mxu0 0.0
        %3384 = vmatprep.mubr.f32.mxu0 0.0
        %3385 = vmatmul.mubr.f32.gmra.mxu0 %v3315
        %v3386 = vpop.f32.mrf.mxu0
        %v3387 = vadd.f32 %v3312, %v3386
        %v3388 = vpop.f32.mrf.mxu0
        %3389 = vmatprep.mubr.f32.mxu0 0.0
        %3390 = vmatmul.mubr.f32.gmra.mxu0 %v3318
        %v3391 = vpop.f32.mrf.mxu0
        %v3392 = vadd.f32 %v3312, %v3391
        %v3393 = vpop.f32.mrf.mxu0
        %3394 = vdwg.mxu0
        %v3395 = vmul.f32 %v3387, 0.5
        %v3396 = vmul.f32 %v3392, 0.5
        %v3397 = vmul.f32 %v3387, 0.70710677
        %v3398 = vmul.f32 %v3392, 0.70710677
        %v3399 = verf.f32.pop %v3397
        %v3400 = verf.f32.pop %v3398
        %v3401 = vadd.f32 %v3399, 1.0
        %v3402 = vadd.f32 %v3400, 1.0
        %v3403 = vmul.f32 %v3395, %v3401
        %v3404 = vmul.f32 %v3396, %v3402
        %s3405 = scalar_lea.vmem %s13, 128
        %v3406 = vld [vmem:[%s3405] sm:$0xff]
        %v3407 = vld [vmem:[%s3405 + $0x8] sm:$0xff]
        %v3408 = vld [vmem:[%s3405 + $0x10] sm:$0xff]
        %v3409 = vld [vmem:[%s3405 + $0x18] sm:$0xff]
        %v3410 = vld [vmem:[%s3405 + $0x20] sm:$0xff]
        %v3411 = vld [vmem:[%s3405 + $0x28] sm:$0xff]
        %v3412 = vld [vmem:[%s3405 + $0x30] sm:$0xff]
        %v3413 = vld [vmem:[%s3405 + $0x38] sm:$0xff]
        %v3414 = vld [vmem:[%s3405 + $0x40] sm:$0xff]
        %v3415 = vld [vmem:[%s3405 + $0x48] sm:$0xff]
        %v3416 = vld [vmem:[%s3405 + $0x50] sm:$0xff]
        %v3417 = vld [vmem:[%s3405 + $0x58] sm:$0xff]
        %v3418 = vld [vmem:[%s3405 + $0x60] sm:$0xff]
        %v3419 = vld [vmem:[%s3405 + $0x68] sm:$0xff]
        %v3420 = vld [vmem:[%s3405 + $0x70] sm:$0xff]
        %v3421 = vld [vmem:[%s3405 + $0x78] sm:$0xff]
        %s3422 = scalar_lea.vmem %s14, 1
        %v3423 = vld [vmem:[%s3422] sm:$0x1]
        %v3425 = vlaneseq
        %v3426 = vshrl.u32 %v3425, 7
        %v3427 = vsub.s32 0, %v3426
        %v3428 = vrot.slane %v3423, %v3427
        %3430 = vmatprep.subr.mxu0 0.0
        %3431 = vmatpush1.msra.mxu0 %v3421
        %3432 = vmatprep.subr.mxu0 0.0
        %3433 = vmatpush1.msra.mxu0 %v3420
        %3434 = vmatprep.subr.mxu0 0.0
        %3435 = vmatpush1.msra.mxu0 %v3419
        %3436 = vmatprep.subr.mxu0 0.0
        %3437 = vmatpush1.msra.mxu0 %v3418
        %3438 = vmatprep.subr.mxu0 0.0
        %3439 = vmatpush1.msra.mxu0 %v3417
        %3440 = vmatprep.subr.mxu0 0.0
        %3441 = vmatpush1.msra.mxu0 %v3416
        %3442 = vmatprep.subr.mxu0 0.0
        %3443 = vmatpush1.msra.mxu0 %v3415
        %3444 = vmatprep.subr.mxu0 0.0
        %3445 = vmatpush1.msra.mxu0 %v3414
        %3446 = vmatprep.subr.mxu0 0.0
        %3447 = vmatpush1.msra.mxu0 %v3413
        %3448 = vmatprep.subr.mxu0 0.0
        %3449 = vmatpush1.msra.mxu0 %v3412
        %3450 = vmatprep.subr.mxu0 0.0
        %3451 = vmatpush1.msra.mxu0 %v3411
        %3452 = vmatprep.subr.mxu0 0.0
        %3453 = vmatpush1.msra.mxu0 %v3410
        %3454 = vmatprep.subr.mxu0 0.0
        %3455 = vmatpush1.msra.mxu0 %v3409
        %3456 = vmatprep.subr.mxu0 0.0
        %3457 = vmatpush1.msra.mxu0 %v3408
        %3458 = vmatprep.subr.mxu0 0.0
        %3459 = vmatpush1.msra.mxu0 %v3407
        %3460 = vmatprep.subr.mxu0 0.0
        %3461 = vmatpush1.msra.mxu0 %v3406
        %3462 = vmatprep.subr.mxu0 0.0
        %3463 = vmatpush2.msra.mxu0 0.0
        %3464 = vmatprep.subr.mxu0 0.0
        %3465 = vmatpush2.msra.mxu0 0.0
        %3466 = vmatprep.subr.mxu0 0.0
        %3467 = vmatpush2.msra.mxu0 0.0
        %3468 = vmatprep.subr.mxu0 0.0
        %3469 = vmatpush2.msra.mxu0 0.0
        %3470 = vmatprep.subr.mxu0 0.0
        %3471 = vmatpush2.msra.mxu0 0.0
        %3472 = vmatprep.subr.mxu0 0.0
        %3473 = vmatpush2.msra.mxu0 0.0
        %3474 = vmatprep.subr.mxu0 0.0
        %3475 = vmatpush2.msra.mxu0 0.0
        %3476 = vmatprep.subr.mxu0 0.0
        %3477 = vmatpush2.msra.mxu0 0.0
        %3478 = vmatprep.subr.mxu0 0.0
        %3479 = vmatpush2.msra.mxu0 0.0
        %3480 = vmatprep.subr.mxu0 0.0
        %3481 = vmatpush2.msra.mxu0 0.0
        %3482 = vmatprep.subr.mxu0 0.0
        %3483 = vmatpush2.msra.mxu0 0.0
        %3484 = vmatprep.subr.mxu0 0.0
        %3485 = vmatpush2.msra.mxu0 0.0
        %3486 = vmatprep.subr.mxu0 0.0
        %3487 = vmatpush2.msra.mxu0 0.0
        %3488 = vmatprep.subr.mxu0 0.0
        %3489 = vmatpush2.msra.mxu0 0.0
        %3490 = vmatprep.subr.mxu0 0.0
        %3491 = vmatpush2.msra.mxu0 0.0
        %3492 = vmatprep.subr.mxu0 0.0
        %3493 = vmatpush2.msra.mxu0 0.0
        %3494 = vmatprep.mubr.f32.mxu0 0.0
        %3495 = vmatmul.mubr.f32.gmra.mxu0 %v3403
        %v3496 = vpop.f32.mrf.mxu0
        %v3497 = vadd.f32 %v3428, %v3496
        %v3498 = vpop.f32.mrf.mxu0
        %3499 = vmatprep.mubr.f32.mxu0 0.0
        %3500 = vmatmul.mubr.f32.gmra.mxu0 %v3404
        %v3501 = vpop.f32.mrf.mxu0
        %v3502 = vadd.f32 %v3428, %v3501
        %v3503 = vpop.f32.mrf.mxu0
        %3504 = vdwg.mxu0
        %v3505 = vadd.f32 %v3295, %v3497
        %v3506 = vadd.f32 %v3296, %v3502
        %s3507 = scalar_lea.vmem %s15, 1
        %v3508 = vld [vmem:[%s3507] sm:$0x1]
        %s3509 = scalar_lea.vmem %s16, 1
        %v3510 = vld [vmem:[%s3509] sm:$0x1]
        %v3511 = vsel %vm801, %v3505, 0.0
        %3512 = vadd.xlane.f32.xlu0 %v3511
        %v3513 = vpop.xlane.xlu0 %3512
        %v3514 = vsel %vm801, %v3506, 0.0
        %3515 = vadd.xlane.f32.xlu0 %v3514
        %v3516 = vpop.xlane.xlu0 %3515
        %v3517 = vmul.f32 %v3513, %v808
        %v3518 = vmul.f32 %v3516, %v808
        %v3519 = vsub.f32 %v3505, %v3517
        %v3520 = vsub.f32 %v3506, %v3518
        %v3521 = vmul.f32 %v3519, %v3519
        %v3522 = vmul.f32 %v3520, %v3520
        %v3523 = vsel %vm801, %v3521, 0.0
        %3524 = vadd.xlane.f32.xlu0 %v3523
        %v3525 = vpop.xlane.xlu0 %3524
        %v3526 = vsel %vm801, %v3522, 0.0
        %3527 = vadd.xlane.f32.xlu0 %v3526
        %v3528 = vpop.xlane.xlu0 %3527
        %v3529 = vmul.f32 %v3525, %v808
        %v3530 = vmul.f32 %v3528, %v808
        %v3531 = vadd.f32 %v3529, 1e-12
        %v3532 = vadd.f32 %v3530, 1e-12
        %v3533 = vrsqrt.pop %v3531
        %v3534 = vrsqrt.pop %v3532
        %v3535 = vmul.f32 %v3519, %v3533
        %v3536 = vmul.f32 %v3520, %v3534
        %v3538 = vlaneseq
        %v3539 = vshrl.u32 %v3538, 7
        %v3540 = vsub.s32 0, %v3539
        %v3541 = vrot.slane %v3508, %v3540
        %v3543 = vmul.f32 %v3535, %v3541
        %v3544 = vmul.f32 %v3536, %v3541
        %v3546 = vlaneseq
        %v3547 = vshrl.u32 %v3546, 7
        %v3548 = vsub.s32 0, %v3547
        %v3549 = vrot.slane %v3510, %v3548
        %v3551 = vadd.f32 %v3543, %v3549
        %v3552 = vadd.f32 %v3544, %v3549
        %3553 = vst.msk [vmem:[%s758] sm:$0xff] %vm801, %v3551
        %3554 = vst.msk [vmem:[%s758 + $0x8] sm:$0xff] %vm801, %v3552
        %v3555 = vld [vmem:[%s17] sm:$0xff]
        %v3556 = vld [vmem:[%s17 + $0x8] sm:$0xff]
        %v3557 = vld [vmem:[%s17 + $0x10] sm:$0xff]
        %v3558 = vld [vmem:[%s17 + $0x18] sm:$0xff]
        %v3559 = vld [vmem:[%s17 + $0x20] sm:$0xff]
        %v3560 = vld [vmem:[%s17 + $0x28] sm:$0xff]
        %v3561 = vld [vmem:[%s17 + $0x30] sm:$0xff]
        %v3562 = vld [vmem:[%s17 + $0x38] sm:$0xff]
        %v3563 = vld [vmem:[%s18] sm:$0x1]
        %v3565 = vsel %vm801, %v3551, 0
        %3567 = vmatprep.subr.mxu0 0.0
        %3568 = vmatpush1.msra.mxu0 0.0
        %3569 = vmatprep.subr.mxu0 0.0
        %3570 = vmatpush1.msra.mxu0 0.0
        %3571 = vmatprep.subr.mxu0 0.0
        %3572 = vmatpush1.msra.mxu0 0.0
        %3573 = vmatprep.subr.mxu0 0.0
        %3574 = vmatpush1.msra.mxu0 0.0
        %3575 = vmatprep.subr.mxu0 0.0
        %3576 = vmatpush1.msra.mxu0 0.0
        %3577 = vmatprep.subr.mxu0 0.0
        %3578 = vmatpush1.msra.mxu0 0.0
        %3579 = vmatprep.subr.mxu0 0.0
        %3580 = vmatpush1.msra.mxu0 0.0
        %3581 = vmatprep.subr.mxu0 0.0
        %3582 = vmatpush1.msra.mxu0 0.0
        %3583 = vmatprep.subr.mxu0 0.0
        %3584 = vmatpush1.msra.mxu0 %v3562
        %3585 = vmatprep.subr.mxu0 0.0
        %3586 = vmatpush1.msra.mxu0 %v3561
        %3587 = vmatprep.subr.mxu0 0.0
        %3588 = vmatpush1.msra.mxu0 %v3560
        %3589 = vmatprep.subr.mxu0 0.0
        %3590 = vmatpush1.msra.mxu0 %v3559
        %3591 = vmatprep.subr.mxu0 0.0
        %3592 = vmatpush1.msra.mxu0 %v3558
        %3593 = vmatprep.subr.mxu0 0.0
        %3594 = vmatpush1.msra.mxu0 %v3557
        %3595 = vmatprep.subr.mxu0 0.0
        %3596 = vmatpush1.msra.mxu0 %v3556
        %3597 = vmatprep.subr.mxu0 0.0
        %3598 = vmatpush1.msra.mxu0 %v3555
        %3599 = vmatprep.subr.mxu0 0.0
        %3600 = vmatpush2.msra.mxu0 0.0
        %3601 = vmatprep.subr.mxu0 0.0
        %3602 = vmatpush2.msra.mxu0 0.0
        %3603 = vmatprep.subr.mxu0 0.0
        %3604 = vmatpush2.msra.mxu0 0.0
        %3605 = vmatprep.subr.mxu0 0.0
        %3606 = vmatpush2.msra.mxu0 0.0
        %3607 = vmatprep.subr.mxu0 0.0
        %3608 = vmatpush2.msra.mxu0 0.0
        %3609 = vmatprep.subr.mxu0 0.0
        %3610 = vmatpush2.msra.mxu0 0.0
        %3611 = vmatprep.subr.mxu0 0.0
        %3612 = vmatpush2.msra.mxu0 0.0
        %3613 = vmatprep.subr.mxu0 0.0
        %3614 = vmatpush2.msra.mxu0 0.0
        %3615 = vmatprep.subr.mxu0 0.0
        %3616 = vmatpush2.msra.mxu0 0.0
        %3617 = vmatprep.subr.mxu0 0.0
        %3618 = vmatpush2.msra.mxu0 0.0
        %3619 = vmatprep.subr.mxu0 0.0
        %3620 = vmatpush2.msra.mxu0 0.0
        %3621 = vmatprep.subr.mxu0 0.0
        %3622 = vmatpush2.msra.mxu0 0.0
        %3623 = vmatprep.subr.mxu0 0.0
        %3624 = vmatpush2.msra.mxu0 0.0
        %3625 = vmatprep.subr.mxu0 0.0
        %3626 = vmatpush2.msra.mxu0 0.0
        %3627 = vmatprep.subr.mxu0 0.0
        %3628 = vmatpush2.msra.mxu0 0.0
        %3629 = vmatprep.subr.mxu0 0.0
        %3630 = vmatpush2.msra.mxu0 0.0
        %3631 = vmatprep.mubr.f32.mxu0 0.0
        %3632 = vmatmul.mubr.f32.gmra.mxu0 %v3565
        %v3633 = vpop.f32.mrf.mxu0
        %v3634 = vadd.f32 %v3563, %v3633
        %v3635 = vpop.f32.mrf.mxu0
        %3636 = vdwg.mxu0
        %v3637 = vtanh.pop %v3634
        %vm3638 = vcmask 516096
        %3639 = vst.msk [vmem:[%s764] sm:$0x1] %vm3638, %v3637
        %v3640 = vld [vmem:[%s788] sm:$0xff]
        %v3642 = vsel %vm963, %v3640, 0
        %3644 = vmatprep.subr.mxu0 0.0
        %3645 = vmatpush1.msra.mxu0 0.0
        %3646 = vmatprep.subr.mxu0 0.0
        %3647 = vmatpush1.msra.mxu0 0.0
        %3648 = vmatprep.subr.mxu0 0.0
        %3649 = vmatpush1.msra.mxu0 0.0
        %3650 = vmatprep.subr.mxu0 0.0
        %3651 = vmatpush1.msra.mxu0 0.0
        %3652 = vmatprep.subr.mxu0 0.0
        %3653 = vmatpush1.msra.mxu0 0.0
        %3654 = vmatprep.subr.mxu0 0.0
        %3655 = vmatpush1.msra.mxu0 0.0
        %3656 = vmatprep.subr.mxu0 0.0
        %3657 = vmatpush1.msra.mxu0 0.0
        %3658 = vmatprep.subr.mxu0 0.0
        %3659 = vmatpush1.msra.mxu0 0.0
        %3660 = vmatprep.subr.mxu0 0.0
        %3661 = vmatpush1.msra.mxu0 0.0
        %3662 = vmatprep.subr.mxu0 0.0
        %3663 = vmatpush1.msra.mxu0 0.0
        %3664 = vmatprep.subr.mxu0 0.0
        %3665 = vmatpush1.msra.mxu0 0.0
        %3666 = vmatprep.subr.mxu0 0.0
        %3667 = vmatpush1.msra.mxu0 0.0
        %3668 = vmatprep.subr.mxu0 0.0
        %3669 = vmatpush1.msra.mxu0 0.0
        %3670 = vmatprep.subr.mxu0 0.0
        %3671 = vmatpush1.msra.mxu0 0.0
        %3672 = vmatprep.subr.mxu0 0.0
        %3673 = vmatpush1.msra.mxu0 %v3552
        %3674 = vmatprep.subr.mxu0 0.0
        %3675 = vmatpush1.msra.mxu0 %v3551
        %3676 = vmatprep.subr.mxu0 0.0
        %3677 = vmatpush2.msra.mxu0 0.0
        %3678 = vmatprep.subr.mxu0 0.0
        %3679 = vmatpush2.msra.mxu0 0.0
        %3680 = vmatprep.subr.mxu0 0.0
        %3681 = vmatpush2.msra.mxu0 0.0
        %3682 = vmatprep.subr.mxu0 0.0
        %3683 = vmatpush2.msra.mxu0 0.0
        %3684 = vmatprep.subr.mxu0 0.0
        %3685 = vmatpush2.msra.mxu0 0.0
        %3686 = vmatprep.subr.mxu0 0.0
        %3687 = vmatpush2.msra.mxu0 0.0
        %3688 = vmatprep.subr.mxu0 0.0
        %3689 = vmatpush2.msra.mxu0 0.0
        %3690 = vmatprep.subr.mxu0 0.0
        %3691 = vmatpush2.msra.mxu0 0.0
        %3692 = vmatprep.subr.mxu0 0.0
        %3693 = vmatpush2.msra.mxu0 0.0
        %3694 = vmatprep.subr.mxu0 0.0
        %3695 = vmatpush2.msra.mxu0 0.0
        %3696 = vmatprep.subr.mxu0 0.0
        %3697 = vmatpush2.msra.mxu0 0.0
        %3698 = vmatprep.subr.mxu0 0.0
        %3699 = vmatpush2.msra.mxu0 0.0
        %3700 = vmatprep.subr.mxu0 0.0
        %3701 = vmatpush2.msra.mxu0 0.0
        %3702 = vmatprep.subr.mxu0 0.0
        %3703 = vmatpush2.msra.mxu0 0.0
        %3704 = vmatprep.subr.mxu0 0.0
        %3705 = vmatpush2.msra.mxu0 0.0
        %3706 = vmatprep.subr.mxu0 0.0
        %3707 = vmatpush2.msra.mxu0 0.0
        %3708 = vmatprep.mubr.f32.mxu0 0.0
        %3709 = vmatmul.mubr.f32.gmra.mxu0 %v3642
        %v3710 = vpop.f32.mrf.mxu0
        %v3711 = vadd.f32 0.0, %v3710
        %v3712 = vpop.f32.mrf.mxu0
        %3713 = vdwg.mxu0
        %3714 = vst.msk [vmem:[%s792] sm:$0xff] %vm801, %v3711
        %v3715 = vld [vmem:[%s19] sm:$0xff]
        %v3716 = vld [vmem:[%s19 + $0x8] sm:$0xff]
        %v3717 = vld [vmem:[%s19 + $0x10] sm:$0xff]
        %v3718 = vld [vmem:[%s19 + $0x18] sm:$0xff]
        %v3719 = vld [vmem:[%s19 + $0x20] sm:$0xff]
        %v3720 = vld [vmem:[%s19 + $0x28] sm:$0xff]
        %v3721 = vld [vmem:[%s19 + $0x30] sm:$0xff]
        %v3722 = vld [vmem:[%s19 + $0x38] sm:$0xff]
        %v3723 = vld [vmem:[%s20] sm:$0x1]
        %v3725 = vlaneseq
        %v3726 = vshrl.u32 %v3725, 7
        %v3727 = vsub.s32 0, %v3726
        %v3728 = vrot.slane %v3723, %v3727
        %v3731 = vsel %vm801, %v3711, 0
        %3733 = vmatprep.subr.mxu0 0.0
        %3734 = vmatpush1.msra.mxu0 0.0
        %3735 = vmatprep.subr.mxu0 0.0
        %3736 = vmatpush1.msra.mxu0 0.0
        %3737 = vmatprep.subr.mxu0 0.0
        %3738 = vmatpush1.msra.mxu0 0.0
        %3739 = vmatprep.subr.mxu0 0.0
        %3740 = vmatpush1.msra.mxu0 0.0
        %3741 = vmatprep.subr.mxu0 0.0
        %3742 = vmatpush1.msra.mxu0 0.0
        %3743 = vmatprep.subr.mxu0 0.0
        %3744 = vmatpush1.msra.mxu0 0.0
        %3745 = vmatprep.subr.mxu0 0.0
        %3746 = vmatpush1.msra.mxu0 0.0
        %3747 = vmatprep.subr.mxu0 0.0
        %3748 = vmatpush1.msra.mxu0 0.0
        %3749 = vmatprep.subr.mxu0 0.0
        %3750 = vmatpush1.msra.mxu0 %v3722
        %3751 = vmatprep.subr.mxu0 0.0
        %3752 = vmatpush1.msra.mxu0 %v3721
        %3753 = vmatprep.subr.mxu0 0.0
        %3754 = vmatpush1.msra.mxu0 %v3720
        %3755 = vmatprep.subr.mxu0 0.0
        %3756 = vmatpush1.msra.mxu0 %v3719
        %3757 = vmatprep.subr.mxu0 0.0
        %3758 = vmatpush1.msra.mxu0 %v3718
        %3759 = vmatprep.subr.mxu0 0.0
        %3760 = vmatpush1.msra.mxu0 %v3717
        %3761 = vmatprep.subr.mxu0 0.0
        %3762 = vmatpush1.msra.mxu0 %v3716
        %3763 = vmatprep.subr.mxu0 0.0
        %3764 = vmatpush1.msra.mxu0 %v3715
        %3765 = vmatprep.subr.mxu0 0.0
        %3766 = vmatpush2.msra.mxu0 0.0
        %3767 = vmatprep.subr.mxu0 0.0
        %3768 = vmatpush2.msra.mxu0 0.0
        %3769 = vmatprep.subr.mxu0 0.0
        %3770 = vmatpush2.msra.mxu0 0.0
        %3771 = vmatprep.subr.mxu0 0.0
        %3772 = vmatpush2.msra.mxu0 0.0
        %3773 = vmatprep.subr.mxu0 0.0
        %3774 = vmatpush2.msra.mxu0 0.0
        %3775 = vmatprep.subr.mxu0 0.0
        %3776 = vmatpush2.msra.mxu0 0.0
        %3777 = vmatprep.subr.mxu0 0.0
        %3778 = vmatpush2.msra.mxu0 0.0
        %3779 = vmatprep.subr.mxu0 0.0
        %3780 = vmatpush2.msra.mxu0 0.0
        %3781 = vmatprep.subr.mxu0 0.0
        %3782 = vmatpush2.msra.mxu0 0.0
        %3783 = vmatprep.subr.mxu0 0.0
        %3784 = vmatpush2.msra.mxu0 0.0
        %3785 = vmatprep.subr.mxu0 0.0
        %3786 = vmatpush2.msra.mxu0 0.0
        %3787 = vmatprep.subr.mxu0 0.0
        %3788 = vmatpush2.msra.mxu0 0.0
        %3789 = vmatprep.subr.mxu0 0.0
        %3790 = vmatpush2.msra.mxu0 0.0
        %3791 = vmatprep.subr.mxu0 0.0
        %3792 = vmatpush2.msra.mxu0 0.0
        %3793 = vmatprep.subr.mxu0 0.0
        %3794 = vmatpush2.msra.mxu0 0.0
        %3795 = vmatprep.subr.mxu0 0.0
        %3796 = vmatpush2.msra.mxu0 0.0
        %3797 = vmatprep.mubr.f32.mxu0 0.0
        %3798 = vmatmul.mubr.f32.gmra.mxu0 %v3731
        %v3799 = vpop.f32.mrf.mxu0
        %v3800 = vadd.f32 %v3728, %v3799
        %v3801 = vpop.f32.mrf.mxu0
        %3802 = vdwg.mxu0
        %3803 = vst [vmem:[%s796] sm:$0xff] %v3800
        %s3804 = sand.u32 %s506, 1
        %s3805 = scalar_lea.sflag [#allocation3], %s3804
        %s3806 = sand.u32 %s506, 1
        %s3807 = smul.addr %s3806, 16
        %s3808 = scalar_lea.vmem [#allocation2], %s3807
        %s3809 = sand.u32 %s532, 1
        %s3810 = scalar_lea.sflag [#allocation5], %s3809
        %s3811 = sand.u32 %s532, 1
        %s3812 = scalar_lea.vmem [#allocation4], %s3811
        %p3813 = scmp.lt.s32.totalorder %s42, 1
        %s3814 = scalar_select %p3813, %s42, 1
        %s3815 = smul.addr %s3814, 8
        %s3816 = scalar_lea.vmem %s23, %s3815
        %p3817 = scmp.lt.s32.totalorder %s42, 1
        %s3818 = scalar_select %p3817, %s42, 1
        %s3819 = smul.addr %s3818, 8
        %s3820 = scalar_lea.vmem %s24, %s3819
        // Predicated region
        $region105: #{_device_forward.1} parent=103 // pred_check
          %p3821 = pneg %p516
        $region106: #{_device_forward.1} parent=103 // pred_check_branch
          %3823 = sbr.rel (%p3821) target = $region108
        $region107: #{_device_forward.1} parent=103 // pred_region
          %s3825 = ssub.s32 256, 256
          %3826 = vsyncadd %s3805, %s3825
          %s3827 = smul.addr %s42, 2
          %s3828 = smul.addr %s3827, 128
          %s3829 = scalar_lea.hbm %s21, %s3828
          %s3830 = sshll.u32 %s3808, 4
          %s3831 = int_to_ptr.vmem [resolvable:$true] %s3830
          %3836 = dma.vmem_to_hbm [thread:$0]  %s3831, 256, %s3829, %s3805, 128, 128, 8
        $region108: #{_device_forward.1} parent=103 // pred_fallthru
          _
        // Predicated region
        $region109: #{_device_forward.1} parent=103 // pred_check
          %p3837 = pneg %p542
        $region110: #{_device_forward.1} parent=103 // pred_check_branch
          %3839 = sbr.rel (%p3837) target = $region112
        $region111: #{_device_forward.1} parent=103 // pred_region
          %s3841 = ssub.s32 16, 16
          %3842 = vsyncadd %s3810, %s3841
          %s3843 = smul.addr %s42, 16
          %s3844 = scalar_lea.hbm %s22, %s3843
          %s3846 = sshll.u32 %s3812, 4
          %s3847 = int_to_ptr.vmem [resolvable:$true] %s3846
          %3849 = dma.vmem_to_hbm [thread:$0]  %s3847, 16, %s3844, %s3810
        $region112: #{_device_forward.1} parent=103 // pred_fallthru
          _
        // Predicated region
        $region113: #{_device_forward.1} parent=103 // pred_check
          %p3850 = pneg %p568
        $region114: #{_device_forward.1} parent=103 // pred_check_branch
          %3852 = sbr.rel (%p3850) target = $region116
        $region115: #{_device_forward.1} parent=103 // pred_region
          _
        $region116: #{_device_forward.1} parent=103 // pred_fallthru
          _
        // Predicated region
        $region117: #{_device_forward.1} parent=103 // pred_check
          %p3853 = pneg %p594
        $region118: #{_device_forward.1} parent=103 // pred_check_branch
          %3855 = sbr.rel (%p3853) target = $region120
        $region119: #{_device_forward.1} parent=103 // pred_region
          _
        $region120: #{_device_forward.1} parent=103 // pred_fallthru
          _
      $region104: #{_device_forward.1} parent=5 // pred_fallthru
        _
      %p3856 = scmp.le.s32.totalorder 2, %s37
      // Predicated region
      $region121: #{_device_forward.1} parent=5 // pred_check
        %p3857 = pneg %p3856
      $region122: #{_device_forward.1} parent=5 // pred_check_branch
        %3859 = sbr.rel (%p3857) target = $region124
      $region123: #{_device_forward.1} parent=5 // pred_region
        %s3860 = ssub.s32 %s37, 2
        // Predicated region
        $region125: #{_device_forward.1} parent=123 // pred_check
          %p3861 = pneg %p522
        $region126: #{_device_forward.1} parent=123 // pred_check_branch
          %3863 = sbr.rel (%p3861) target = $region128
        $region127: #{_device_forward.1} parent=123 // pred_region
          %s3864 = sand.u32 %s507, 1
          %s3865 = scalar_lea.sflag [#allocation3], %s3864
          %s3866 = sand.u32 %s507, 1
          %s3867 = smul.addr %s3866, 16
          %s3868 = scalar_lea.vmem [#allocation2], %s3867
          %3869 = dma.done %s3865, 256
        $region128: #{_device_forward.1} parent=123 // pred_fallthru
          _
        // Predicated region
        $region129: #{_device_forward.1} parent=123 // pred_check
          %p3870 = pneg %p548
        $region130: #{_device_forward.1} parent=123 // pred_check_branch
          %3872 = sbr.rel (%p3870) target = $region132
        $region131: #{_device_forward.1} parent=123 // pred_region
          %s3873 = sand.u32 %s533, 1
          %s3874 = scalar_lea.sflag [#allocation5], %s3873
          %s3875 = sand.u32 %s533, 1
          %s3876 = scalar_lea.vmem [#allocation4], %s3875
          %3877 = dma.done %s3874, 16
        $region132: #{_device_forward.1} parent=123 // pred_fallthru
          _
        // Predicated region
        $region133: #{_device_forward.1} parent=123 // pred_check
          %p3878 = pneg %p574
        $region134: #{_device_forward.1} parent=123 // pred_check_branch
          %3880 = sbr.rel (%p3878) target = $region136
        $region135: #{_device_forward.1} parent=123 // pred_region
          %p3881 = scmp.lt.s32.totalorder %s43, 1
          %s3882 = scalar_select %p3881, %s43, 1
          %s3883 = smul.addr %s3882, 8
          %s3884 = scalar_lea.vmem %s23, %s3883
        $region136: #{_device_forward.1} parent=123 // pred_fallthru
          _
        // Predicated region
        $region137: #{_device_forward.1} parent=123 // pred_check
          %p3885 = pneg %p600
        $region138: #{_device_forward.1} parent=123 // pred_check_branch
          %3887 = sbr.rel (%p3885) target = $region140
        $region139: #{_device_forward.1} parent=123 // pred_region
          %p3888 = scmp.lt.s32.totalorder %s43, 1
          %s3889 = scalar_select %p3888, %s43, 1
          %s3890 = smul.addr %s3889, 8
          %s3891 = scalar_lea.vmem %s24, %s3890
        $region140: #{_device_forward.1} parent=123 // pred_fallthru
          _
      $region124: #{_device_forward.1} parent=5 // pred_fallthru
        _
    $region6: #{_device_forward.1} parent=1 // loop_footer
      %s41 = sadd.s32 1, %s37
    $region7: #{_device_forward.1} parent=1 // loop_footer_branch
      %36 = sbr.rel target = $region3
    $region8: #{_device_forward.1} parent=1 // loop_exit
      _
    %3892 = vsyncpa [#allocation3], 1
    %s3893 = scalar_lea.sflag [#allocation3], 1
    %3894 = vsyncpa %s3893, 1
    %3895 = vsyncpa [#allocation5], 1
    %s3896 = scalar_lea.sflag [#allocation5], 1
    %3897 = vsyncpa %s3896, 1

</llo_original>
